<compile_context>
chip_gen: v7x
topology: tpu7x:2x2x1
jax: 0.10.0
libtpu: 0.0.40
codegen_flags: <defaults>
</compile_context>

<pallas_src>
import functools

import jax
import jax.numpy as jnp
from jax.experimental import pallas as pl
from jax.experimental.pallas import tpu as pltpu

LATENT_DIM = 128
_LANE = 128       # TPU lane width
_C1 = 64          # true conv1 output channels (lane-padded to 128 in-kernel)
_C1_CIN_PAD = 32  # conv1 post-space-to-depth channels, padded 12 -> 32


# --------------------------------------------------------------------------- #
# Pallas kernel: in-VMEM im2col (k*k whole-plane copies) + MXU matmul + bias
# (+ ReLU).  One batch block per grid step.
# --------------------------------------------------------------------------- #
def _conv_im2col_matmul_kernel(x_ref, w_ref, b_ref, o_ref, p_ref, *,
                               k, hout, wout, cin, apply_relu):
    """x_ref: (nb, hout+k-1, wout+k-1, cin)  pre-padded activations (bf16)
       w_ref: (k*k*cin, cout)                flattened weight (bf16), resident
       b_ref: (1, cout)                      bias (f32), resident
       o_ref: (nb, hout*wout, cout)          output, lane-dense cout
       p_ref: (nb, hout, wout, k*k*cin)      bf16 patch scratch in VMEM
    """
    nb = p_ref.shape[0]
    kdim = k * k * cin

    # im2col via k*k whole-plane copies per image (not hout*k*k row copies).
    # Every source slice is unit-stride (stride-2 layers were converted to
    # stride-1 via space-to-depth in the wrapper); every destination slice is
    # a contiguous cin-wide lane band at offset tap*cin.
    for b in range(nb):
        for di in range(k):
            for dj in range(k):
                tap = di * k + dj
                p_ref[b, :, :, tap * cin:(tap + 1) * cin] = (
                    x_ref[b, di:di + hout, dj:dj + wout, :])

    # Collapse (nb, hout, wout) -> M: leading-dim-only reshape, lane layout
    # unchanged.  One big MXU matmul: bf16 x bf16 -> f32 accumulate.
    patches = p_ref[...].reshape(nb * hout * wout, kdim)
    acc = jnp.dot(patches, w_ref[...], preferred_element_type=jnp.float32)
    acc = acc + b_ref[...]
    if apply_relu:
        acc = jnp.maximum(acc, 0.0)
    o_ref[...] = acc.reshape(nb, hout * wout, -1).astype(o_ref.dtype)


@functools.lru_cache(maxsize=1)
def _vmem_limit_bytes():
    """Generation-aware scoped-VMEM budget: ~half physical, capped at 64 MiB
    (v5e/v6e: 128 MiB physical -> 64 MiB; v7x: 64 MiB physical -> 32 MiB)."""
    try:
        cap = pltpu.get_tpu_info().vmem_capacity_bytes
        return int(min(cap // 2, 64 << 20))
    except Exception:
        return None  # fall back to the compiler default


def _pick_batch_block(n, m):
    """Batch images per grid step so the MXU matmul has a useful M (>=128
    rows) while keeping >= 2 grid steps (megacore / pipeline warm-up)."""
    nb = 1
    for cand in range(2, n + 1):
        if n % cand:
            continue
        if cand * m > 512 or n // cand < 2:
            break
        nb = cand
        if cand * m >= 128:
            break
    return nb


def _conv_pallas(x_prep, w_flat, bias, *, k, hout, wout, apply_relu,
                 out_dtype):
    """Stride-1 kxk conv over a pre-padded NHWC bf16 input, grid over batch."""
    n, hp, wp, cin = x_prep.shape
    kdim, cout = w_flat.shape
    assert kdim == k * k * cin
    assert hp == hout + k - 1 and wp == wout + k - 1
    assert cout % _LANE == 0
    m = hout * wout
    nb = _pick_batch_block(n, m)

    kernel = functools.partial(
        _conv_im2col_matmul_kernel,
        k=k, hout=hout, wout=wout, cin=cin, apply_relu=apply_relu)

    return pl.pallas_call(
        kernel,
        out_shape=jax.ShapeDtypeStruct((n, m, cout), out_dtype),
        grid=(n // nb,),
        in_specs=[
            # one batch block of padded images per step
            pl.BlockSpec((nb, hp, wp, cin), lambda i: (i, 0, 0, 0)),
            # weight + bias: same block every step -> stay resident in VMEM
            pl.BlockSpec((kdim, cout), lambda i: (0, 0)),
            pl.BlockSpec((1, cout), lambda i: (0, 0)),
        ],
        out_specs=pl.BlockSpec((nb, m, cout), lambda i: (i, 0, 0)),
        scratch_shapes=[pltpu.VMEM((nb, hout, wout, kdim), jnp.bfloat16)],
        compiler_params=pltpu.CompilerParams(
            dimension_semantics=("parallel",),
            vmem_limit_bytes=_vmem_limit_bytes()),
    )(x_prep, w_flat, bias)


# --------------------------------------------------------------------------- #
# Wrapper-side layout transforms (cheap, same-size, XLA).
# --------------------------------------------------------------------------- #
def _space_to_depth(x):
    """(N, H, W, C) -> (N, H//2, W//2, 4*C); channel order (pi*2+pj)*C + c."""
    n, h, w, c = x.shape
    x = x.reshape(n, h // 2, 2, w // 2, 2, c)
    x = jnp.transpose(x, (0, 1, 3, 2, 4, 5))
    return x.reshape(n, h // 2, w // 2, 4 * c)


def _s2d_weight(w):
    """(Cout, Cin, 4, 4) stride-2 weight -> equivalent (Cout, 4*Cin, 2, 2)
    stride-1 weight acting on the space-to-depth'd input."""
    cout, cin, _, _ = w.shape
    w = w.reshape(cout, cin, 2, 2, 2, 2)        # (co, c, ai, pi, aj, pj)
    w = jnp.transpose(w, (0, 3, 5, 1, 2, 4))    # (co, pi, pj, c, ai, aj)
    return w.reshape(cout, 4 * cin, 2, 2)


def _flatten_weight(w):
    """(Cout, Cin, KH, KW) -> (KH*KW*Cin, Cout), K index = (di*KW+dj)*Cin+c."""
    cout, cin, kh, kw = w.shape
    return jnp.transpose(w, (2, 3, 1, 0)).reshape(kh * kw * cin, cout)


def _pad_axis(a, axis, size):
    """Zero-pad `axis` of `a` up to `size` (no-op if already >= size)."""
    pad = size - a.shape[axis]
    if pad <= 0:
        return a
    widths = [(0, 0)] * a.ndim
    widths[axis] = (0, pad)
    return jnp.pad(a, widths)


def prepare_encoder_params(raw_params):
    """One-time weight preparation (hoisted out of the per-call forward)."""
    (w1, b1), (w2, b2), (w3, b3) = raw_params
    # conv1: k4 s2 p1 -> k2 s1 over s2d input; pad cin 12->32 (zero rows) so
    # kdim = 128, and pad cout 64->128 (zero lanes) for a lane-dense store.
    w1s = _pad_axis(_s2d_weight(w1), 1, _C1_CIN_PAD)          # (64, 32, 2, 2)
    w1f = _pad_axis(_flatten_weight(w1s), 1, _LANE)           # (128, 128)
    b1f = _pad_axis(b1, 0, _LANE)                             # (128,)
    # conv2: k4 s2 p1 -> k2 s1 over s2d input.                # (1024, 128)
    w2f = _flatten_weight(_s2d_weight(w2))
    # conv3: k3 s1 p1 stays as-is.                            # (1152, 128)
    w3f = _flatten_weight(w3)
    return (
        (w1f.astype(jnp.bfloat16), b1f.reshape(1, -1).astype(jnp.float32)),
        (w2f.astype(jnp.bfloat16), b2.reshape(1, -1).astype(jnp.float32)),
        (w3f.astype(jnp.bfloat16), b3.reshape(1, -1).astype(jnp.float32)),
    )


# --------------------------------------------------------------------------- #
# Encoder forward (NCHW in / NCHW out, like the PyTorch module).
# --------------------------------------------------------------------------- #
def encoder_forward(prepared, x_nchw):
    (w1f, b1f), (w2f, b2f), (w3f, b3f) = prepared
    n, _, h, w = x_nchw.shape
    assert h % 4 == 0 and w % 4 == 0, "spatial dims must be divisible by 4"
    # bf16 activations everywhere between kernels (matmul operands are bf16
    # anyway); accumulation / bias / ReLU stay f32 inside the kernels.
    x = jnp.transpose(x_nchw, (0, 2, 3, 1)).astype(jnp.bfloat16)   # NHWC

    # conv1: 3 -> 64, k4 s2 p1  (as k2 s1 over space-to-depth'd padded input)
    h1, w1o = h // 2, w // 2
    xs = _space_to_depth(jnp.pad(x, ((0, 0), (1, 1), (1, 1), (0, 0))))
    xs = _pad_axis(xs, 3, _C1_CIN_PAD)                    # cin 12 -> 32
    y1 = _conv_pallas(xs, w1f, b1f, k=2, hout=h1, wout=w1o,
                      apply_relu=True, out_dtype=jnp.bfloat16)
    y1 = y1.reshape(n, h1, w1o, -1)[..., :_C1]            # drop 128->64 pad

    # conv2: 64 -> 128, k4 s2 p1
    h2, w2o = h1 // 2, w1o // 2
    y1s = _space_to_depth(jnp.pad(y1, ((0, 0), (1, 1), (1, 1), (0, 0))))
    y2 = _conv_pallas(y1s, w2f, b2f, k=2, hout=h2, wout=w2o,
                      apply_relu=True, out_dtype=jnp.bfloat16)
    y2 = y2.reshape(n, h2, w2o, 128)

    # conv3: 128 -> LATENT_DIM, k3 s1 p1 (no ReLU), f32 out
    y2p = jnp.pad(y2, ((0, 0), (1, 1), (1, 1), (0, 0)))
    y3 = _conv_pallas(y2p, w3f, b3f, k=3, hout=h2, wout=w2o,
                      apply_relu=False, out_dtype=jnp.float32)
    y3 = y3.reshape(n, h2, w2o, LATENT_DIM)
    return jnp.transpose(y3, (0, 3, 1, 2))                # NHWC -> NCHW


# --------------------------------------------------------------------------- #
# Pure-JAX reference with identical numerics (bf16 operands, f32 accumulate).
# --------------------------------------------------------------------------- #
def _conv2d_ref(x_nhwc, w_oihw, bias, stride, pad, apply_relu):
    cout, cin, kh, kw = w_oihw.shape
    xp = jnp.pad(x_nhwc, ((0, 0), (pad, pad), (pad, pad), (0, 0)))
    n, hp, wp, _ = xp.shape
    hout = (hp - kh) // stride + 1
    wout = (wp - kw) // stride + 1
    cols = []
    for i in range(kh):
        for j in range(kw):
            cols.append(xp[:, i:i + stride * hout:stride,
                           j:j + stride * wout:stride, :])
    patches = jnp.concatenate(cols, axis=-1).reshape(n * hout * wout,
                                                     kh * kw * cin)
    wf = jnp.transpose(w_oihw, (2, 3, 1, 0)).reshape(kh * kw * cin, cout)
    out = jnp.dot(patches.astype(jnp.bfloat16), wf.astype(jnp.bfloat16),
                  preferred_element_type=jnp.float32) + bias
    if apply_relu:
        out = jnp.maximum(out, 0.0)
    return out.reshape(n, hout, wout, cout)


def encoder_ref(raw_params, x_nchw):
    (w1, b1), (w2, b2), (w3, b3) = raw_params
    x = jnp.transpose(x_nchw, (0, 2, 3, 1))
    y = _conv2d_ref(x, w1, b1, 2, 1, True)
    y = _conv2d_ref(y, w2, b2, 2, 1, True)
    y = _conv2d_ref(y, w3, b3, 1, 1, False)
    return jnp.transpose(y, (0, 3, 1, 2))


# --------------------------------------------------------------------------- #
# Params
# --------------------------------------------------------------------------- #
_CONV_SHAPES = [
    (64, 3, 4, 4),            # Conv2d(3, 64, 4, 2, 1)
    (128, 64, 4, 4),          # Conv2d(64, 128, 4, 2, 1)
    (LATENT_DIM, 128, 3, 3),  # Conv2d(128, LATENT_DIM, 3, 1, 1)
]


def init_encoder_params(key):
    """Deterministic synthetic init (He-normal weights, small-normal biases)."""
    params = []
    for i, (cout, cin, kh, kw) in enumerate(_CONV_SHAPES):
        kw_key, kb_key = jax.random.split(jax.random.fold_in(key, i))
        fan_in = cin * kh * kw
        w = jax.random.normal(kw_key, (cout, cin, kh, kw), jnp.float32)
        w = w * (2.0 / fan_in) ** 0.5
        b = jax.random.normal(kb_key, (cout,), jnp.float32) * 0.01
        params.append((w, b))
    return params


# --------------------------------------------------------------------------- #
# Main
# --------------------------------------------------------------------------- #
if __name__ == "__main__":
    key = jax.random.PRNGKey(0)
    key_x, key_p = jax.random.split(key)

    x = jax.random.normal(key_x, (2, 3, 16, 16), jnp.float32)   # NCHW
    raw_params = init_encoder_params(key_p)
    prepared = prepare_encoder_params(raw_params)               # one-time prep

    fwd = jax.jit(encoder_forward)
    out = jax.block_until_ready(fwd(prepared, x))

    assert out.shape == (2, LATENT_DIM, 4, 4), out.shape
    assert out.dtype == jnp.float32
    assert bool(jnp.all(jnp.isfinite(out)))

    ref = jax.block_until_ready(jax.jit(encoder_ref)(raw_params, x))
    max_err = float(jnp.max(jnp.abs(out - ref)))
    assert jnp.allclose(out, ref, rtol=2e-2, atol=2e-2), max_err

    print("KERNEL_OK")
</pallas_src>

<mosaic_0001>
module attributes {stable_mosaic.version = 11 : i64} {
  func.func @_conv_im2col_matmul_kernel(%arg0: i32, %arg1: memref<1x9x9x32xbf16, #tpu.memory_space<vmem>>, %arg2: memref<128x128xbf16, #tpu.memory_space<vmem>>, %arg3: memref<1x128xf32, #tpu.memory_space<vmem>>, %arg4: memref<1x64x128xbf16, #tpu.memory_space<vmem>>, %arg5: memref<1x8x8x128xbf16, #tpu.memory_space<vmem>>) attributes {dimension_semantics = [#tpu.dimension_semantics<parallel>], iteration_bounds = array<i64: 2>, scalar_prefetch = 0 : i64, scratch_operands = 1 : i64, tpu.core_type = #tpu.core_type<tc>, window_params = [{transform_indices = @transform_0, window_bounds = array<i64: 1, 9, 9, 32>}, {pipeline_mode = #tpu.pipeline_mode<synchronous>, transform_indices = @transform_1, window_bounds = array<i64: 128, 128>}, {pipeline_mode = #tpu.pipeline_mode<synchronous>, transform_indices = @transform_2, window_bounds = array<i64: 1, 128>}, {transform_indices = @transform_3, window_bounds = array<i64: 1, 64, 128>}]} {
    %c0 = arith.constant 0 : index
    %c0_0 = arith.constant 0 : index
    %c0_1 = arith.constant 0 : index
    %c0_2 = arith.constant 0 : index
    %0 = vector.load %arg1[%c0, %c0_0, %c0_1, %c0_2] : memref<1x9x9x32xbf16, #tpu.memory_space<vmem>>, vector<1x8x8x32xbf16>
    %1 = vector.shape_cast %0 : vector<1x8x8x32xbf16> to vector<8x8x32xbf16>
    %c0_3 = arith.constant 0 : index
    %c0_4 = arith.constant 0 : index
    %c0_5 = arith.constant 0 : index
    %c0_6 = arith.constant 0 : index
    %2 = vector.load %arg5[%c0_3, %c0_4, %c0_5, %c0_6] : memref<1x8x8x128xbf16, #tpu.memory_space<vmem>>, vector<1x8x8x32xbf16>
    %3 = vector.shape_cast %2 : vector<1x8x8x32xbf16> to vector<8x8x32xbf16>
    %4 = vector.shape_cast %1 : vector<8x8x32xbf16> to vector<1x8x8x32xbf16>
    tpu.vector_store %arg5[%c0_3, %c0_4, %c0_5, %c0_6], %4 {strides = array<i32>} : memref<1x8x8x128xbf16, #tpu.memory_space<vmem>>, vector<1x8x8x32xbf16>,
    %c0_7 = arith.constant 0 : index
    %c0_8 = arith.constant 0 : index
    %c1 = arith.constant 1 : index
    %c0_9 = arith.constant 0 : index
    %5 = vector.load %arg1[%c0_7, %c0_8, %c1, %c0_9] : memref<1x9x9x32xbf16, #tpu.memory_space<vmem>>, vector<1x8x8x32xbf16>
    %6 = vector.shape_cast %5 : vector<1x8x8x32xbf16> to vector<8x8x32xbf16>
    %c0_10 = arith.constant 0 : index
    %c0_11 = arith.constant 0 : index
    %c0_12 = arith.constant 0 : index
    %c32 = arith.constant 32 : index
    %7 = vector.load %arg5[%c0_10, %c0_11, %c0_12, %c32] : memref<1x8x8x128xbf16, #tpu.memory_space<vmem>>, vector<1x8x8x32xbf16>
    %8 = vector.shape_cast %7 : vector<1x8x8x32xbf16> to vector<8x8x32xbf16>
    %9 = vector.shape_cast %6 : vector<8x8x32xbf16> to vector<1x8x8x32xbf16>
    tpu.vector_store %arg5[%c0_10, %c0_11, %c0_12, %c32], %9 {strides = array<i32>} : memref<1x8x8x128xbf16, #tpu.memory_space<vmem>>, vector<1x8x8x32xbf16>,
    %c0_13 = arith.constant 0 : index
    %c1_14 = arith.constant 1 : index
    %c0_15 = arith.constant 0 : index
    %c0_16 = arith.constant 0 : index
    %10 = vector.load %arg1[%c0_13, %c1_14, %c0_15, %c0_16] : memref<1x9x9x32xbf16, #tpu.memory_space<vmem>>, vector<1x8x8x32xbf16>
    %11 = vector.shape_cast %10 : vector<1x8x8x32xbf16> to vector<8x8x32xbf16>
    %c0_17 = arith.constant 0 : index
    %c0_18 = arith.constant 0 : index
    %c0_19 = arith.constant 0 : index
    %c64 = arith.constant 64 : index
    %12 = vector.load %arg5[%c0_17, %c0_18, %c0_19, %c64] : memref<1x8x8x128xbf16, #tpu.memory_space<vmem>>, vector<1x8x8x32xbf16>
    %13 = vector.shape_cast %12 : vector<1x8x8x32xbf16> to vector<8x8x32xbf16>
    %14 = vector.shape_cast %11 : vector<8x8x32xbf16> to vector<1x8x8x32xbf16>
    tpu.vector_store %arg5[%c0_17, %c0_18, %c0_19, %c64], %14 {strides = array<i32>} : memref<1x8x8x128xbf16, #tpu.memory_space<vmem>>, vector<1x8x8x32xbf16>,
    %c0_20 = arith.constant 0 : index
    %c1_21 = arith.constant 1 : index
    %c1_22 = arith.constant 1 : index
    %c0_23 = arith.constant 0 : index
    %15 = vector.load %arg1[%c0_20, %c1_21, %c1_22, %c0_23] : memref<1x9x9x32xbf16, #tpu.memory_space<vmem>>, vector<1x8x8x32xbf16>
    %16 = vector.shape_cast %15 : vector<1x8x8x32xbf16> to vector<8x8x32xbf16>
    %c0_24 = arith.constant 0 : index
    %c0_25 = arith.constant 0 : index
    %c0_26 = arith.constant 0 : index
    %c96 = arith.constant 96 : index
    %17 = vector.load %arg5[%c0_24, %c0_25, %c0_26, %c96] : memref<1x8x8x128xbf16, #tpu.memory_space<vmem>>, vector<1x8x8x32xbf16>
    %18 = vector.shape_cast %17 : vector<1x8x8x32xbf16> to vector<8x8x32xbf16>
    %19 = vector.shape_cast %16 : vector<8x8x32xbf16> to vector<1x8x8x32xbf16>
    tpu.vector_store %arg5[%c0_24, %c0_25, %c0_26, %c96], %19 {strides = array<i32>} : memref<1x8x8x128xbf16, #tpu.memory_space<vmem>>, vector<1x8x8x32xbf16>,
    %c0_27 = arith.constant 0 : index
    %c0_28 = arith.constant 0 : index
    %c0_29 = arith.constant 0 : index
    %c0_30 = arith.constant 0 : index
    %20 = vector.load %arg5[%c0_27, %c0_28, %c0_29, %c0_30] : memref<1x8x8x128xbf16, #tpu.memory_space<vmem>>, vector<1x8x8x128xbf16>
    %21 = vector.shape_cast %20 : vector<1x8x8x128xbf16> to vector<64x128xbf16>
    %c0_31 = arith.constant 0 : index
    %c0_32 = arith.constant 0 : index
    %22 = vector.load %arg2[%c0_31, %c0_32] : memref<128x128xbf16, #tpu.memory_space<vmem>>, vector<128x128xbf16>
    %cst = arith.constant dense<0.000000e+00> : vector<64x128xf32>
    %23 = tpu.matmul %21, %22, %cst {dimension_numbers = #tpu.dot_dimension_numbers<[1], [0], [0], [1], [0, 0, 1, 1], [], []>} : vector<64x128xbf16>, vector<128x128xbf16>, vector<64x128xf32> -> vector<64x128xf32>
    %c0_33 = arith.constant 0 : index
    %c0_34 = arith.constant 0 : index
    %24 = vector.load %arg3[%c0_33, %c0_34] : memref<1x128xf32, #tpu.memory_space<vmem>>, vector<1x128xf32>
    %25 = vector.broadcast %24 : vector<1x128xf32> to vector<64x128xf32>
    %26 = arith.addf %23, %25 : vector<64x128xf32>
    %cst_35 = arith.constant 0.000000e+00 : f32
    %27 = vector.broadcast %cst_35 : f32 to vector<64x128xf32>
    %28 = arith.maximumf %26, %27 : vector<64x128xf32>
    %29 = vector.shape_cast %28 : vector<64x128xf32> to vector<1x64x128xf32>
    %30 = arith.truncf %29 : vector<1x64x128xf32> to vector<1x64x128xbf16>
    %c0_36 = arith.constant 0 : index
    %c0_37 = arith.constant 0 : index
    %c0_38 = arith.constant 0 : index
    %31 = vector.load %arg4[%c0_36, %c0_37, %c0_38] : memref<1x64x128xbf16, #tpu.memory_space<vmem>>, vector<1x64x128xbf16>
    tpu.vector_store %arg4[%c0_36, %c0_37, %c0_38], %30 {strides = array<i32>} : memref<1x64x128xbf16, #tpu.memory_space<vmem>>, vector<1x64x128xbf16>,
    return
  }
  func.func @transform_0(%arg0: i32) -> (i32, i32, i32, i32) {
    %c0_i32 = arith.constant 0 : i32
    %c0_i32_0 = arith.constant 0 : i32
    %c0_i32_1 = arith.constant 0 : i32
    %c0_i32_2 = arith.constant 0 : i32
    return %arg0, %c0_i32, %c0_i32_0, %c0_i32_1 : i32, i32, i32, i32
  }
  func.func @transform_1(%arg0: i32) -> (i32, i32) {
    %c0_i32 = arith.constant 0 : i32
    %c0_i32_0 = arith.constant 0 : i32
    %c0_i32_1 = arith.constant 0 : i32
    return %c0_i32, %c0_i32_0 : i32, i32
  }
  func.func @transform_2(%arg0: i32) -> (i32, i32) {
    %c0_i32 = arith.constant 0 : i32
    %c0_i32_0 = arith.constant 0 : i32
    %c0_i32_1 = arith.constant 0 : i32
    return %c0_i32, %c0_i32_0 : i32, i32
  }
  func.func @transform_3(%arg0: i32) -> (i32, i32, i32) {
    %c0_i32 = arith.constant 0 : i32
    %c0_i32_0 = arith.constant 0 : i32
    %c0_i32_1 = arith.constant 0 : i32
    return %arg0, %c0_i32, %c0_i32_0 : i32, i32, i32
  }
}

module attributes {stable_mosaic.version = 11 : i64} {
  func.func @_conv_im2col_matmul_kernel(%arg0: i32, %arg1: memref<1x6x6x128xbf16, #tpu.memory_space<vmem>>, %arg2: memref<1152x128xbf16, #tpu.memory_space<vmem>>, %arg3: memref<1x128xf32, #tpu.memory_space<vmem>>, %arg4: memref<1x16x128xf32, #tpu.memory_space<vmem>>, %arg5: memref<1x4x4x1152xbf16, #tpu.memory_space<vmem>>) attributes {dimension_semantics = [#tpu.dimension_semantics<parallel>], iteration_bounds = array<i64: 2>, scalar_prefetch = 0 : i64, scratch_operands = 1 : i64, tpu.core_type = #tpu.core_type<tc>, window_params = [{transform_indices = @transform_0, window_bounds = array<i64: 1, 6, 6, 128>}, {pipeline_mode = #tpu.pipeline_mode<synchronous>, transform_indices = @transform_1, window_bounds = array<i64: 1152, 128>}, {pipeline_mode = #tpu.pipeline_mode<synchronous>, transform_indices = @transform_2, window_bounds = array<i64: 1, 128>}, {transform_indices = @transform_3, window_bounds = array<i64: 1, 16, 128>}]} {
    %c0 = arith.constant 0 : index
    %c0_0 = arith.constant 0 : index
    %c0_1 = arith.constant 0 : index
    %c0_2 = arith.constant 0 : index
    %0 = vector.load %arg1[%c0, %c0_0, %c0_1, %c0_2] : memref<1x6x6x128xbf16, #tpu.memory_space<vmem>>, vector<1x4x4x128xbf16>
    %1 = vector.shape_cast %0 : vector<1x4x4x128xbf16> to vector<4x4x128xbf16>
    %c0_3 = arith.constant 0 : index
    %c0_4 = arith.constant 0 : index
    %c0_5 = arith.constant 0 : index
    %c0_6 = arith.constant 0 : index
    %2 = vector.load %arg5[%c0_3, %c0_4, %c0_5, %c0_6] : memref<1x4x4x1152xbf16, #tpu.memory_space<vmem>>, vector<1x4x4x128xbf16>
    %3 = vector.shape_cast %2 : vector<1x4x4x128xbf16> to vector<4x4x128xbf16>
    %4 = vector.shape_cast %1 : vector<4x4x128xbf16> to vector<1x4x4x128xbf16>
    tpu.vector_store %arg5[%c0_3, %c0_4, %c0_5, %c0_6], %4 {strides = array<i32>} : memref<1x4x4x1152xbf16, #tpu.memory_space<vmem>>, vector<1x4x4x128xbf16>,
    %c0_7 = arith.constant 0 : index
    %c0_8 = arith.constant 0 : index
    %c1 = arith.constant 1 : index
    %c0_9 = arith.constant 0 : index
    %5 = vector.load %arg1[%c0_7, %c0_8, %c1, %c0_9] : memref<1x6x6x128xbf16, #tpu.memory_space<vmem>>, vector<1x4x4x128xbf16>
    %6 = vector.shape_cast %5 : vector<1x4x4x128xbf16> to vector<4x4x128xbf16>
    %c0_10 = arith.constant 0 : index
    %c0_11 = arith.constant 0 : index
    %c0_12 = arith.constant 0 : index
    %c128 = arith.constant 128 : index
    %7 = vector.load %arg5[%c0_10, %c0_11, %c0_12, %c128] : memref<1x4x4x1152xbf16, #tpu.memory_space<vmem>>, vector<1x4x4x128xbf16>
    %8 = vector.shape_cast %7 : vector<1x4x4x128xbf16> to vector<4x4x128xbf16>
    %9 = vector.shape_cast %6 : vector<4x4x128xbf16> to vector<1x4x4x128xbf16>
    tpu.vector_store %arg5[%c0_10, %c0_11, %c0_12, %c128], %9 {strides = array<i32>} : memref<1x4x4x1152xbf16, #tpu.memory_space<vmem>>, vector<1x4x4x128xbf16>,
    %c0_13 = arith.constant 0 : index
    %c0_14 = arith.constant 0 : index
    %c2 = arith.constant 2 : index
    %c0_15 = arith.constant 0 : index
    %10 = vector.load %arg1[%c0_13, %c0_14, %c2, %c0_15] : memref<1x6x6x128xbf16, #tpu.memory_space<vmem>>, vector<1x4x4x128xbf16>
    %11 = vector.shape_cast %10 : vector<1x4x4x128xbf16> to vector<4x4x128xbf16>
    %c0_16 = arith.constant 0 : index
    %c0_17 = arith.constant 0 : index
    %c0_18 = arith.constant 0 : index
    %c256 = arith.constant 256 : index
    %12 = vector.load %arg5[%c0_16, %c0_17, %c0_18, %c256] : memref<1x4x4x1152xbf16, #tpu.memory_space<vmem>>, vector<1x4x4x128xbf16>
    %13 = vector.shape_cast %12 : vector<1x4x4x128xbf16> to vector<4x4x128xbf16>
    %14 = vector.shape_cast %11 : vector<4x4x128xbf16> to vector<1x4x4x128xbf16>
    tpu.vector_store %arg5[%c0_16, %c0_17, %c0_18, %c256], %14 {strides = array<i32>} : memref<1x4x4x1152xbf16, #tpu.memory_space<vmem>>, vector<1x4x4x128xbf16>,
    %c0_19 = arith.constant 0 : index
    %c1_20 = arith.constant 1 : index
    %c0_21 = arith.constant 0 : index
    %c0_22 = arith.constant 0 : index
    %15 = vector.load %arg1[%c0_19, %c1_20, %c0_21, %c0_22] : memref<1x6x6x128xbf16, #tpu.memory_space<vmem>>, vector<1x4x4x128xbf16>
    %16 = vector.shape_cast %15 : vector<1x4x4x128xbf16> to vector<4x4x128xbf16>
    %c0_23 = arith.constant 0 : index
    %c0_24 = arith.constant 0 : index
    %c0_25 = arith.constant 0 : index
    %c384 = arith.constant 384 : index
    %17 = vector.load %arg5[%c0_23, %c0_24, %c0_25, %c384] : memref<1x4x4x1152xbf16, #tpu.memory_space<vmem>>, vector<1x4x4x128xbf16>
    %18 = vector.shape_cast %17 : vector<1x4x4x128xbf16> to vector<4x4x128xbf16>
    %19 = vector.shape_cast %16 : vector<4x4x128xbf16> to vector<1x4x4x128xbf16>
    tpu.vector_store %arg5[%c0_23, %c0_24, %c0_25, %c384], %19 {strides = array<i32>} : memref<1x4x4x1152xbf16, #tpu.memory_space<vmem>>, vector<1x4x4x128xbf16>,
    %c0_26 = arith.constant 0 : index
    %c1_27 = arith.constant 1 : index
    %c1_28 = arith.constant 1 : index
    %c0_29 = arith.constant 0 : index
    %20 = vector.load %arg1[%c0_26, %c1_27, %c1_28, %c0_29] : memref<1x6x6x128xbf16, #tpu.memory_space<vmem>>, vector<1x4x4x128xbf16>
    %21 = vector.shape_cast %20 : vector<1x4x4x128xbf16> to vector<4x4x128xbf16>
    %c0_30 = arith.constant 0 : index
    %c0_31 = arith.constant 0 : index
    %c0_32 = arith.constant 0 : index
    %c512 = arith.constant 512 : index
    %22 = vector.load %arg5[%c0_30, %c0_31, %c0_32, %c512] : memref<1x4x4x1152xbf16, #tpu.memory_space<vmem>>, vector<1x4x4x128xbf16>
    %23 = vector.shape_cast %22 : vector<1x4x4x128xbf16> to vector<4x4x128xbf16>
    %24 = vector.shape_cast %21 : vector<4x4x128xbf16> to vector<1x4x4x128xbf16>
    tpu.vector_store %arg5[%c0_30, %c0_31, %c0_32, %c512], %24 {strides = array<i32>} : memref<1x4x4x1152xbf16, #tpu.memory_space<vmem>>, vector<1x4x4x128xbf16>,
    %c0_33 = arith.constant 0 : index
    %c1_34 = arith.constant 1 : index
    %c2_35 = arith.constant 2 : index
    %c0_36 = arith.constant 0 : index
    %25 = vector.load %arg1[%c0_33, %c1_34, %c2_35, %c0_36] : memref<1x6x6x128xbf16, #tpu.memory_space<vmem>>, vector<1x4x4x128xbf16>
    %26 = vector.shape_cast %25 : vector<1x4x4x128xbf16> to vector<4x4x128xbf16>
    %c0_37 = arith.constant 0 : index
    %c0_38 = arith.constant 0 : index
    %c0_39 = arith.constant 0 : index
    %c640 = arith.constant 640 : index
    %27 = vector.load %arg5[%c0_37, %c0_38, %c0_39, %c640] : memref<1x4x4x1152xbf16, #tpu.memory_space<vmem>>, vector<1x4x4x128xbf16>
    %28 = vector.shape_cast %27 : vector<1x4x4x128xbf16> to vector<4x4x128xbf16>
    %29 = vector.shape_cast %26 : vector<4x4x128xbf16> to vector<1x4x4x128xbf16>
    tpu.vector_store %arg5[%c0_37, %c0_38, %c0_39, %c640], %29 {strides = array<i32>} : memref<1x4x4x1152xbf16, #tpu.memory_space<vmem>>, vector<1x4x4x128xbf16>,
    %c0_40 = arith.constant 0 : index
    %c2_41 = arith.constant 2 : index
    %c0_42 = arith.constant 0 : index
    %c0_43 = arith.constant 0 : index
    %30 = vector.load %arg1[%c0_40, %c2_41, %c0_42, %c0_43] : memref<1x6x6x128xbf16, #tpu.memory_space<vmem>>, vector<1x4x4x128xbf16>
    %31 = vector.shape_cast %30 : vector<1x4x4x128xbf16> to vector<4x4x128xbf16>
    %c0_44 = arith.constant 0 : index
    %c0_45 = arith.constant 0 : index
    %c0_46 = arith.constant 0 : index
    %c768 = arith.constant 768 : index
    %32 = vector.load %arg5[%c0_44, %c0_45, %c0_46, %c768] : memref<1x4x4x1152xbf16, #tpu.memory_space<vmem>>, vector<1x4x4x128xbf16>
    %33 = vector.shape_cast %32 : vector<1x4x4x128xbf16> to vector<4x4x128xbf16>
    %34 = vector.shape_cast %31 : vector<4x4x128xbf16> to vector<1x4x4x128xbf16>
    tpu.vector_store %arg5[%c0_44, %c0_45, %c0_46, %c768], %34 {strides = array<i32>} : memref<1x4x4x1152xbf16, #tpu.memory_space<vmem>>, vector<1x4x4x128xbf16>,
    %c0_47 = arith.constant 0 : index
    %c2_48 = arith.constant 2 : index
    %c1_49 = arith.constant 1 : index
    %c0_50 = arith.constant 0 : index
    %35 = vector.load %arg1[%c0_47, %c2_48, %c1_49, %c0_50] : memref<1x6x6x128xbf16, #tpu.memory_space<vmem>>, vector<1x4x4x128xbf16>
    %36 = vector.shape_cast %35 : vector<1x4x4x128xbf16> to vector<4x4x128xbf16>
    %c0_51 = arith.constant 0 : index
    %c0_52 = arith.constant 0 : index
    %c0_53 = arith.constant 0 : index
    %c896 = arith.constant 896 : index
    %37 = vector.load %arg5[%c0_51, %c0_52, %c0_53, %c896] : memref<1x4x4x1152xbf16, #tpu.memory_space<vmem>>, vector<1x4x4x128xbf16>
    %38 = vector.shape_cast %37 : vector<1x4x4x128xbf16> to vector<4x4x128xbf16>
    %39 = vector.shape_cast %36 : vector<4x4x128xbf16> to vector<1x4x4x128xbf16>
    tpu.vector_store %arg5[%c0_51, %c0_52, %c0_53, %c896], %39 {strides = array<i32>} : memref<1x4x4x1152xbf16, #tpu.memory_space<vmem>>, vector<1x4x4x128xbf16>,
    %c0_54 = arith.constant 0 : index
    %c2_55 = arith.constant 2 : index
    %c2_56 = arith.constant 2 : index
    %c0_57 = arith.constant 0 : index
    %40 = vector.load %arg1[%c0_54, %c2_55, %c2_56, %c0_57] : memref<1x6x6x128xbf16, #tpu.memory_space<vmem>>, vector<1x4x4x128xbf16>
    %41 = vector.shape_cast %40 : vector<1x4x4x128xbf16> to vector<4x4x128xbf16>
    %c0_58 = arith.constant 0 : index
    %c0_59 = arith.constant 0 : index
    %c0_60 = arith.constant 0 : index
    %c1024 = arith.constant 1024 : index
    %42 = vector.load %arg5[%c0_58, %c0_59, %c0_60, %c1024] : memref<1x4x4x1152xbf16, #tpu.memory_space<vmem>>, vector<1x4x4x128xbf16>
    %43 = vector.shape_cast %42 : vector<1x4x4x128xbf16> to vector<4x4x128xbf16>
    %44 = vector.shape_cast %41 : vector<4x4x128xbf16> to vector<1x4x4x128xbf16>
    tpu.vector_store %arg5[%c0_58, %c0_59, %c0_60, %c1024], %44 {strides = array<i32>} : memref<1x4x4x1152xbf16, #tpu.memory_space<vmem>>, vector<1x4x4x128xbf16>,
    %c0_61 = arith.constant 0 : index
    %c0_62 = arith.constant 0 : index
    %c0_63 = arith.constant 0 : index
    %c0_64 = arith.constant 0 : index
    %45 = vector.load %arg5[%c0_61, %c0_62, %c0_63, %c0_64] : memref<1x4x4x1152xbf16, #tpu.memory_space<vmem>>, vector<1x4x4x1152xbf16>
    %46 = vector.shape_cast %45 : vector<1x4x4x1152xbf16> to vector<16x1152xbf16>
    %c0_65 = arith.constant 0 : index
    %c0_66 = arith.constant 0 : index
    %47 = vector.load %arg2[%c0_65, %c0_66] : memref<1152x128xbf16, #tpu.memory_space<vmem>>, vector<1152x128xbf16>
    %cst = arith.constant dense<0.000000e+00> : vector<16x128xf32>
    %48 = tpu.matmul %46, %47, %cst {dimension_numbers = #tpu.dot_dimension_numbers<[1], [0], [0], [1], [0, 0, 1, 1], [], []>} : vector<16x1152xbf16>, vector<1152x128xbf16>, vector<16x128xf32> -> vector<16x128xf32>
    %c0_67 = arith.constant 0 : index
    %c0_68 = arith.constant 0 : index
    %49 = vector.load %arg3[%c0_67, %c0_68] : memref<1x128xf32, #tpu.memory_space<vmem>>, vector<1x128xf32>
    %50 = vector.broadcast %49 : vector<1x128xf32> to vector<16x128xf32>
    %51 = arith.addf %48, %50 : vector<16x128xf32>
    %52 = vector.shape_cast %51 : vector<16x128xf32> to vector<1x16x128xf32>
    %c0_69 = arith.constant 0 : index
    %c0_70 = arith.constant 0 : index
    %c0_71 = arith.constant 0 : index
    %53 = vector.load %arg4[%c0_69, %c0_70, %c0_71] : memref<1x16x128xf32, #tpu.memory_space<vmem>>, vector<1x16x128xf32>
    tpu.vector_store %arg4[%c0_69, %c0_70, %c0_71], %52 {strides = array<i32>} : memref<1x16x128xf32, #tpu.memory_space<vmem>>, vector<1x16x128xf32>,
    return
  }
  func.func @transform_0(%arg0: i32) -> (i32, i32, i32, i32) {
    %c0_i32 = arith.constant 0 : i32
    %c0_i32_0 = arith.constant 0 : i32
    %c0_i32_1 = arith.constant 0 : i32
    %c0_i32_2 = arith.constant 0 : i32
    return %arg0, %c0_i32, %c0_i32_0, %c0_i32_1 : i32, i32, i32, i32
  }
  func.func @transform_1(%arg0: i32) -> (i32, i32) {
    %c0_i32 = arith.constant 0 : i32
    %c0_i32_0 = arith.constant 0 : i32
    %c0_i32_1 = arith.constant 0 : i32
    return %c0_i32, %c0_i32_0 : i32, i32
  }
  func.func @transform_2(%arg0: i32) -> (i32, i32) {
    %c0_i32 = arith.constant 0 : i32
    %c0_i32_0 = arith.constant 0 : i32
    %c0_i32_1 = arith.constant 0 : i32
    return %c0_i32, %c0_i32_0 : i32, i32
  }
  func.func @transform_3(%arg0: i32) -> (i32, i32, i32) {
    %c0_i32 = arith.constant 0 : i32
    %c0_i32_0 = arith.constant 0 : i32
    %c0_i32_1 = arith.constant 0 : i32
    return %arg0, %c0_i32, %c0_i32_0 : i32, i32, i32
  }
}

module attributes {stable_mosaic.version = 11 : i64} {
  func.func @_conv_im2col_matmul_kernel(%arg0: i32, %arg1: memref<1x5x5x256xbf16, #tpu.memory_space<vmem>>, %arg2: memref<1024x128xbf16, #tpu.memory_space<vmem>>, %arg3: memref<1x128xf32, #tpu.memory_space<vmem>>, %arg4: memref<1x16x128xbf16, #tpu.memory_space<vmem>>, %arg5: memref<1x4x4x1024xbf16, #tpu.memory_space<vmem>>) attributes {dimension_semantics = [#tpu.dimension_semantics<parallel>], iteration_bounds = array<i64: 2>, scalar_prefetch = 0 : i64, scratch_operands = 1 : i64, tpu.core_type = #tpu.core_type<tc>, window_params = [{transform_indices = @transform_0, window_bounds = array<i64: 1, 5, 5, 256>}, {pipeline_mode = #tpu.pipeline_mode<synchronous>, transform_indices = @transform_1, window_bounds = array<i64: 1024, 128>}, {pipeline_mode = #tpu.pipeline_mode<synchronous>, transform_indices = @transform_2, window_bounds = array<i64: 1, 128>}, {transform_indices = @transform_3, window_bounds = array<i64: 1, 16, 128>}]} {
    %c0 = arith.constant 0 : index
    %c0_0 = arith.constant 0 : index
    %c0_1 = arith.constant 0 : index
    %c0_2 = arith.constant 0 : index
    %0 = vector.load %arg1[%c0, %c0_0, %c0_1, %c0_2] : memref<1x5x5x256xbf16, #tpu.memory_space<vmem>>, vector<1x4x4x256xbf16>
    %1 = vector.shape_cast %0 : vector<1x4x4x256xbf16> to vector<4x4x256xbf16>
    %c0_3 = arith.constant 0 : index
    %c0_4 = arith.constant 0 : index
    %c0_5 = arith.constant 0 : index
    %c0_6 = arith.constant 0 : index
    %2 = vector.load %arg5[%c0_3, %c0_4, %c0_5, %c0_6] : memref<1x4x4x1024xbf16, #tpu.memory_space<vmem>>, vector<1x4x4x256xbf16>
    %3 = vector.shape_cast %2 : vector<1x4x4x256xbf16> to vector<4x4x256xbf16>
    %4 = vector.shape_cast %1 : vector<4x4x256xbf16> to vector<1x4x4x256xbf16>
    tpu.vector_store %arg5[%c0_3, %c0_4, %c0_5, %c0_6], %4 {strides = array<i32>} : memref<1x4x4x1024xbf16, #tpu.memory_space<vmem>>, vector<1x4x4x256xbf16>,
    %c0_7 = arith.constant 0 : index
    %c0_8 = arith.constant 0 : index
    %c1 = arith.constant 1 : index
    %c0_9 = arith.constant 0 : index
    %5 = vector.load %arg1[%c0_7, %c0_8, %c1, %c0_9] : memref<1x5x5x256xbf16, #tpu.memory_space<vmem>>, vector<1x4x4x256xbf16>
    %6 = vector.shape_cast %5 : vector<1x4x4x256xbf16> to vector<4x4x256xbf16>
    %c0_10 = arith.constant 0 : index
    %c0_11 = arith.constant 0 : index
    %c0_12 = arith.constant 0 : index
    %c256 = arith.constant 256 : index
    %7 = vector.load %arg5[%c0_10, %c0_11, %c0_12, %c256] : memref<1x4x4x1024xbf16, #tpu.memory_space<vmem>>, vector<1x4x4x256xbf16>
    %8 = vector.shape_cast %7 : vector<1x4x4x256xbf16> to vector<4x4x256xbf16>
    %9 = vector.shape_cast %6 : vector<4x4x256xbf16> to vector<1x4x4x256xbf16>
    tpu.vector_store %arg5[%c0_10, %c0_11, %c0_12, %c256], %9 {strides = array<i32>} : memref<1x4x4x1024xbf16, #tpu.memory_space<vmem>>, vector<1x4x4x256xbf16>,
    %c0_13 = arith.constant 0 : index
    %c1_14 = arith.constant 1 : index
    %c0_15 = arith.constant 0 : index
    %c0_16 = arith.constant 0 : index
    %10 = vector.load %arg1[%c0_13, %c1_14, %c0_15, %c0_16] : memref<1x5x5x256xbf16, #tpu.memory_space<vmem>>, vector<1x4x4x256xbf16>
    %11 = vector.shape_cast %10 : vector<1x4x4x256xbf16> to vector<4x4x256xbf16>
    %c0_17 = arith.constant 0 : index
    %c0_18 = arith.constant 0 : index
    %c0_19 = arith.constant 0 : index
    %c512 = arith.constant 512 : index
    %12 = vector.load %arg5[%c0_17, %c0_18, %c0_19, %c512] : memref<1x4x4x1024xbf16, #tpu.memory_space<vmem>>, vector<1x4x4x256xbf16>
    %13 = vector.shape_cast %12 : vector<1x4x4x256xbf16> to vector<4x4x256xbf16>
    %14 = vector.shape_cast %11 : vector<4x4x256xbf16> to vector<1x4x4x256xbf16>
    tpu.vector_store %arg5[%c0_17, %c0_18, %c0_19, %c512], %14 {strides = array<i32>} : memref<1x4x4x1024xbf16, #tpu.memory_space<vmem>>, vector<1x4x4x256xbf16>,
    %c0_20 = arith.constant 0 : index
    %c1_21 = arith.constant 1 : index
    %c1_22 = arith.constant 1 : index
    %c0_23 = arith.constant 0 : index
    %15 = vector.load %arg1[%c0_20, %c1_21, %c1_22, %c0_23] : memref<1x5x5x256xbf16, #tpu.memory_space<vmem>>, vector<1x4x4x256xbf16>
    %16 = vector.shape_cast %15 : vector<1x4x4x256xbf16> to vector<4x4x256xbf16>
    %c0_24 = arith.constant 0 : index
    %c0_25 = arith.constant 0 : index
    %c0_26 = arith.constant 0 : index
    %c768 = arith.constant 768 : index
    %17 = vector.load %arg5[%c0_24, %c0_25, %c0_26, %c768] : memref<1x4x4x1024xbf16, #tpu.memory_space<vmem>>, vector<1x4x4x256xbf16>
    %18 = vector.shape_cast %17 : vector<1x4x4x256xbf16> to vector<4x4x256xbf16>
    %19 = vector.shape_cast %16 : vector<4x4x256xbf16> to vector<1x4x4x256xbf16>
    tpu.vector_store %arg5[%c0_24, %c0_25, %c0_26, %c768], %19 {strides = array<i32>} : memref<1x4x4x1024xbf16, #tpu.memory_space<vmem>>, vector<1x4x4x256xbf16>,
    %c0_27 = arith.constant 0 : index
    %c0_28 = arith.constant 0 : index
    %c0_29 = arith.constant 0 : index
    %c0_30 = arith.constant 0 : index
    %20 = vector.load %arg5[%c0_27, %c0_28, %c0_29, %c0_30] : memref<1x4x4x1024xbf16, #tpu.memory_space<vmem>>, vector<1x4x4x1024xbf16>
    %21 = vector.shape_cast %20 : vector<1x4x4x1024xbf16> to vector<16x1024xbf16>
    %c0_31 = arith.constant 0 : index
    %c0_32 = arith.constant 0 : index
    %22 = vector.load %arg2[%c0_31, %c0_32] : memref<1024x128xbf16, #tpu.memory_space<vmem>>, vector<1024x128xbf16>
    %cst = arith.constant dense<0.000000e+00> : vector<16x128xf32>
    %23 = tpu.matmul %21, %22, %cst {dimension_numbers = #tpu.dot_dimension_numbers<[1], [0], [0], [1], [0, 0, 1, 1], [], []>} : vector<16x1024xbf16>, vector<1024x128xbf16>, vector<16x128xf32> -> vector<16x128xf32>
    %c0_33 = arith.constant 0 : index
    %c0_34 = arith.constant 0 : index
    %24 = vector.load %arg3[%c0_33, %c0_34] : memref<1x128xf32, #tpu.memory_space<vmem>>, vector<1x128xf32>
    %25 = vector.broadcast %24 : vector<1x128xf32> to vector<16x128xf32>
    %26 = arith.addf %23, %25 : vector<16x128xf32>
    %cst_35 = arith.constant 0.000000e+00 : f32
    %27 = vector.broadcast %cst_35 : f32 to vector<16x128xf32>
    %28 = arith.maximumf %26, %27 : vector<16x128xf32>
    %29 = vector.shape_cast %28 : vector<16x128xf32> to vector<1x16x128xf32>
    %30 = arith.truncf %29 : vector<1x16x128xf32> to vector<1x16x128xbf16>
    %c0_36 = arith.constant 0 : index
    %c0_37 = arith.constant 0 : index
    %c0_38 = arith.constant 0 : index
    %31 = vector.load %arg4[%c0_36, %c0_37, %c0_38] : memref<1x16x128xbf16, #tpu.memory_space<vmem>>, vector<1x16x128xbf16>
    tpu.vector_store %arg4[%c0_36, %c0_37, %c0_38], %30 {strides = array<i32>} : memref<1x16x128xbf16, #tpu.memory_space<vmem>>, vector<1x16x128xbf16>,
    return
  }
  func.func @transform_0(%arg0: i32) -> (i32, i32, i32, i32) {
    %c0_i32 = arith.constant 0 : i32
    %c0_i32_0 = arith.constant 0 : i32
    %c0_i32_1 = arith.constant 0 : i32
    %c0_i32_2 = arith.constant 0 : i32
    return %arg0, %c0_i32, %c0_i32_0, %c0_i32_1 : i32, i32, i32, i32
  }
  func.func @transform_1(%arg0: i32) -> (i32, i32) {
    %c0_i32 = arith.constant 0 : i32
    %c0_i32_0 = arith.constant 0 : i32
    %c0_i32_1 = arith.constant 0 : i32
    return %c0_i32, %c0_i32_0 : i32, i32
  }
  func.func @transform_2(%arg0: i32) -> (i32, i32) {
    %c0_i32 = arith.constant 0 : i32
    %c0_i32_0 = arith.constant 0 : i32
    %c0_i32_1 = arith.constant 0 : i32
    return %c0_i32, %c0_i32_0 : i32, i32
  }
  func.func @transform_3(%arg0: i32) -> (i32, i32, i32) {
    %c0_i32 = arith.constant 0 : i32
    %c0_i32_0 = arith.constant 0 : i32
    %c0_i32_1 = arith.constant 0 : i32
    return %arg0, %c0_i32, %c0_i32_0 : i32, i32, i32
  }
}

</mosaic_0001>

<llo_original>
// kernel: encoder_forward.3
$region0: #{encoder_forward.3}
  #allocation0 [shape = 'u32[]', space=smem, size = 0x4, offset = 0x4, fixed_abs, tag = 'smem constant byte address 0x4 - core index']
  #allocation1 [shape = 'u32[144,128]{1,0:T(1,128)}', space=vmem, size = 0x12000, scoped, tag = 'internal scratch']
  #allocation2 [shape = 'bf16[1,8,8,128]{3,2,1,0:T(8,128)(2,1)}', space=vmem, size = 0x4000, scoped, tag = 'scratch operand']
  %s0 = inlined_call_operand.vmem [shape: bf16[2,9,9,32], index: 0, kind: input, shape index: {}]
  %s1 = inlined_call_operand.vmem [shape: bf16[128,128], index: 1, kind: input, shape index: {}]
  %s2 = inlined_call_operand.vmem [shape: f32[1,128], index: 2, kind: input, shape index: {}]
  %s3 = inlined_call_operand.vmem [shape: bf16[2,64,128], index: 3, kind: output, shape index: {}]
  %s4 = sld [smem:[#allocation0]]
  $region45: #{encoder_forward.3} parent=0
    _
  %s6 = ssub.s32 1, %s4
  %s7 = scalar_select 0, %s6, %s4
  loop: start=0, step=1, limit=4
  $region2: #{encoder_forward.3} parent=0 // loop_pre_header
    _
  $region3: #{encoder_forward.3} parent=0 // loop_header
    %s9 = sphi 0, %s13
    %p10 = scmp.ge.s32.totalorder %s9, 4
    %s19 = sphi 0, %s21
    %s22 = sphi 0, %s19
    %s23 = sphi 0, %s22
    %s39 = sphi 0, %s23
    %s43 = sphi 0, %s43
    %s45 = sphi 0, %s43
    %s46 = sphi 0, %s45
    %s60 = sphi 0, %s46
    %s64 = sphi 0, %s64
    %s66 = sphi 0, %s64
    %s67 = sphi 0, %s66
    %s81 = sphi 0, %s67
    %s87 = sphi 0, %s89
    %s90 = sphi 0, %s87
    %s91 = sphi 0, %s90
    %s107 = sphi 0, %s91
  $region4: #{encoder_forward.3} parent=0 // loop_header_branch
    %12 = sbr.rel (%p10) target = $region8
  $region5: #{encoder_forward.3} parent=0 // loop_body
    %s14 = ssub.s32 %s9, 1
    %s15 = ssub.s32 %s9, 2
    %s16 = sadd.s32 %s9, 1
    %s17 = ssub.s32 %s9, %s16
    %p18 = scmp.eq.s32.totalorder %s17, 0
    %s20 = sadd.s32 %s19, 1
    %s21 = scalar_select %p18, %s19, %s20
    %p24 = pneg %p18
    %p25 = scmp.eq.s32.totalorder %s9, 1
    %p26 = por %p24, %p25
    %p27 = scmp.ne.s32.totalorder %s19, %s22
    %p28 = scmp.eq.s32.totalorder %s9, 0
    %p29 = por %p27, %p28
    %p30 = scmp.ne.s32.totalorder %s19, %s22
    %p31 = scmp.eq.s32.totalorder %s14, 1
    %p32 = por %p30, %p31
    %p33 = scmp.ne.s32.totalorder %s22, %s23
    %p34 = scmp.eq.s32.totalorder %s14, 0
    %p35 = por %p33, %p34
    %p36 = scmp.ne.s32.totalorder %s22, %s23
    %p37 = scmp.eq.s32.totalorder %s15, 1
    %p38 = por %p36, %p37
    %p40 = scmp.ne.s32.totalorder %s23, %s39
    %p41 = scmp.eq.s32.totalorder %s15, 0
    %p42 = por %p40, %p41
    %s44 = sadd.s32 %s43, 1
    %p47 = scmp.eq.s32.totalorder %s9, 1
    %p48 = scmp.ne.s32.totalorder %s43, %s45
    %p49 = scmp.eq.s32.totalorder %s9, 0
    %p50 = por %p48, %p49
    %p51 = scmp.ne.s32.totalorder %s43, %s45
    %p52 = scmp.eq.s32.totalorder %s14, 1
    %p53 = por %p51, %p52
    %p54 = scmp.ne.s32.totalorder %s45, %s46
    %p55 = scmp.eq.s32.totalorder %s14, 0
    %p56 = por %p54, %p55
    %p57 = scmp.ne.s32.totalorder %s45, %s46
    %p58 = scmp.eq.s32.totalorder %s15, 1
    %p59 = por %p57, %p58
    %p61 = scmp.ne.s32.totalorder %s46, %s60
    %p62 = scmp.eq.s32.totalorder %s15, 0
    %p63 = por %p61, %p62
    %s65 = sadd.s32 %s64, 1
    %p68 = scmp.eq.s32.totalorder %s9, 1
    %p69 = scmp.ne.s32.totalorder %s64, %s66
    %p70 = scmp.eq.s32.totalorder %s9, 0
    %p71 = por %p69, %p70
    %p72 = scmp.ne.s32.totalorder %s64, %s66
    %p73 = scmp.eq.s32.totalorder %s14, 1
    %p74 = por %p72, %p73
    %p75 = scmp.ne.s32.totalorder %s66, %s67
    %p76 = scmp.eq.s32.totalorder %s14, 0
    %p77 = por %p75, %p76
    %p78 = scmp.ne.s32.totalorder %s66, %s67
    %p79 = scmp.eq.s32.totalorder %s15, 1
    %p80 = por %p78, %p79
    %p82 = scmp.ne.s32.totalorder %s67, %s81
    %p83 = scmp.eq.s32.totalorder %s15, 0
    %p84 = por %p82, %p83
    %s85 = ssub.s32 %s9, %s16
    %p86 = scmp.eq.s32.totalorder %s85, 0
    %s88 = sadd.s32 %s87, 1
    %s89 = scalar_select %p86, %s87, %s88
    %p92 = pneg %p86
    %p93 = scmp.eq.s32.totalorder %s9, 1
    %p94 = por %p92, %p93
    %p95 = scmp.ne.s32.totalorder %s87, %s90
    %p96 = scmp.eq.s32.totalorder %s9, 0
    %p97 = por %p95, %p96
    %p98 = scmp.ne.s32.totalorder %s87, %s90
    %p99 = scmp.eq.s32.totalorder %s14, 1
    %p100 = por %p98, %p99
    %p101 = scmp.ne.s32.totalorder %s90, %s91
    %p102 = scmp.eq.s32.totalorder %s14, 0
    %p103 = por %p101, %p102
    %p104 = scmp.ne.s32.totalorder %s90, %s91
    %p105 = scmp.eq.s32.totalorder %s15, 1
    %p106 = por %p104, %p105
    %p108 = scmp.ne.s32.totalorder %s91, %s107
    %p109 = scmp.eq.s32.totalorder %s15, 0
    %p110 = por %p108, %p109
    %p111 = scmp.le.s32.totalorder 1, %s9
    %p112 = scmp.lt.s32.totalorder %s9, 3
    %p113 = pnand %p111, %p112
    %p114 = pneg %p113
    // Predicated region
    $region9: #{encoder_forward.3} parent=5 // pred_check
      _
    $region10: #{encoder_forward.3} parent=5 // pred_check_branch
      %116 = sbr.rel (%p113) target = $region12
    $region11: #{encoder_forward.3} parent=5 // pred_region
      %s117 = ssub.s32 %s9, 1
      // Predicated region
      $region13: #{encoder_forward.3} parent=11 // pred_check
        %p118 = pneg %p56
      $region14: #{encoder_forward.3} parent=11 // pred_check_branch
        %120 = sbr.rel (%p118) target = $region16
      $region15: #{encoder_forward.3} parent=11 // pred_region
        _
      $region16: #{encoder_forward.3} parent=11 // pred_fallthru
        _
      // Predicated region
      $region17: #{encoder_forward.3} parent=11 // pred_check
        %p121 = pneg %p77
      $region18: #{encoder_forward.3} parent=11 // pred_check_branch
        %123 = sbr.rel (%p121) target = $region20
      $region19: #{encoder_forward.3} parent=11 // pred_region
        _
      $region20: #{encoder_forward.3} parent=11 // pred_fallthru
        _
    $region12: #{encoder_forward.3} parent=5 // pred_fallthru
      _
    %p124 = scmp.lt.s32.totalorder %s9, 2
    // Predicated region
    $region21: #{encoder_forward.3} parent=5 // pred_check
      %p125 = pneg %p124
    $region22: #{encoder_forward.3} parent=5 // pred_check_branch
      %127 = sbr.rel (%p125) target = $region24
    $region23: #{encoder_forward.3} parent=5 // pred_region
      // Predicated region
      $region25: #{encoder_forward.3} parent=23 // pred_check
        %p128 = pneg %p29
      $region26: #{encoder_forward.3} parent=23 // pred_check_branch
        %130 = sbr.rel (%p128) target = $region28
      $region27: #{encoder_forward.3} parent=23 // pred_region
        %p131 = scmp.lt.s32.totalorder %s9, 1
        %s132 = scalar_select %p131, %s9, 1
        %s133 = smul.addr %s132, 18
        %s134 = smul.addr %s133, 4
        %s135 = scalar_lea.vmem %s0, %s134
      $region28: #{encoder_forward.3} parent=23 // pred_fallthru
        _
    $region24: #{encoder_forward.3} parent=5 // pred_fallthru
      _
    %p136 = scmp.le.s32.totalorder 1, %s9
    %p137 = scmp.lt.s32.totalorder %s9, 3
    %p138 = pnand %p136, %p137
    %p139 = pneg %p138
    // Predicated region
    $region29: #{encoder_forward.3} parent=5 // pred_check
      _
    $region30: #{encoder_forward.3} parent=5 // pred_check_branch
      %141 = sbr.rel (%p138) target = $region32
    $region31: #{encoder_forward.3} parent=5 // pred_region
      %s142 = ssub.s32 %s9, 1
      %p143 = scmp.lt.s32.totalorder %s14, 1
      %s144 = scalar_select %p143, %s14, 1
      %s145 = smul.addr %s144, 18
      %s146 = smul.addr %s145, 4
      %s147 = scalar_lea.vmem %s0, %s146
      %p148 = pneg %p35
      %p149 = pneg %p32
      %p150 = pneg %p56
      %p151 = pneg %p53
      %p152 = pneg %p77
      %p153 = pneg %p74
      %p154 = pneg %p103
      %p155 = pneg %p100
      %p156 = scmp.lt.s32.totalorder %s14, 1
      %s157 = scalar_select %p156, %s14, 1
      %s158 = smul.addr %s157, 8
      %s159 = smul.addr %s158, 4
      %s160 = scalar_lea.vmem %s3, %s159
      %p161 = scmp.lt.s32.totalorder %s14, 1
      %s162 = scalar_select %p161, %s14, 1
      %s163 = smul.addr %s162, 18
      %s164 = smul.addr %s163, 4
      %s165 = scalar_lea.vmem %s0, %s164
      %p166 = scmp.lt.s32.totalorder %s14, 1
      %s167 = scalar_select %p166, %s14, 1
      %s168 = smul.addr %s167, 8
      %s169 = smul.addr %s168, 4
      %s170 = scalar_lea.vmem %s3, %s169
      %v172 = vld [vmem:[%s165] sm:$0xf]
      %v173 = vld [vmem:[%s165 + $0x8] sm:$0xf]
      %v174 = vld [vmem:[%s165 + $0x10] sm:$0xf]
      %v175 = vld [vmem:[%s165 + $0x18] sm:$0xf]
      %v176 = vld [vmem:[%s165 + $0x20] sm:$0xf]
      %v177 = vld [vmem:[%s165 + $0x28] sm:$0xf]
      %v178 = vld [vmem:[%s165 + $0x30] sm:$0xf]
      %v179 = vld [vmem:[%s165 + $0x38] sm:$0xf]
      %vm180 = vcmask 257024
      %181 = vst.msk [vmem:[#allocation2] sm:$0xf] %vm180, %v172
      %182 = vst.msk [vmem:[#allocation2 + $0x4] sm:$0xf] %vm180, %v173
      %183 = vst.msk [vmem:[#allocation2 + $0x8] sm:$0xf] %vm180, %v174
      %184 = vst.msk [vmem:[#allocation2 + $0xc] sm:$0xf] %vm180, %v175
      %185 = vst.msk [vmem:[#allocation2 + $0x10] sm:$0xf] %vm180, %v176
      %186 = vst.msk [vmem:[#allocation2 + $0x14] sm:$0xf] %vm180, %v177
      %187 = vst.msk [vmem:[#allocation2 + $0x18] sm:$0xf] %vm180, %v178
      %188 = vst.msk [vmem:[#allocation2 + $0x1c] sm:$0xf] %vm180, %v179
      %v189 = vld [vmem:[%s165] sm:$0xf]
      %v190 = vld [vmem:[%s165 + $0x4] sm:$0x1]
      %v191 = vld [vmem:[%s165 + $0x8] sm:$0xf]
      %v192 = vld [vmem:[%s165 + $0xc] sm:$0x1]
      %v193 = vld [vmem:[%s165 + $0x10] sm:$0xf]
      %v194 = vld [vmem:[%s165 + $0x14] sm:$0x1]
      %v195 = vld [vmem:[%s165 + $0x18] sm:$0xf]
      %v196 = vld [vmem:[%s165 + $0x1c] sm:$0x1]
      %v197 = vld [vmem:[%s165 + $0x20] sm:$0xf]
      %v198 = vld [vmem:[%s165 + $0x24] sm:$0x1]
      %v199 = vld [vmem:[%s165 + $0x28] sm:$0xf]
      %v200 = vld [vmem:[%s165 + $0x2c] sm:$0x1]
      %v201 = vld [vmem:[%s165 + $0x30] sm:$0xf]
      %v202 = vld [vmem:[%s165 + $0x34] sm:$0x1]
      %v203 = vld [vmem:[%s165 + $0x38] sm:$0xf]
      %v204 = vld [vmem:[%s165 + $0x3c] sm:$0x1]
      %vm205 = vsmask.f32 3328
      %vm206 = vsmask.f32 7440
      %vm207 = vmor %vm205, %vm206
      %v209 = vshrl.u32 %v189, 16
      %v211 = vrot.slane %v209, 4
      %v212 = vshll.u32 %v189, 16
      %v214 = vrot.slane %v212, 5
      %v215 = vor.u32 %v211, %v214
      %v216 = vrot.slane %v215, 4
      %v218 = vshll.u32 %v190, 16
      %v220 = vrot.slane %v218, 5
      %v221 = vsel %vm207, %v216, %v220
      %v223 = vshrl.u32 %v191, 16
      %v225 = vrot.slane %v223, 4
      %v226 = vshll.u32 %v191, 16
      %v228 = vrot.slane %v226, 5
      %v229 = vor.u32 %v225, %v228
      %v230 = vrot.slane %v229, 4
      %v232 = vshll.u32 %v192, 16
      %v234 = vrot.slane %v232, 5
      %v235 = vsel %vm207, %v230, %v234
      %v237 = vshrl.u32 %v193, 16
      %v239 = vrot.slane %v237, 4
      %v240 = vshll.u32 %v193, 16
      %v242 = vrot.slane %v240, 5
      %v243 = vor.u32 %v239, %v242
      %v244 = vrot.slane %v243, 4
      %v246 = vshll.u32 %v194, 16
      %v248 = vrot.slane %v246, 5
      %v249 = vsel %vm207, %v244, %v248
      %v251 = vshrl.u32 %v195, 16
      %v253 = vrot.slane %v251, 4
      %v254 = vshll.u32 %v195, 16
      %v256 = vrot.slane %v254, 5
      %v257 = vor.u32 %v253, %v256
      %v258 = vrot.slane %v257, 4
      %v260 = vshll.u32 %v196, 16
      %v262 = vrot.slane %v260, 5
      %v263 = vsel %vm207, %v258, %v262
      %v265 = vshrl.u32 %v197, 16
      %v267 = vrot.slane %v265, 4
      %v268 = vshll.u32 %v197, 16
      %v270 = vrot.slane %v268, 5
      %v271 = vor.u32 %v267, %v270
      %v272 = vrot.slane %v271, 4
      %v274 = vshll.u32 %v198, 16
      %v276 = vrot.slane %v274, 5
      %v277 = vsel %vm207, %v272, %v276
      %v279 = vshrl.u32 %v199, 16
      %v281 = vrot.slane %v279, 4
      %v282 = vshll.u32 %v199, 16
      %v284 = vrot.slane %v282, 5
      %v285 = vor.u32 %v281, %v284
      %v286 = vrot.slane %v285, 4
      %v288 = vshll.u32 %v200, 16
      %v290 = vrot.slane %v288, 5
      %v291 = vsel %vm207, %v286, %v290
      %v293 = vshrl.u32 %v201, 16
      %v295 = vrot.slane %v293, 4
      %v296 = vshll.u32 %v201, 16
      %v298 = vrot.slane %v296, 5
      %v299 = vor.u32 %v295, %v298
      %v300 = vrot.slane %v299, 4
      %v302 = vshll.u32 %v202, 16
      %v304 = vrot.slane %v302, 5
      %v305 = vsel %vm207, %v300, %v304
      %v307 = vshrl.u32 %v203, 16
      %v309 = vrot.slane %v307, 4
      %v310 = vshll.u32 %v203, 16
      %v312 = vrot.slane %v310, 5
      %v313 = vor.u32 %v309, %v312
      %v314 = vrot.slane %v313, 4
      %v316 = vshll.u32 %v204, 16
      %v318 = vrot.slane %v316, 5
      %v319 = vsel %vm207, %v314, %v318
      %320 = vrot.lane.b32.xlu0 %v221, 32
      %v321 = vpop.permute.xlu0 %320
      %322 = vrot.lane.b32.xlu0 %v235, 32
      %v323 = vpop.permute.xlu0 %322
      %324 = vrot.lane.b32.xlu0 %v249, 32
      %v325 = vpop.permute.xlu0 %324
      %326 = vrot.lane.b32.xlu0 %v263, 32
      %v327 = vpop.permute.xlu0 %326
      %328 = vrot.lane.b32.xlu0 %v277, 32
      %v329 = vpop.permute.xlu0 %328
      %330 = vrot.lane.b32.xlu0 %v291, 32
      %v331 = vpop.permute.xlu0 %330
      %332 = vrot.lane.b32.xlu0 %v305, 32
      %v333 = vpop.permute.xlu0 %332
      %334 = vrot.lane.b32.xlu0 %v319, 32
      %v335 = vpop.permute.xlu0 %334
      %vm344 = vcmask 519424
      %345 = vst.msk [vmem:[#allocation2] sm:$0xf] %vm344, %v321
      %346 = vst.msk [vmem:[#allocation2 + $0x4] sm:$0xf] %vm344, %v323
      %347 = vst.msk [vmem:[#allocation2 + $0x8] sm:$0xf] %vm344, %v325
      %348 = vst.msk [vmem:[#allocation2 + $0xc] sm:$0xf] %vm344, %v327
      %349 = vst.msk [vmem:[#allocation2 + $0x10] sm:$0xf] %vm344, %v329
      %350 = vst.msk [vmem:[#allocation2 + $0x14] sm:$0xf] %vm344, %v331
      %351 = vst.msk [vmem:[#allocation2 + $0x18] sm:$0xf] %vm344, %v333
      %352 = vst.msk [vmem:[#allocation2 + $0x1c] sm:$0xf] %vm344, %v335
      %s353 = scalar_lea.vmem %s165, 8
      %v354 = vld [vmem:[%s353] sm:$0xf]
      %v355 = vld [vmem:[%s353 + $0x8] sm:$0xf]
      %v356 = vld [vmem:[%s353 + $0x10] sm:$0xf]
      %v357 = vld [vmem:[%s353 + $0x18] sm:$0xf]
      %v358 = vld [vmem:[%s353 + $0x20] sm:$0xf]
      %v359 = vld [vmem:[%s353 + $0x28] sm:$0xf]
      %v360 = vld [vmem:[%s353 + $0x30] sm:$0xf]
      %v361 = vld [vmem:[%s353 + $0x38] sm:$0xf]
      %370 = vrot.lane.b32.xlu0 %v354, 64
      %v371 = vpop.permute.xlu0 %370
      %372 = vrot.lane.b32.xlu0 %v355, 64
      %v373 = vpop.permute.xlu0 %372
      %374 = vrot.lane.b32.xlu0 %v356, 64
      %v375 = vpop.permute.xlu0 %374
      %376 = vrot.lane.b32.xlu0 %v357, 64
      %v377 = vpop.permute.xlu0 %376
      %378 = vrot.lane.b32.xlu0 %v358, 64
      %v379 = vpop.permute.xlu0 %378
      %380 = vrot.lane.b32.xlu0 %v359, 64
      %v381 = vpop.permute.xlu0 %380
      %382 = vrot.lane.b32.xlu0 %v360, 64
      %v383 = vpop.permute.xlu0 %382
      %384 = vrot.lane.b32.xlu0 %v361, 64
      %v385 = vpop.permute.xlu0 %384
      %vm394 = vcmask 781824
      %395 = vst.msk [vmem:[#allocation2] sm:$0xf] %vm394, %v371
      %396 = vst.msk [vmem:[#allocation2 + $0x4] sm:$0xf] %vm394, %v373
      %397 = vst.msk [vmem:[#allocation2 + $0x8] sm:$0xf] %vm394, %v375
      %398 = vst.msk [vmem:[#allocation2 + $0xc] sm:$0xf] %vm394, %v377
      %399 = vst.msk [vmem:[#allocation2 + $0x10] sm:$0xf] %vm394, %v379
      %400 = vst.msk [vmem:[#allocation2 + $0x14] sm:$0xf] %vm394, %v381
      %401 = vst.msk [vmem:[#allocation2 + $0x18] sm:$0xf] %vm394, %v383
      %402 = vst.msk [vmem:[#allocation2 + $0x1c] sm:$0xf] %vm394, %v385
      %v403 = vld [vmem:[%s353] sm:$0xf]
      %v404 = vld [vmem:[%s353 + $0x4] sm:$0x1]
      %v405 = vld [vmem:[%s353 + $0x8] sm:$0xf]
      %v406 = vld [vmem:[%s353 + $0xc] sm:$0x1]
      %v407 = vld [vmem:[%s353 + $0x10] sm:$0xf]
      %v408 = vld [vmem:[%s353 + $0x14] sm:$0x1]
      %v409 = vld [vmem:[%s353 + $0x18] sm:$0xf]
      %v410 = vld [vmem:[%s353 + $0x1c] sm:$0x1]
      %v411 = vld [vmem:[%s353 + $0x20] sm:$0xf]
      %v412 = vld [vmem:[%s353 + $0x24] sm:$0x1]
      %v413 = vld [vmem:[%s353 + $0x28] sm:$0xf]
      %v414 = vld [vmem:[%s353 + $0x2c] sm:$0x1]
      %v415 = vld [vmem:[%s353 + $0x30] sm:$0xf]
      %v416 = vld [vmem:[%s353 + $0x34] sm:$0x1]
      %v417 = vld [vmem:[%s353 + $0x38] sm:$0xf]
      %v418 = vld [vmem:[%s353 + $0x3c] sm:$0x1]
      %v420 = vshrl.u32 %v403, 16
      %v422 = vrot.slane %v420, 4
      %v423 = vshll.u32 %v403, 16
      %v425 = vrot.slane %v423, 5
      %v426 = vor.u32 %v422, %v425
      %v427 = vrot.slane %v426, 4
      %v429 = vshll.u32 %v404, 16
      %v431 = vrot.slane %v429, 5
      %v432 = vsel %vm207, %v427, %v431
      %v434 = vshrl.u32 %v405, 16
      %v436 = vrot.slane %v434, 4
      %v437 = vshll.u32 %v405, 16
      %v439 = vrot.slane %v437, 5
      %v440 = vor.u32 %v436, %v439
      %v441 = vrot.slane %v440, 4
      %v443 = vshll.u32 %v406, 16
      %v445 = vrot.slane %v443, 5
      %v446 = vsel %vm207, %v441, %v445
      %v448 = vshrl.u32 %v407, 16
      %v450 = vrot.slane %v448, 4
      %v451 = vshll.u32 %v407, 16
      %v453 = vrot.slane %v451, 5
      %v454 = vor.u32 %v450, %v453
      %v455 = vrot.slane %v454, 4
      %v457 = vshll.u32 %v408, 16
      %v459 = vrot.slane %v457, 5
      %v460 = vsel %vm207, %v455, %v459
      %v462 = vshrl.u32 %v409, 16
      %v464 = vrot.slane %v462, 4
      %v465 = vshll.u32 %v409, 16
      %v467 = vrot.slane %v465, 5
      %v468 = vor.u32 %v464, %v467
      %v469 = vrot.slane %v468, 4
      %v471 = vshll.u32 %v410, 16
      %v473 = vrot.slane %v471, 5
      %v474 = vsel %vm207, %v469, %v473
      %v476 = vshrl.u32 %v411, 16
      %v478 = vrot.slane %v476, 4
      %v479 = vshll.u32 %v411, 16
      %v481 = vrot.slane %v479, 5
      %v482 = vor.u32 %v478, %v481
      %v483 = vrot.slane %v482, 4
      %v485 = vshll.u32 %v412, 16
      %v487 = vrot.slane %v485, 5
      %v488 = vsel %vm207, %v483, %v487
      %v490 = vshrl.u32 %v413, 16
      %v492 = vrot.slane %v490, 4
      %v493 = vshll.u32 %v413, 16
      %v495 = vrot.slane %v493, 5
      %v496 = vor.u32 %v492, %v495
      %v497 = vrot.slane %v496, 4
      %v499 = vshll.u32 %v414, 16
      %v501 = vrot.slane %v499, 5
      %v502 = vsel %vm207, %v497, %v501
      %v504 = vshrl.u32 %v415, 16
      %v506 = vrot.slane %v504, 4
      %v507 = vshll.u32 %v415, 16
      %v509 = vrot.slane %v507, 5
      %v510 = vor.u32 %v506, %v509
      %v511 = vrot.slane %v510, 4
      %v513 = vshll.u32 %v416, 16
      %v515 = vrot.slane %v513, 5
      %v516 = vsel %vm207, %v511, %v515
      %v518 = vshrl.u32 %v417, 16
      %v520 = vrot.slane %v518, 4
      %v521 = vshll.u32 %v417, 16
      %v523 = vrot.slane %v521, 5
      %v524 = vor.u32 %v520, %v523
      %v525 = vrot.slane %v524, 4
      %v527 = vshll.u32 %v418, 16
      %v529 = vrot.slane %v527, 5
      %v530 = vsel %vm207, %v525, %v529
      %531 = vrot.lane.b32.xlu0 %v432, 96
      %v532 = vpop.permute.xlu0 %531
      %533 = vrot.lane.b32.xlu0 %v446, 96
      %v534 = vpop.permute.xlu0 %533
      %535 = vrot.lane.b32.xlu0 %v460, 96
      %v536 = vpop.permute.xlu0 %535
      %537 = vrot.lane.b32.xlu0 %v474, 96
      %v538 = vpop.permute.xlu0 %537
      %539 = vrot.lane.b32.xlu0 %v488, 96
      %v540 = vpop.permute.xlu0 %539
      %541 = vrot.lane.b32.xlu0 %v502, 96
      %v542 = vpop.permute.xlu0 %541
      %543 = vrot.lane.b32.xlu0 %v516, 96
      %v544 = vpop.permute.xlu0 %543
      %545 = vrot.lane.b32.xlu0 %v530, 96
      %v546 = vpop.permute.xlu0 %545
      %vm555 = vcmask 1044224
      %556 = vst.msk [vmem:[#allocation2] sm:$0xf] %vm555, %v532
      %557 = vst.msk [vmem:[#allocation2 + $0x4] sm:$0xf] %vm555, %v534
      %558 = vst.msk [vmem:[#allocation2 + $0x8] sm:$0xf] %vm555, %v536
      %559 = vst.msk [vmem:[#allocation2 + $0xc] sm:$0xf] %vm555, %v538
      %560 = vst.msk [vmem:[#allocation2 + $0x10] sm:$0xf] %vm555, %v540
      %561 = vst.msk [vmem:[#allocation2 + $0x14] sm:$0xf] %vm555, %v542
      %562 = vst.msk [vmem:[#allocation2 + $0x18] sm:$0xf] %vm555, %v544
      %563 = vst.msk [vmem:[#allocation2 + $0x1c] sm:$0xf] %vm555, %v546
      %v564 = vld [vmem:[#allocation2] sm:$0xf]
      %v565 = vld [vmem:[#allocation2 + $0x4] sm:$0xf]
      %v566 = vld [vmem:[#allocation2 + $0x8] sm:$0xf]
      %v567 = vld [vmem:[#allocation2 + $0xc] sm:$0xf]
      %v568 = vld [vmem:[#allocation2 + $0x10] sm:$0xf]
      %v569 = vld [vmem:[#allocation2 + $0x14] sm:$0xf]
      %v570 = vld [vmem:[#allocation2 + $0x18] sm:$0xf]
      %v571 = vld [vmem:[#allocation2 + $0x1c] sm:$0xf]
      %v572 = vld [vmem:[%s1] sm:$0xf]
      %v573 = vld [vmem:[%s1 + $0x4] sm:$0xf]
      %v574 = vld [vmem:[%s1 + $0x8] sm:$0xf]
      %v575 = vld [vmem:[%s1 + $0xc] sm:$0xf]
      %v576 = vld [vmem:[%s1 + $0x10] sm:$0xf]
      %v577 = vld [vmem:[%s1 + $0x14] sm:$0xf]
      %v578 = vld [vmem:[%s1 + $0x18] sm:$0xf]
      %v579 = vld [vmem:[%s1 + $0x1c] sm:$0xf]
      %v580 = vld [vmem:[%s1 + $0x20] sm:$0xf]
      %v581 = vld [vmem:[%s1 + $0x24] sm:$0xf]
      %v582 = vld [vmem:[%s1 + $0x28] sm:$0xf]
      %v583 = vld [vmem:[%s1 + $0x2c] sm:$0xf]
      %v584 = vld [vmem:[%s1 + $0x30] sm:$0xf]
      %v585 = vld [vmem:[%s1 + $0x34] sm:$0xf]
      %v586 = vld [vmem:[%s1 + $0x38] sm:$0xf]
      %v587 = vld [vmem:[%s1 + $0x3c] sm:$0xf]
      %v588 = vld [vmem:[%s2] sm:$0x1]
      %v590 = vlaneseq
      %v591 = vshrl.u32 %v590, 7
      %v592 = vsub.s32 0, %v591
      %v593 = vrot.slane %v588, %v592
      %v603 = vunpack.c.l.b16 %v564
      %v604 = vunpack.c.l.b16 %v565
      %v605 = vunpack.c.l.b16 %v566
      %v606 = vunpack.c.l.b16 %v567
      %v607 = vunpack.c.l.b16 %v568
      %v608 = vunpack.c.l.b16 %v569
      %v609 = vunpack.c.l.b16 %v570
      %v610 = vunpack.c.l.b16 %v571
      %v611 = vpack.c.b16 %v604, %v603
      %v612 = vpack.c.b16 %v606, %v605
      %v613 = vpack.c.b16 %v608, %v607
      %v614 = vpack.c.b16 %v610, %v609
      %v635 = vunpack.c.l.b16 %v572
      %v636 = vunpack.c.l.b16 %v573
      %v637 = vunpack.c.l.b16 %v574
      %v638 = vunpack.c.l.b16 %v575
      %v639 = vunpack.c.l.b16 %v576
      %v640 = vunpack.c.l.b16 %v577
      %v641 = vunpack.c.l.b16 %v578
      %v642 = vunpack.c.l.b16 %v579
      %v643 = vunpack.c.l.b16 %v580
      %v644 = vunpack.c.l.b16 %v581
      %v645 = vunpack.c.l.b16 %v582
      %v646 = vunpack.c.l.b16 %v583
      %v647 = vunpack.c.l.b16 %v584
      %v648 = vunpack.c.l.b16 %v585
      %v649 = vunpack.c.l.b16 %v586
      %v650 = vunpack.c.l.b16 %v587
      %v651 = vpack.c.b16 %v636, %v635
      %v652 = vpack.c.b16 %v638, %v637
      %v653 = vpack.c.b16 %v640, %v639
      %v654 = vpack.c.b16 %v642, %v641
      %v655 = vpack.c.b16 %v644, %v643
      %v656 = vpack.c.b16 %v646, %v645
      %v657 = vpack.c.b16 %v648, %v647
      %v658 = vpack.c.b16 %v650, %v649
      %667 = vmatprep.subr.bf16.mxu0 0
      %668 = vmatpush1.bf16.msra.mxu0 %v651
      %669 = vmatprep.subr.bf16.mxu0 0
      %670 = vmatpush1.bf16.msra.mxu0 %v652
      %671 = vmatprep.subr.bf16.mxu0 0
      %672 = vmatpush1.bf16.msra.mxu0 %v653
      %673 = vmatprep.subr.bf16.mxu0 0
      %674 = vmatpush1.bf16.msra.mxu0 %v654
      %675 = vmatprep.subr.bf16.mxu0 0
      %676 = vmatpush1.bf16.msra.mxu0 %v655
      %677 = vmatprep.subr.bf16.mxu0 0
      %678 = vmatpush1.bf16.msra.mxu0 %v656
      %679 = vmatprep.subr.bf16.mxu0 0
      %680 = vmatpush1.bf16.msra.mxu0 %v657
      %681 = vmatprep.subr.bf16.mxu0 0
      %682 = vmatpush1.bf16.msra.mxu0 %v658
      %683 = vmatprep.subr.bf16.mxu0 0
      %684 = vmatpush1.bf16.msra.mxu0 0
      %685 = vmatprep.subr.bf16.mxu0 0
      %686 = vmatpush1.bf16.msra.mxu0 0
      %687 = vmatprep.subr.bf16.mxu0 0
      %688 = vmatpush1.bf16.msra.mxu0 0
      %689 = vmatprep.subr.bf16.mxu0 0
      %690 = vmatpush1.bf16.msra.mxu0 0
      %691 = vmatprep.subr.bf16.mxu0 0
      %692 = vmatpush1.bf16.msra.mxu0 0
      %693 = vmatprep.subr.bf16.mxu0 0
      %694 = vmatpush1.bf16.msra.mxu0 0
      %695 = vmatprep.subr.bf16.mxu0 0
      %696 = vmatpush1.bf16.msra.mxu0 0
      %697 = vmatprep.subr.bf16.mxu0 0
      %698 = vmatpush1.bf16.msra.mxu0 0
      %699 = vmatprep.mubr.bf16.mxu0 0
      %700 = vmatmul.mubr.bf16.gmra.mrb[0].mxu0 %v611
      %v701 = vpop.f32.mrb[0].mxu0
      %v702 = vadd.f32 %v593, %v701
      %v703 = vpop.f32.mrb[0].mxu0
      %v704 = vpop.f32.mrb[0].mxu0
      %v705 = vadd.f32 %v593, %v704
      %v706 = vpop.f32.mrb[0].mxu0
      %707 = vmatprep.mubr.bf16.mxu0 0
      %708 = vmatmul.mubr.bf16.gmra.mrb[0].mxu0 %v612
      %v709 = vpop.f32.mrb[0].mxu0
      %v710 = vadd.f32 %v593, %v709
      %v711 = vpop.f32.mrb[0].mxu0
      %v712 = vpop.f32.mrb[0].mxu0
      %v713 = vadd.f32 %v593, %v712
      %v714 = vpop.f32.mrb[0].mxu0
      %715 = vmatprep.mubr.bf16.mxu0 0
      %716 = vmatmul.mubr.bf16.gmra.mrb[0].mxu0 %v613
      %v717 = vpop.f32.mrb[0].mxu0
      %v718 = vadd.f32 %v593, %v717
      %v719 = vpop.f32.mrb[0].mxu0
      %v720 = vpop.f32.mrb[0].mxu0
      %v721 = vadd.f32 %v593, %v720
      %v722 = vpop.f32.mrb[0].mxu0
      %723 = vmatprep.mubr.bf16.mxu0 0
      %724 = vmatmul.mubr.bf16.gmra.mrb[0].mxu0 %v614
      %v725 = vpop.f32.mrb[0].mxu0
      %v726 = vadd.f32 %v593, %v725
      %v727 = vpop.f32.mrb[0].mxu0
      %v728 = vpop.f32.mrb[0].mxu0
      %v729 = vadd.f32 %v593, %v728
      %v730 = vpop.f32.mrb[0].mxu0
      %731 = vdwg.mxu0
      %v732 = vmax.f32 %v702, 0.0
      %v733 = vmax.f32 %v705, 0.0
      %v734 = vmax.f32 %v710, 0.0
      %v735 = vmax.f32 %v713, 0.0
      %v736 = vmax.f32 %v718, 0.0
      %v737 = vmax.f32 %v721, 0.0
      %v738 = vmax.f32 %v726, 0.0
      %v739 = vmax.f32 %v729, 0.0
      %v740 = vpack.c.bf16 %v733, %v732
      %v741 = vpack.c.bf16 %v735, %v734
      %v742 = vpack.c.bf16 %v737, %v736
      %v743 = vpack.c.bf16 %v739, %v738
      %v748 = vunpack.c.l.b16 %v740
      %v749 = vunpack.c.h.b16 %v740
      %v750 = vunpack.c.l.b16 %v741
      %v751 = vunpack.c.h.b16 %v741
      %v752 = vunpack.c.l.b16 %v742
      %v753 = vunpack.c.h.b16 %v742
      %v754 = vunpack.c.l.b16 %v743
      %v755 = vunpack.c.h.b16 %v743
      %v756 = vpack.c.b16 %v748, %v748
      %v757 = vpack.c.b16 %v749, %v749
      %v758 = vpack.c.b16 %v750, %v750
      %v759 = vpack.c.b16 %v751, %v751
      %v760 = vpack.c.b16 %v752, %v752
      %v761 = vpack.c.b16 %v753, %v753
      %v762 = vpack.c.b16 %v754, %v754
      %v763 = vpack.c.b16 %v755, %v755
      %772 = vst [vmem:[%s170] sm:$0xf] %v756
      %773 = vst [vmem:[%s170 + $0x4] sm:$0xf] %v757
      %774 = vst [vmem:[%s170 + $0x8] sm:$0xf] %v758
      %775 = vst [vmem:[%s170 + $0xc] sm:$0xf] %v759
      %776 = vst [vmem:[%s170 + $0x10] sm:$0xf] %v760
      %777 = vst [vmem:[%s170 + $0x14] sm:$0xf] %v761
      %778 = vst [vmem:[%s170 + $0x18] sm:$0xf] %v762
      %779 = vst [vmem:[%s170 + $0x1c] sm:$0xf] %v763
      %p780 = scmp.lt.s32.totalorder %s14, 1
      %s781 = scalar_select %p780, %s14, 1
      %s782 = smul.addr %s781, 8
      %s783 = smul.addr %s782, 4
      %s784 = scalar_lea.vmem %s3, %s783
      // Predicated region
      $region33: #{encoder_forward.3} parent=31 // pred_check
        %p785 = pneg %p100
      $region34: #{encoder_forward.3} parent=31 // pred_check_branch
        %787 = sbr.rel (%p785) target = $region36
      $region35: #{encoder_forward.3} parent=31 // pred_region
        _
      $region36: #{encoder_forward.3} parent=31 // pred_fallthru
        _
    $region32: #{encoder_forward.3} parent=5 // pred_fallthru
      _
    %p788 = scmp.le.s32.totalorder 2, %s9
    // Predicated region
    $region37: #{encoder_forward.3} parent=5 // pred_check
      %p789 = pneg %p788
    $region38: #{encoder_forward.3} parent=5 // pred_check_branch
      %791 = sbr.rel (%p789) target = $region40
    $region39: #{encoder_forward.3} parent=5 // pred_region
      %s792 = ssub.s32 %s9, 2
      // Predicated region
      $region41: #{encoder_forward.3} parent=39 // pred_check
        %p793 = pneg %p106
      $region42: #{encoder_forward.3} parent=39 // pred_check_branch
        %795 = sbr.rel (%p793) target = $region44
      $region43: #{encoder_forward.3} parent=39 // pred_region
        %p796 = scmp.lt.s32.totalorder %s15, 1
        %s797 = scalar_select %p796, %s15, 1
        %s798 = smul.addr %s797, 8
        %s799 = smul.addr %s798, 4
        %s800 = scalar_lea.vmem %s3, %s799
      $region44: #{encoder_forward.3} parent=39 // pred_fallthru
        _
    $region40: #{encoder_forward.3} parent=5 // pred_fallthru
      _
  $region6: #{encoder_forward.3} parent=0 // loop_footer
    %s13 = sadd.s32 1, %s9
  $region7: #{encoder_forward.3} parent=0 // loop_footer_branch
    %8 = sbr.rel target = $region3
  $region8: #{encoder_forward.3} parent=0 // loop_exit
    _

// kernel: encoder_forward.4
$region0: #{encoder_forward.4}
  #allocation0 [shape = 'u32[]', space=smem, size = 0x4, offset = 0x4, fixed_abs, tag = 'smem constant byte address 0x4 - core index']
  #allocation1 [shape = 'u32[144,128]{1,0:T(1,128)}', space=vmem, size = 0x12000, scoped, tag = 'internal scratch']
  #allocation2 [shape = 'bf16[1,4,4,1024]{3,2,1,0:T(4,128)(2,1)}', space=vmem, size = 0x8000, scoped, tag = 'scratch operand']
  %s0 = inlined_call_operand.vmem [shape: bf16[2,5,5,256], index: 0, kind: input, shape index: {}]
  %s1 = inlined_call_operand.vmem [shape: bf16[1024,128], index: 1, kind: input, shape index: {}]
  %s2 = inlined_call_operand.vmem [shape: f32[1,128], index: 2, kind: input, shape index: {}]
  %s3 = inlined_call_operand.vmem [shape: bf16[2,16,128], index: 3, kind: output, shape index: {}]
  %s4 = sld [smem:[#allocation0]]
  $region45: #{encoder_forward.4} parent=0
    _
  %s6 = ssub.s32 1, %s4
  %s7 = scalar_select 0, %s6, %s4
  loop: start=0, step=1, limit=4
  $region2: #{encoder_forward.4} parent=0 // loop_pre_header
    _
  $region3: #{encoder_forward.4} parent=0 // loop_header
    %s9 = sphi 0, %s13
    %p10 = scmp.ge.s32.totalorder %s9, 4
    %s19 = sphi 0, %s21
    %s22 = sphi 0, %s19
    %s23 = sphi 0, %s22
    %s39 = sphi 0, %s23
    %s43 = sphi 0, %s43
    %s45 = sphi 0, %s43
    %s46 = sphi 0, %s45
    %s60 = sphi 0, %s46
    %s64 = sphi 0, %s64
    %s66 = sphi 0, %s64
    %s67 = sphi 0, %s66
    %s81 = sphi 0, %s67
    %s87 = sphi 0, %s89
    %s90 = sphi 0, %s87
    %s91 = sphi 0, %s90
    %s107 = sphi 0, %s91
  $region4: #{encoder_forward.4} parent=0 // loop_header_branch
    %12 = sbr.rel (%p10) target = $region8
  $region5: #{encoder_forward.4} parent=0 // loop_body
    %s14 = ssub.s32 %s9, 1
    %s15 = ssub.s32 %s9, 2
    %s16 = sadd.s32 %s9, 1
    %s17 = ssub.s32 %s9, %s16
    %p18 = scmp.eq.s32.totalorder %s17, 0
    %s20 = sadd.s32 %s19, 1
    %s21 = scalar_select %p18, %s19, %s20
    %p24 = pneg %p18
    %p25 = scmp.eq.s32.totalorder %s9, 1
    %p26 = por %p24, %p25
    %p27 = scmp.ne.s32.totalorder %s19, %s22
    %p28 = scmp.eq.s32.totalorder %s9, 0
    %p29 = por %p27, %p28
    %p30 = scmp.ne.s32.totalorder %s19, %s22
    %p31 = scmp.eq.s32.totalorder %s14, 1
    %p32 = por %p30, %p31
    %p33 = scmp.ne.s32.totalorder %s22, %s23
    %p34 = scmp.eq.s32.totalorder %s14, 0
    %p35 = por %p33, %p34
    %p36 = scmp.ne.s32.totalorder %s22, %s23
    %p37 = scmp.eq.s32.totalorder %s15, 1
    %p38 = por %p36, %p37
    %p40 = scmp.ne.s32.totalorder %s23, %s39
    %p41 = scmp.eq.s32.totalorder %s15, 0
    %p42 = por %p40, %p41
    %s44 = sadd.s32 %s43, 1
    %p47 = scmp.eq.s32.totalorder %s9, 1
    %p48 = scmp.ne.s32.totalorder %s43, %s45
    %p49 = scmp.eq.s32.totalorder %s9, 0
    %p50 = por %p48, %p49
    %p51 = scmp.ne.s32.totalorder %s43, %s45
    %p52 = scmp.eq.s32.totalorder %s14, 1
    %p53 = por %p51, %p52
    %p54 = scmp.ne.s32.totalorder %s45, %s46
    %p55 = scmp.eq.s32.totalorder %s14, 0
    %p56 = por %p54, %p55
    %p57 = scmp.ne.s32.totalorder %s45, %s46
    %p58 = scmp.eq.s32.totalorder %s15, 1
    %p59 = por %p57, %p58
    %p61 = scmp.ne.s32.totalorder %s46, %s60
    %p62 = scmp.eq.s32.totalorder %s15, 0
    %p63 = por %p61, %p62
    %s65 = sadd.s32 %s64, 1
    %p68 = scmp.eq.s32.totalorder %s9, 1
    %p69 = scmp.ne.s32.totalorder %s64, %s66
    %p70 = scmp.eq.s32.totalorder %s9, 0
    %p71 = por %p69, %p70
    %p72 = scmp.ne.s32.totalorder %s64, %s66
    %p73 = scmp.eq.s32.totalorder %s14, 1
    %p74 = por %p72, %p73
    %p75 = scmp.ne.s32.totalorder %s66, %s67
    %p76 = scmp.eq.s32.totalorder %s14, 0
    %p77 = por %p75, %p76
    %p78 = scmp.ne.s32.totalorder %s66, %s67
    %p79 = scmp.eq.s32.totalorder %s15, 1
    %p80 = por %p78, %p79
    %p82 = scmp.ne.s32.totalorder %s67, %s81
    %p83 = scmp.eq.s32.totalorder %s15, 0
    %p84 = por %p82, %p83
    %s85 = ssub.s32 %s9, %s16
    %p86 = scmp.eq.s32.totalorder %s85, 0
    %s88 = sadd.s32 %s87, 1
    %s89 = scalar_select %p86, %s87, %s88
    %p92 = pneg %p86
    %p93 = scmp.eq.s32.totalorder %s9, 1
    %p94 = por %p92, %p93
    %p95 = scmp.ne.s32.totalorder %s87, %s90
    %p96 = scmp.eq.s32.totalorder %s9, 0
    %p97 = por %p95, %p96
    %p98 = scmp.ne.s32.totalorder %s87, %s90
    %p99 = scmp.eq.s32.totalorder %s14, 1
    %p100 = por %p98, %p99
    %p101 = scmp.ne.s32.totalorder %s90, %s91
    %p102 = scmp.eq.s32.totalorder %s14, 0
    %p103 = por %p101, %p102
    %p104 = scmp.ne.s32.totalorder %s90, %s91
    %p105 = scmp.eq.s32.totalorder %s15, 1
    %p106 = por %p104, %p105
    %p108 = scmp.ne.s32.totalorder %s91, %s107
    %p109 = scmp.eq.s32.totalorder %s15, 0
    %p110 = por %p108, %p109
    %p111 = scmp.le.s32.totalorder 1, %s9
    %p112 = scmp.lt.s32.totalorder %s9, 3
    %p113 = pnand %p111, %p112
    %p114 = pneg %p113
    // Predicated region
    $region9: #{encoder_forward.4} parent=5 // pred_check
      _
    $region10: #{encoder_forward.4} parent=5 // pred_check_branch
      %116 = sbr.rel (%p113) target = $region12
    $region11: #{encoder_forward.4} parent=5 // pred_region
      %s117 = ssub.s32 %s9, 1
      // Predicated region
      $region13: #{encoder_forward.4} parent=11 // pred_check
        %p118 = pneg %p56
      $region14: #{encoder_forward.4} parent=11 // pred_check_branch
        %120 = sbr.rel (%p118) target = $region16
      $region15: #{encoder_forward.4} parent=11 // pred_region
        _
      $region16: #{encoder_forward.4} parent=11 // pred_fallthru
        _
      // Predicated region
      $region17: #{encoder_forward.4} parent=11 // pred_check
        %p121 = pneg %p77
      $region18: #{encoder_forward.4} parent=11 // pred_check_branch
        %123 = sbr.rel (%p121) target = $region20
      $region19: #{encoder_forward.4} parent=11 // pred_region
        _
      $region20: #{encoder_forward.4} parent=11 // pred_fallthru
        _
    $region12: #{encoder_forward.4} parent=5 // pred_fallthru
      _
    %p124 = scmp.lt.s32.totalorder %s9, 2
    // Predicated region
    $region21: #{encoder_forward.4} parent=5 // pred_check
      %p125 = pneg %p124
    $region22: #{encoder_forward.4} parent=5 // pred_check_branch
      %127 = sbr.rel (%p125) target = $region24
    $region23: #{encoder_forward.4} parent=5 // pred_region
      // Predicated region
      $region25: #{encoder_forward.4} parent=23 // pred_check
        %p128 = pneg %p29
      $region26: #{encoder_forward.4} parent=23 // pred_check_branch
        %130 = sbr.rel (%p128) target = $region28
      $region27: #{encoder_forward.4} parent=23 // pred_region
        %p131 = scmp.lt.s32.totalorder %s9, 1
        %s132 = scalar_select %p131, %s9, 1
        %s133 = smul.addr %s132, 10
        %s134 = smul.addr %s133, 4
        %s135 = scalar_lea.vmem %s0, %s134
      $region28: #{encoder_forward.4} parent=23 // pred_fallthru
        _
    $region24: #{encoder_forward.4} parent=5 // pred_fallthru
      _
    %p136 = scmp.le.s32.totalorder 1, %s9
    %p137 = scmp.lt.s32.totalorder %s9, 3
    %p138 = pnand %p136, %p137
    %p139 = pneg %p138
    // Predicated region
    $region29: #{encoder_forward.4} parent=5 // pred_check
      _
    $region30: #{encoder_forward.4} parent=5 // pred_check_branch
      %141 = sbr.rel (%p138) target = $region32
    $region31: #{encoder_forward.4} parent=5 // pred_region
      %s142 = ssub.s32 %s9, 1
      %p143 = scmp.lt.s32.totalorder %s14, 1
      %s144 = scalar_select %p143, %s14, 1
      %s145 = smul.addr %s144, 10
      %s146 = smul.addr %s145, 4
      %s147 = scalar_lea.vmem %s0, %s146
      %p148 = pneg %p35
      %p149 = pneg %p32
      %p150 = pneg %p56
      %p151 = pneg %p53
      %p152 = pneg %p77
      %p153 = pneg %p74
      %p154 = pneg %p103
      %p155 = pneg %p100
      %p156 = scmp.lt.s32.totalorder %s14, 1
      %s157 = scalar_select %p156, %s14, 1
      %s158 = smul.addr %s157, 2
      %s159 = smul.addr %s158, 4
      %s160 = scalar_lea.vmem %s3, %s159
      %p161 = scmp.lt.s32.totalorder %s14, 1
      %s162 = scalar_select %p161, %s14, 1
      %s163 = smul.addr %s162, 10
      %s164 = smul.addr %s163, 4
      %s165 = scalar_lea.vmem %s0, %s164
      %p166 = scmp.lt.s32.totalorder %s14, 1
      %s167 = scalar_select %p166, %s14, 1
      %s168 = smul.addr %s167, 2
      %s169 = smul.addr %s168, 4
      %s170 = scalar_lea.vmem %s3, %s169
      %v172 = vld [vmem:[%s165] sm:$0x33]
      %v173 = vld [vmem:[%s165 + $0x8] sm:$0x33]
      %v174 = vld [vmem:[%s165 + $0x10] sm:$0x33]
      %v175 = vld [vmem:[%s165 + $0x18] sm:$0x33]
      %v181 = vunpack.c.l.s4 1983009808
      %v182 = vunpack.c.0.s8 %v181
      %v183 = vlaneseq
      %v184 = vshrl.u32 %v183, 7
      %v185 = vsub.s32 %v182, %v184
      %v186 = vrot.slane %v172, %v185
      %v188 = vunpack.c.l.s4 1983009808
      %v189 = vunpack.c.0.s8 %v188
      %v190 = vlaneseq
      %v191 = vshrl.u32 %v190, 7
      %v192 = vsub.s32 %v189, %v191
      %v193 = vrot.slane %v173, %v192
      %v195 = vunpack.c.l.s4 1983009808
      %v196 = vunpack.c.0.s8 %v195
      %v197 = vlaneseq
      %v198 = vshrl.u32 %v197, 7
      %v199 = vsub.s32 %v196, %v198
      %v200 = vrot.slane %v174, %v199
      %v202 = vunpack.c.l.s4 1983009808
      %v203 = vunpack.c.0.s8 %v202
      %v204 = vlaneseq
      %v205 = vshrl.u32 %v204, 7
      %v206 = vsub.s32 %v203, %v205
      %v207 = vrot.slane %v175, %v206
      %212 = vst [vmem:[#allocation2] sm:$0xf] %v186
      %213 = vst [vmem:[#allocation2 + $0x10] sm:$0xf] %v193
      %214 = vst [vmem:[#allocation2 + $0x20] sm:$0xf] %v200
      %215 = vst [vmem:[#allocation2 + $0x30] sm:$0xf] %v207
      %v216 = vld [vmem:[%s165] sm:$0x77]
      %v217 = vld [vmem:[%s165 + $0x8] sm:$0x77]
      %v218 = vld [vmem:[%s165 + $0x10] sm:$0x77]
      %v219 = vld [vmem:[%s165 + $0x18] sm:$0x77]
      %v225 = vunpack.c.l.s4 1983009808
      %v226 = vunpack.c.0.s8 %v225
      %v227 = vlaneseq
      %v228 = vshrl.u32 %v227, 7
      %v229 = vsub.s32 %v226, %v228
      %v230 = vrot.slane %v216, %v229
      %v231 = vcombine.high %v230, %v230
      %v233 = vunpack.c.l.s4 1983009808
      %v234 = vunpack.c.0.s8 %v233
      %v235 = vlaneseq
      %v236 = vshrl.u32 %v235, 7
      %v237 = vsub.s32 %v234, %v236
      %v238 = vrot.slane %v217, %v237
      %v239 = vcombine.high %v238, %v238
      %v241 = vunpack.c.l.s4 1983009808
      %v242 = vunpack.c.0.s8 %v241
      %v243 = vlaneseq
      %v244 = vshrl.u32 %v243, 7
      %v245 = vsub.s32 %v242, %v244
      %v246 = vrot.slane %v218, %v245
      %v247 = vcombine.high %v246, %v246
      %v249 = vunpack.c.l.s4 1983009808
      %v250 = vunpack.c.0.s8 %v249
      %v251 = vlaneseq
      %v252 = vshrl.u32 %v251, 7
      %v253 = vsub.s32 %v250, %v252
      %v254 = vrot.slane %v219, %v253
      %v255 = vcombine.high %v254, %v254
      %vm256 = vsmask.f32 1280
      %vm257 = vsmask.f32 3336
      %vm258 = vmor %vm256, %vm257
      %vm259 = vsmask.f32 5392
      %vm260 = vmor %vm258, %vm259
      %vm261 = vsmask.f32 7448
      %vm262 = vmor %vm260, %vm261
      %v264 = vshrl.u32 %v230, 16
      %v266 = vrot.slane %v264, 6
      %v267 = vshll.u32 %v230, 16
      %v269 = vrot.slane %v267, 7
      %v270 = vor.u32 %v266, %v269
      %v271 = vrot.slane %v270, 2
      %v273 = vshll.u32 %v231, 16
      %v275 = vrot.slane %v273, 7
      %v276 = vsel %vm262, %v271, %v275
      %v278 = vshrl.u32 %v238, 16
      %v280 = vrot.slane %v278, 6
      %v281 = vshll.u32 %v238, 16
      %v283 = vrot.slane %v281, 7
      %v284 = vor.u32 %v280, %v283
      %v285 = vrot.slane %v284, 2
      %v287 = vshll.u32 %v239, 16
      %v289 = vrot.slane %v287, 7
      %v290 = vsel %vm262, %v285, %v289
      %v292 = vshrl.u32 %v246, 16
      %v294 = vrot.slane %v292, 6
      %v295 = vshll.u32 %v246, 16
      %v297 = vrot.slane %v295, 7
      %v298 = vor.u32 %v294, %v297
      %v299 = vrot.slane %v298, 2
      %v301 = vshll.u32 %v247, 16
      %v303 = vrot.slane %v301, 7
      %v304 = vsel %vm262, %v299, %v303
      %v306 = vshrl.u32 %v254, 16
      %v308 = vrot.slane %v306, 6
      %v309 = vshll.u32 %v254, 16
      %v311 = vrot.slane %v309, 7
      %v312 = vor.u32 %v308, %v311
      %v313 = vrot.slane %v312, 2
      %v315 = vshll.u32 %v255, 16
      %v317 = vrot.slane %v315, 7
      %v318 = vsel %vm262, %v313, %v317
      %323 = vst [vmem:[#allocation2 + $0x4] sm:$0xf] %v276
      %324 = vst [vmem:[#allocation2 + $0x14] sm:$0xf] %v290
      %325 = vst [vmem:[#allocation2 + $0x24] sm:$0xf] %v304
      %326 = vst [vmem:[#allocation2 + $0x34] sm:$0xf] %v318
      %s327 = scalar_lea.vmem %s165, 8
      %v328 = vld [vmem:[%s327] sm:$0x33]
      %v329 = vld [vmem:[%s327 + $0x8] sm:$0x33]
      %v330 = vld [vmem:[%s327 + $0x10] sm:$0x33]
      %v331 = vld [vmem:[%s327 + $0x18] sm:$0x33]
      %v337 = vunpack.c.l.s4 1983009808
      %v338 = vunpack.c.0.s8 %v337
      %v339 = vlaneseq
      %v340 = vshrl.u32 %v339, 7
      %v341 = vsub.s32 %v338, %v340
      %v342 = vrot.slane %v328, %v341
      %v344 = vunpack.c.l.s4 1983009808
      %v345 = vunpack.c.0.s8 %v344
      %v346 = vlaneseq
      %v347 = vshrl.u32 %v346, 7
      %v348 = vsub.s32 %v345, %v347
      %v349 = vrot.slane %v329, %v348
      %v351 = vunpack.c.l.s4 1983009808
      %v352 = vunpack.c.0.s8 %v351
      %v353 = vlaneseq
      %v354 = vshrl.u32 %v353, 7
      %v355 = vsub.s32 %v352, %v354
      %v356 = vrot.slane %v330, %v355
      %v358 = vunpack.c.l.s4 1983009808
      %v359 = vunpack.c.0.s8 %v358
      %v360 = vlaneseq
      %v361 = vshrl.u32 %v360, 7
      %v362 = vsub.s32 %v359, %v361
      %v363 = vrot.slane %v331, %v362
      %368 = vst [vmem:[#allocation2 + $0x8] sm:$0xf] %v342
      %369 = vst [vmem:[#allocation2 + $0x18] sm:$0xf] %v349
      %370 = vst [vmem:[#allocation2 + $0x28] sm:$0xf] %v356
      %371 = vst [vmem:[#allocation2 + $0x38] sm:$0xf] %v363
      %v372 = vld [vmem:[%s327] sm:$0x77]
      %v373 = vld [vmem:[%s327 + $0x8] sm:$0x77]
      %v374 = vld [vmem:[%s327 + $0x10] sm:$0x77]
      %v375 = vld [vmem:[%s327 + $0x18] sm:$0x77]
      %v381 = vunpack.c.l.s4 1983009808
      %v382 = vunpack.c.0.s8 %v381
      %v383 = vlaneseq
      %v384 = vshrl.u32 %v383, 7
      %v385 = vsub.s32 %v382, %v384
      %v386 = vrot.slane %v372, %v385
      %v387 = vcombine.high %v386, %v386
      %v389 = vunpack.c.l.s4 1983009808
      %v390 = vunpack.c.0.s8 %v389
      %v391 = vlaneseq
      %v392 = vshrl.u32 %v391, 7
      %v393 = vsub.s32 %v390, %v392
      %v394 = vrot.slane %v373, %v393
      %v395 = vcombine.high %v394, %v394
      %v397 = vunpack.c.l.s4 1983009808
      %v398 = vunpack.c.0.s8 %v397
      %v399 = vlaneseq
      %v400 = vshrl.u32 %v399, 7
      %v401 = vsub.s32 %v398, %v400
      %v402 = vrot.slane %v374, %v401
      %v403 = vcombine.high %v402, %v402
      %v405 = vunpack.c.l.s4 1983009808
      %v406 = vunpack.c.0.s8 %v405
      %v407 = vlaneseq
      %v408 = vshrl.u32 %v407, 7
      %v409 = vsub.s32 %v406, %v408
      %v410 = vrot.slane %v375, %v409
      %v411 = vcombine.high %v410, %v410
      %v413 = vshrl.u32 %v386, 16
      %v415 = vrot.slane %v413, 6
      %v416 = vshll.u32 %v386, 16
      %v418 = vrot.slane %v416, 7
      %v419 = vor.u32 %v415, %v418
      %v420 = vrot.slane %v419, 2
      %v422 = vshll.u32 %v387, 16
      %v424 = vrot.slane %v422, 7
      %v425 = vsel %vm262, %v420, %v424
      %v427 = vshrl.u32 %v394, 16
      %v429 = vrot.slane %v427, 6
      %v430 = vshll.u32 %v394, 16
      %v432 = vrot.slane %v430, 7
      %v433 = vor.u32 %v429, %v432
      %v434 = vrot.slane %v433, 2
      %v436 = vshll.u32 %v395, 16
      %v438 = vrot.slane %v436, 7
      %v439 = vsel %vm262, %v434, %v438
      %v441 = vshrl.u32 %v402, 16
      %v443 = vrot.slane %v441, 6
      %v444 = vshll.u32 %v402, 16
      %v446 = vrot.slane %v444, 7
      %v447 = vor.u32 %v443, %v446
      %v448 = vrot.slane %v447, 2
      %v450 = vshll.u32 %v403, 16
      %v452 = vrot.slane %v450, 7
      %v453 = vsel %vm262, %v448, %v452
      %v455 = vshrl.u32 %v410, 16
      %v457 = vrot.slane %v455, 6
      %v458 = vshll.u32 %v410, 16
      %v460 = vrot.slane %v458, 7
      %v461 = vor.u32 %v457, %v460
      %v462 = vrot.slane %v461, 2
      %v464 = vshll.u32 %v411, 16
      %v466 = vrot.slane %v464, 7
      %v467 = vsel %vm262, %v462, %v466
      %472 = vst [vmem:[#allocation2 + $0xc] sm:$0xf] %v425
      %473 = vst [vmem:[#allocation2 + $0x1c] sm:$0xf] %v439
      %474 = vst [vmem:[#allocation2 + $0x2c] sm:$0xf] %v453
      %475 = vst [vmem:[#allocation2 + $0x3c] sm:$0xf] %v467
      %v476 = vld [vmem:[#allocation2] sm:$0xff]
      %v477 = vld [vmem:[#allocation2 + $0x8] sm:$0xff]
      %v478 = vld [vmem:[#allocation2 + $0x10] sm:$0xff]
      %v479 = vld [vmem:[#allocation2 + $0x18] sm:$0xff]
      %v480 = vld [vmem:[#allocation2 + $0x20] sm:$0xff]
      %v481 = vld [vmem:[#allocation2 + $0x28] sm:$0xff]
      %v482 = vld [vmem:[#allocation2 + $0x30] sm:$0xff]
      %v483 = vld [vmem:[#allocation2 + $0x38] sm:$0xff]
      %v484 = vld [vmem:[%s1] sm:$0xf]
      %v485 = vld [vmem:[%s1 + $0x4] sm:$0xf]
      %v486 = vld [vmem:[%s1 + $0x8] sm:$0xf]
      %v487 = vld [vmem:[%s1 + $0xc] sm:$0xf]
      %v488 = vld [vmem:[%s1 + $0x10] sm:$0xf]
      %v489 = vld [vmem:[%s1 + $0x14] sm:$0xf]
      %v490 = vld [vmem:[%s1 + $0x18] sm:$0xf]
      %v491 = vld [vmem:[%s1 + $0x1c] sm:$0xf]
      %v492 = vld [vmem:[%s1 + $0x20] sm:$0xf]
      %v493 = vld [vmem:[%s1 + $0x24] sm:$0xf]
      %v494 = vld [vmem:[%s1 + $0x28] sm:$0xf]
      %v495 = vld [vmem:[%s1 + $0x2c] sm:$0xf]
      %v496 = vld [vmem:[%s1 + $0x30] sm:$0xf]
      %v497 = vld [vmem:[%s1 + $0x34] sm:$0xf]
      %v498 = vld [vmem:[%s1 + $0x38] sm:$0xf]
      %v499 = vld [vmem:[%s1 + $0x3c] sm:$0xf]
      %v500 = vld [vmem:[%s1 + $0x40] sm:$0xf]
      %v501 = vld [vmem:[%s1 + $0x44] sm:$0xf]
      %v502 = vld [vmem:[%s1 + $0x48] sm:$0xf]
      %v503 = vld [vmem:[%s1 + $0x4c] sm:$0xf]
      %v504 = vld [vmem:[%s1 + $0x50] sm:$0xf]
      %v505 = vld [vmem:[%s1 + $0x54] sm:$0xf]
      %v506 = vld [vmem:[%s1 + $0x58] sm:$0xf]
      %v507 = vld [vmem:[%s1 + $0x5c] sm:$0xf]
      %v508 = vld [vmem:[%s1 + $0x60] sm:$0xf]
      %v509 = vld [vmem:[%s1 + $0x64] sm:$0xf]
      %v510 = vld [vmem:[%s1 + $0x68] sm:$0xf]
      %v511 = vld [vmem:[%s1 + $0x6c] sm:$0xf]
      %v512 = vld [vmem:[%s1 + $0x70] sm:$0xf]
      %v513 = vld [vmem:[%s1 + $0x74] sm:$0xf]
      %v514 = vld [vmem:[%s1 + $0x78] sm:$0xf]
      %v515 = vld [vmem:[%s1 + $0x7c] sm:$0xf]
      %v516 = vld [vmem:[%s1 + $0x80] sm:$0xf]
      %v517 = vld [vmem:[%s1 + $0x84] sm:$0xf]
      %v518 = vld [vmem:[%s1 + $0x88] sm:$0xf]
      %v519 = vld [vmem:[%s1 + $0x8c] sm:$0xf]
      %v520 = vld [vmem:[%s1 + $0x90] sm:$0xf]
      %v521 = vld [vmem:[%s1 + $0x94] sm:$0xf]
      %v522 = vld [vmem:[%s1 + $0x98] sm:$0xf]
      %v523 = vld [vmem:[%s1 + $0x9c] sm:$0xf]
      %v524 = vld [vmem:[%s1 + $0xa0] sm:$0xf]
      %v525 = vld [vmem:[%s1 + $0xa4] sm:$0xf]
      %v526 = vld [vmem:[%s1 + $0xa8] sm:$0xf]
      %v527 = vld [vmem:[%s1 + $0xac] sm:$0xf]
      %v528 = vld [vmem:[%s1 + $0xb0] sm:$0xf]
      %v529 = vld [vmem:[%s1 + $0xb4] sm:$0xf]
      %v530 = vld [vmem:[%s1 + $0xb8] sm:$0xf]
      %v531 = vld [vmem:[%s1 + $0xbc] sm:$0xf]
      %v532 = vld [vmem:[%s1 + $0xc0] sm:$0xf]
      %v533 = vld [vmem:[%s1 + $0xc4] sm:$0xf]
      %v534 = vld [vmem:[%s1 + $0xc8] sm:$0xf]
      %v535 = vld [vmem:[%s1 + $0xcc] sm:$0xf]
      %v536 = vld [vmem:[%s1 + $0xd0] sm:$0xf]
      %v537 = vld [vmem:[%s1 + $0xd4] sm:$0xf]
      %v538 = vld [vmem:[%s1 + $0xd8] sm:$0xf]
      %v539 = vld [vmem:[%s1 + $0xdc] sm:$0xf]
      %v540 = vld [vmem:[%s1 + $0xe0] sm:$0xf]
      %v541 = vld [vmem:[%s1 + $0xe4] sm:$0xf]
      %v542 = vld [vmem:[%s1 + $0xe8] sm:$0xf]
      %v543 = vld [vmem:[%s1 + $0xec] sm:$0xf]
      %v544 = vld [vmem:[%s1 + $0xf0] sm:$0xf]
      %v545 = vld [vmem:[%s1 + $0xf4] sm:$0xf]
      %v546 = vld [vmem:[%s1 + $0xf8] sm:$0xf]
      %v547 = vld [vmem:[%s1 + $0xfc] sm:$0xf]
      %v548 = vld [vmem:[%s1 + $0x100] sm:$0xf]
      %v549 = vld [vmem:[%s1 + $0x104] sm:$0xf]
      %v550 = vld [vmem:[%s1 + $0x108] sm:$0xf]
      %v551 = vld [vmem:[%s1 + $0x10c] sm:$0xf]
      %v552 = vld [vmem:[%s1 + $0x110] sm:$0xf]
      %v553 = vld [vmem:[%s1 + $0x114] sm:$0xf]
      %v554 = vld [vmem:[%s1 + $0x118] sm:$0xf]
      %v555 = vld [vmem:[%s1 + $0x11c] sm:$0xf]
      %v556 = vld [vmem:[%s1 + $0x120] sm:$0xf]
      %v557 = vld [vmem:[%s1 + $0x124] sm:$0xf]
      %v558 = vld [vmem:[%s1 + $0x128] sm:$0xf]
      %v559 = vld [vmem:[%s1 + $0x12c] sm:$0xf]
      %v560 = vld [vmem:[%s1 + $0x130] sm:$0xf]
      %v561 = vld [vmem:[%s1 + $0x134] sm:$0xf]
      %v562 = vld [vmem:[%s1 + $0x138] sm:$0xf]
      %v563 = vld [vmem:[%s1 + $0x13c] sm:$0xf]
      %v564 = vld [vmem:[%s1 + $0x140] sm:$0xf]
      %v565 = vld [vmem:[%s1 + $0x144] sm:$0xf]
      %v566 = vld [vmem:[%s1 + $0x148] sm:$0xf]
      %v567 = vld [vmem:[%s1 + $0x14c] sm:$0xf]
      %v568 = vld [vmem:[%s1 + $0x150] sm:$0xf]
      %v569 = vld [vmem:[%s1 + $0x154] sm:$0xf]
      %v570 = vld [vmem:[%s1 + $0x158] sm:$0xf]
      %v571 = vld [vmem:[%s1 + $0x15c] sm:$0xf]
      %v572 = vld [vmem:[%s1 + $0x160] sm:$0xf]
      %v573 = vld [vmem:[%s1 + $0x164] sm:$0xf]
      %v574 = vld [vmem:[%s1 + $0x168] sm:$0xf]
      %v575 = vld [vmem:[%s1 + $0x16c] sm:$0xf]
      %v576 = vld [vmem:[%s1 + $0x170] sm:$0xf]
      %v577 = vld [vmem:[%s1 + $0x174] sm:$0xf]
      %v578 = vld [vmem:[%s1 + $0x178] sm:$0xf]
      %v579 = vld [vmem:[%s1 + $0x17c] sm:$0xf]
      %v580 = vld [vmem:[%s1 + $0x180] sm:$0xf]
      %v581 = vld [vmem:[%s1 + $0x184] sm:$0xf]
      %v582 = vld [vmem:[%s1 + $0x188] sm:$0xf]
      %v583 = vld [vmem:[%s1 + $0x18c] sm:$0xf]
      %v584 = vld [vmem:[%s1 + $0x190] sm:$0xf]
      %v585 = vld [vmem:[%s1 + $0x194] sm:$0xf]
      %v586 = vld [vmem:[%s1 + $0x198] sm:$0xf]
      %v587 = vld [vmem:[%s1 + $0x19c] sm:$0xf]
      %v588 = vld [vmem:[%s1 + $0x1a0] sm:$0xf]
      %v589 = vld [vmem:[%s1 + $0x1a4] sm:$0xf]
      %v590 = vld [vmem:[%s1 + $0x1a8] sm:$0xf]
      %v591 = vld [vmem:[%s1 + $0x1ac] sm:$0xf]
      %v592 = vld [vmem:[%s1 + $0x1b0] sm:$0xf]
      %v593 = vld [vmem:[%s1 + $0x1b4] sm:$0xf]
      %v594 = vld [vmem:[%s1 + $0x1b8] sm:$0xf]
      %v595 = vld [vmem:[%s1 + $0x1bc] sm:$0xf]
      %v596 = vld [vmem:[%s1 + $0x1c0] sm:$0xf]
      %v597 = vld [vmem:[%s1 + $0x1c4] sm:$0xf]
      %v598 = vld [vmem:[%s1 + $0x1c8] sm:$0xf]
      %v599 = vld [vmem:[%s1 + $0x1cc] sm:$0xf]
      %v600 = vld [vmem:[%s1 + $0x1d0] sm:$0xf]
      %v601 = vld [vmem:[%s1 + $0x1d4] sm:$0xf]
      %v602 = vld [vmem:[%s1 + $0x1d8] sm:$0xf]
      %v603 = vld [vmem:[%s1 + $0x1dc] sm:$0xf]
      %v604 = vld [vmem:[%s1 + $0x1e0] sm:$0xf]
      %v605 = vld [vmem:[%s1 + $0x1e4] sm:$0xf]
      %v606 = vld [vmem:[%s1 + $0x1e8] sm:$0xf]
      %v607 = vld [vmem:[%s1 + $0x1ec] sm:$0xf]
      %v608 = vld [vmem:[%s1 + $0x1f0] sm:$0xf]
      %v609 = vld [vmem:[%s1 + $0x1f4] sm:$0xf]
      %v610 = vld [vmem:[%s1 + $0x1f8] sm:$0xf]
      %v611 = vld [vmem:[%s1 + $0x1fc] sm:$0xf]
      %v612 = vld [vmem:[%s2] sm:$0x1]
      %v614 = vlaneseq
      %v615 = vshrl.u32 %v614, 7
      %v616 = vsub.s32 0, %v615
      %v617 = vrot.slane %v612, %v616
      %v627 = vcombine.low %v476, %v478
      %v628 = vcombine.high %v476, %v478
      %v629 = vcombine.low %v480, %v482
      %v630 = vcombine.high %v480, %v482
      %v632 = vunpack.c.l.s4 1983009808
      %v633 = vunpack.c.0.s8 %v632
      %v634 = vlaneseq
      %v635 = vshrl.u32 %v634, 7
      %v636 = vsub.s32 %v633, %v635
      %v637 = vrot.slane %v627, %v636
      %v639 = vunpack.c.l.s4 1983009808
      %v640 = vunpack.c.0.s8 %v639
      %v641 = vlaneseq
      %v642 = vshrl.u32 %v641, 7
      %v643 = vsub.s32 %v640, %v642
      %v644 = vrot.slane %v628, %v643
      %v646 = vunpack.c.l.s4 1983009808
      %v647 = vunpack.c.0.s8 %v646
      %v648 = vlaneseq
      %v649 = vshrl.u32 %v648, 7
      %v650 = vsub.s32 %v647, %v649
      %v651 = vrot.slane %v629, %v650
      %v653 = vunpack.c.l.s4 1983009808
      %v654 = vunpack.c.0.s8 %v653
      %v655 = vlaneseq
      %v656 = vshrl.u32 %v655, 7
      %v657 = vsub.s32 %v654, %v656
      %v658 = vrot.slane %v630, %v657
      %v659 = vcombine.low %v637, %v651
      %v660 = vcombine.high %v637, %v651
      %v661 = vcombine.low %v644, %v658
      %v662 = vcombine.high %v644, %v658
      %v663 = vcombine.low %v477, %v479
      %v664 = vcombine.high %v477, %v479
      %v665 = vcombine.low %v481, %v483
      %v666 = vcombine.high %v481, %v483
      %v668 = vunpack.c.l.s4 1983009808
      %v669 = vunpack.c.0.s8 %v668
      %v670 = vlaneseq
      %v671 = vshrl.u32 %v670, 7
      %v672 = vsub.s32 %v669, %v671
      %v673 = vrot.slane %v663, %v672
      %v675 = vunpack.c.l.s4 1983009808
      %v676 = vunpack.c.0.s8 %v675
      %v677 = vlaneseq
      %v678 = vshrl.u32 %v677, 7
      %v679 = vsub.s32 %v676, %v678
      %v680 = vrot.slane %v664, %v679
      %v682 = vunpack.c.l.s4 1983009808
      %v683 = vunpack.c.0.s8 %v682
      %v684 = vlaneseq
      %v685 = vshrl.u32 %v684, 7
      %v686 = vsub.s32 %v683, %v685
      %v687 = vrot.slane %v665, %v686
      %v689 = vunpack.c.l.s4 1983009808
      %v690 = vunpack.c.0.s8 %v689
      %v691 = vlaneseq
      %v692 = vshrl.u32 %v691, 7
      %v693 = vsub.s32 %v690, %v692
      %v694 = vrot.slane %v666, %v693
      %v695 = vcombine.low %v673, %v687
      %v696 = vcombine.high %v673, %v687
      %v697 = vcombine.low %v680, %v694
      %v698 = vcombine.high %v680, %v694
      %v835 = vunpack.c.l.b16 %v484
      %v836 = vunpack.c.l.b16 %v485
      %v837 = vunpack.c.l.b16 %v486
      %v838 = vunpack.c.l.b16 %v487
      %v839 = vunpack.c.l.b16 %v488
      %v840 = vunpack.c.l.b16 %v489
      %v841 = vunpack.c.l.b16 %v490
      %v842 = vunpack.c.l.b16 %v491
      %v843 = vunpack.c.l.b16 %v492
      %v844 = vunpack.c.l.b16 %v493
      %v845 = vunpack.c.l.b16 %v494
      %v846 = vunpack.c.l.b16 %v495
      %v847 = vunpack.c.l.b16 %v496
      %v848 = vunpack.c.l.b16 %v497
      %v849 = vunpack.c.l.b16 %v498
      %v850 = vunpack.c.l.b16 %v499
      %v851 = vunpack.c.l.b16 %v500
      %v852 = vunpack.c.l.b16 %v501
      %v853 = vunpack.c.l.b16 %v502
      %v854 = vunpack.c.l.b16 %v503
      %v855 = vunpack.c.l.b16 %v504
      %v856 = vunpack.c.l.b16 %v505
      %v857 = vunpack.c.l.b16 %v506
      %v858 = vunpack.c.l.b16 %v507
      %v859 = vunpack.c.l.b16 %v508
      %v860 = vunpack.c.l.b16 %v509
      %v861 = vunpack.c.l.b16 %v510
      %v862 = vunpack.c.l.b16 %v511
      %v863 = vunpack.c.l.b16 %v512
      %v864 = vunpack.c.l.b16 %v513
      %v865 = vunpack.c.l.b16 %v514
      %v866 = vunpack.c.l.b16 %v515
      %v867 = vunpack.c.l.b16 %v516
      %v868 = vunpack.c.l.b16 %v517
      %v869 = vunpack.c.l.b16 %v518
      %v870 = vunpack.c.l.b16 %v519
      %v871 = vunpack.c.l.b16 %v520
      %v872 = vunpack.c.l.b16 %v521
      %v873 = vunpack.c.l.b16 %v522
      %v874 = vunpack.c.l.b16 %v523
      %v875 = vunpack.c.l.b16 %v524
      %v876 = vunpack.c.l.b16 %v525
      %v877 = vunpack.c.l.b16 %v526
      %v878 = vunpack.c.l.b16 %v527
      %v879 = vunpack.c.l.b16 %v528
      %v880 = vunpack.c.l.b16 %v529
      %v881 = vunpack.c.l.b16 %v530
      %v882 = vunpack.c.l.b16 %v531
      %v883 = vunpack.c.l.b16 %v532
      %v884 = vunpack.c.l.b16 %v533
      %v885 = vunpack.c.l.b16 %v534
      %v886 = vunpack.c.l.b16 %v535
      %v887 = vunpack.c.l.b16 %v536
      %v888 = vunpack.c.l.b16 %v537
      %v889 = vunpack.c.l.b16 %v538
      %v890 = vunpack.c.l.b16 %v539
      %v891 = vunpack.c.l.b16 %v540
      %v892 = vunpack.c.l.b16 %v541
      %v893 = vunpack.c.l.b16 %v542
      %v894 = vunpack.c.l.b16 %v543
      %v895 = vunpack.c.l.b16 %v544
      %v896 = vunpack.c.l.b16 %v545
      %v897 = vunpack.c.l.b16 %v546
      %v898 = vunpack.c.l.b16 %v547
      %v899 = vunpack.c.l.b16 %v548
      %v900 = vunpack.c.l.b16 %v549
      %v901 = vunpack.c.l.b16 %v550
      %v902 = vunpack.c.l.b16 %v551
      %v903 = vunpack.c.l.b16 %v552
      %v904 = vunpack.c.l.b16 %v553
      %v905 = vunpack.c.l.b16 %v554
      %v906 = vunpack.c.l.b16 %v555
      %v907 = vunpack.c.l.b16 %v556
      %v908 = vunpack.c.l.b16 %v557
      %v909 = vunpack.c.l.b16 %v558
      %v910 = vunpack.c.l.b16 %v559
      %v911 = vunpack.c.l.b16 %v560
      %v912 = vunpack.c.l.b16 %v561
      %v913 = vunpack.c.l.b16 %v562
      %v914 = vunpack.c.l.b16 %v563
      %v915 = vunpack.c.l.b16 %v564
      %v916 = vunpack.c.l.b16 %v565
      %v917 = vunpack.c.l.b16 %v566
      %v918 = vunpack.c.l.b16 %v567
      %v919 = vunpack.c.l.b16 %v568
      %v920 = vunpack.c.l.b16 %v569
      %v921 = vunpack.c.l.b16 %v570
      %v922 = vunpack.c.l.b16 %v571
      %v923 = vunpack.c.l.b16 %v572
      %v924 = vunpack.c.l.b16 %v573
      %v925 = vunpack.c.l.b16 %v574
      %v926 = vunpack.c.l.b16 %v575
      %v927 = vunpack.c.l.b16 %v576
      %v928 = vunpack.c.l.b16 %v577
      %v929 = vunpack.c.l.b16 %v578
      %v930 = vunpack.c.l.b16 %v579
      %v931 = vunpack.c.l.b16 %v580
      %v932 = vunpack.c.l.b16 %v581
      %v933 = vunpack.c.l.b16 %v582
      %v934 = vunpack.c.l.b16 %v583
      %v935 = vunpack.c.l.b16 %v584
      %v936 = vunpack.c.l.b16 %v585
      %v937 = vunpack.c.l.b16 %v586
      %v938 = vunpack.c.l.b16 %v587
      %v939 = vunpack.c.l.b16 %v588
      %v940 = vunpack.c.l.b16 %v589
      %v941 = vunpack.c.l.b16 %v590
      %v942 = vunpack.c.l.b16 %v591
      %v943 = vunpack.c.l.b16 %v592
      %v944 = vunpack.c.l.b16 %v593
      %v945 = vunpack.c.l.b16 %v594
      %v946 = vunpack.c.l.b16 %v595
      %v947 = vunpack.c.l.b16 %v596
      %v948 = vunpack.c.l.b16 %v597
      %v949 = vunpack.c.l.b16 %v598
      %v950 = vunpack.c.l.b16 %v599
      %v951 = vunpack.c.l.b16 %v600
      %v952 = vunpack.c.l.b16 %v601
      %v953 = vunpack.c.l.b16 %v602
      %v954 = vunpack.c.l.b16 %v603
      %v955 = vunpack.c.l.b16 %v604
      %v956 = vunpack.c.l.b16 %v605
      %v957 = vunpack.c.l.b16 %v606
      %v958 = vunpack.c.l.b16 %v607
      %v959 = vunpack.c.l.b16 %v608
      %v960 = vunpack.c.l.b16 %v609
      %v961 = vunpack.c.l.b16 %v610
      %v962 = vunpack.c.l.b16 %v611
      %v963 = vpack.c.b16 %v836, %v835
      %v964 = vpack.c.b16 %v838, %v837
      %v965 = vpack.c.b16 %v840, %v839
      %v966 = vpack.c.b16 %v842, %v841
      %v967 = vpack.c.b16 %v844, %v843
      %v968 = vpack.c.b16 %v846, %v845
      %v969 = vpack.c.b16 %v848, %v847
      %v970 = vpack.c.b16 %v850, %v849
      %v971 = vpack.c.b16 %v852, %v851
      %v972 = vpack.c.b16 %v854, %v853
      %v973 = vpack.c.b16 %v856, %v855
      %v974 = vpack.c.b16 %v858, %v857
      %v975 = vpack.c.b16 %v860, %v859
      %v976 = vpack.c.b16 %v862, %v861
      %v977 = vpack.c.b16 %v864, %v863
      %v978 = vpack.c.b16 %v866, %v865
      %v979 = vpack.c.b16 %v868, %v867
      %v980 = vpack.c.b16 %v870, %v869
      %v981 = vpack.c.b16 %v872, %v871
      %v982 = vpack.c.b16 %v874, %v873
      %v983 = vpack.c.b16 %v876, %v875
      %v984 = vpack.c.b16 %v878, %v877
      %v985 = vpack.c.b16 %v880, %v879
      %v986 = vpack.c.b16 %v882, %v881
      %v987 = vpack.c.b16 %v884, %v883
      %v988 = vpack.c.b16 %v886, %v885
      %v989 = vpack.c.b16 %v888, %v887
      %v990 = vpack.c.b16 %v890, %v889
      %v991 = vpack.c.b16 %v892, %v891
      %v992 = vpack.c.b16 %v894, %v893
      %v993 = vpack.c.b16 %v896, %v895
      %v994 = vpack.c.b16 %v898, %v897
      %v995 = vpack.c.b16 %v900, %v899
      %v996 = vpack.c.b16 %v902, %v901
      %v997 = vpack.c.b16 %v904, %v903
      %v998 = vpack.c.b16 %v906, %v905
      %v999 = vpack.c.b16 %v908, %v907
      %v1000 = vpack.c.b16 %v910, %v909
      %v1001 = vpack.c.b16 %v912, %v911
      %v1002 = vpack.c.b16 %v914, %v913
      %v1003 = vpack.c.b16 %v916, %v915
      %v1004 = vpack.c.b16 %v918, %v917
      %v1005 = vpack.c.b16 %v920, %v919
      %v1006 = vpack.c.b16 %v922, %v921
      %v1007 = vpack.c.b16 %v924, %v923
      %v1008 = vpack.c.b16 %v926, %v925
      %v1009 = vpack.c.b16 %v928, %v927
      %v1010 = vpack.c.b16 %v930, %v929
      %v1011 = vpack.c.b16 %v932, %v931
      %v1012 = vpack.c.b16 %v934, %v933
      %v1013 = vpack.c.b16 %v936, %v935
      %v1014 = vpack.c.b16 %v938, %v937
      %v1015 = vpack.c.b16 %v940, %v939
      %v1016 = vpack.c.b16 %v942, %v941
      %v1017 = vpack.c.b16 %v944, %v943
      %v1018 = vpack.c.b16 %v946, %v945
      %v1019 = vpack.c.b16 %v948, %v947
      %v1020 = vpack.c.b16 %v950, %v949
      %v1021 = vpack.c.b16 %v952, %v951
      %v1022 = vpack.c.b16 %v954, %v953
      %v1023 = vpack.c.b16 %v956, %v955
      %v1024 = vpack.c.b16 %v958, %v957
      %v1025 = vpack.c.b16 %v960, %v959
      %v1026 = vpack.c.b16 %v962, %v961
      %1091 = vmatprep.subr.bf16.mxu0 0
      %1092 = vmatpush1.bf16.msra.mxu0 %v963
      %1093 = vmatprep.subr.bf16.mxu0 0
      %1094 = vmatpush1.bf16.msra.mxu0 %v964
      %1095 = vmatprep.subr.bf16.mxu0 0
      %1096 = vmatpush1.bf16.msra.mxu0 %v965
      %1097 = vmatprep.subr.bf16.mxu0 0
      %1098 = vmatpush1.bf16.msra.mxu0 %v966
      %1099 = vmatprep.subr.bf16.mxu0 0
      %1100 = vmatpush1.bf16.msra.mxu0 %v967
      %1101 = vmatprep.subr.bf16.mxu0 0
      %1102 = vmatpush1.bf16.msra.mxu0 %v968
      %1103 = vmatprep.subr.bf16.mxu0 0
      %1104 = vmatpush1.bf16.msra.mxu0 %v969
      %1105 = vmatprep.subr.bf16.mxu0 0
      %1106 = vmatpush1.bf16.msra.mxu0 %v970
      %1107 = vmatprep.subr.bf16.mxu0 0
      %1108 = vmatpush1.bf16.msra.mxu0 %v971
      %1109 = vmatprep.subr.bf16.mxu0 0
      %1110 = vmatpush1.bf16.msra.mxu0 %v972
      %1111 = vmatprep.subr.bf16.mxu0 0
      %1112 = vmatpush1.bf16.msra.mxu0 %v973
      %1113 = vmatprep.subr.bf16.mxu0 0
      %1114 = vmatpush1.bf16.msra.mxu0 %v974
      %1115 = vmatprep.subr.bf16.mxu0 0
      %1116 = vmatpush1.bf16.msra.mxu0 %v975
      %1117 = vmatprep.subr.bf16.mxu0 0
      %1118 = vmatpush1.bf16.msra.mxu0 %v976
      %1119 = vmatprep.subr.bf16.mxu0 0
      %1120 = vmatpush1.bf16.msra.mxu0 %v977
      %1121 = vmatprep.subr.bf16.mxu0 0
      %1122 = vmatpush1.bf16.msra.mxu0 %v978
      %1123 = vmatprep.mubr.bf16.mxu0 %v660
      %1124 = vmatmul.mubr.bf16.gmra.mrb[0].mxu0 %v659
      %v1125 = vpop.f32.mrb[0].mxu0
      %v1126 = vadd.f32 %v617, %v1125
      %v1127 = vpop.f32.mrb[0].mxu0
      %v1128 = vpop.f32.mrb[0].mxu0
      %v1129 = vadd.f32 %v617, %v1128
      %v1130 = vpop.f32.mrb[0].mxu0
      %1131 = vdwg.mxu0
      %1132 = vmatprep.subr.bf16.mxu0 0
      %1133 = vmatpush1.bf16.msra.mxu0 %v979
      %1134 = vmatprep.subr.bf16.mxu0 0
      %1135 = vmatpush1.bf16.msra.mxu0 %v980
      %1136 = vmatprep.subr.bf16.mxu0 0
      %1137 = vmatpush1.bf16.msra.mxu0 %v981
      %1138 = vmatprep.subr.bf16.mxu0 0
      %1139 = vmatpush1.bf16.msra.mxu0 %v982
      %1140 = vmatprep.subr.bf16.mxu0 0
      %1141 = vmatpush1.bf16.msra.mxu0 %v983
      %1142 = vmatprep.subr.bf16.mxu0 0
      %1143 = vmatpush1.bf16.msra.mxu0 %v984
      %1144 = vmatprep.subr.bf16.mxu0 0
      %1145 = vmatpush1.bf16.msra.mxu0 %v985
      %1146 = vmatprep.subr.bf16.mxu0 0
      %1147 = vmatpush1.bf16.msra.mxu0 %v986
      %1148 = vmatprep.subr.bf16.mxu0 0
      %1149 = vmatpush1.bf16.msra.mxu0 %v987
      %1150 = vmatprep.subr.bf16.mxu0 0
      %1151 = vmatpush1.bf16.msra.mxu0 %v988
      %1152 = vmatprep.subr.bf16.mxu0 0
      %1153 = vmatpush1.bf16.msra.mxu0 %v989
      %1154 = vmatprep.subr.bf16.mxu0 0
      %1155 = vmatpush1.bf16.msra.mxu0 %v990
      %1156 = vmatprep.subr.bf16.mxu0 0
      %1157 = vmatpush1.bf16.msra.mxu0 %v991
      %1158 = vmatprep.subr.bf16.mxu0 0
      %1159 = vmatpush1.bf16.msra.mxu0 %v992
      %1160 = vmatprep.subr.bf16.mxu0 0
      %1161 = vmatpush1.bf16.msra.mxu0 %v993
      %1162 = vmatprep.subr.bf16.mxu0 0
      %1163 = vmatpush1.bf16.msra.mxu0 %v994
      %1164 = vmatprep.mubr.bf16.mxu0 %v662
      %1165 = vmatmul.mubr.bf16.gmra.mrb[0].mxu0 %v661
      %v1166 = vpop.f32.mrb[0].mxu0
      %v1167 = vadd.f32 %v1126, %v1166
      %v1168 = vpop.f32.mrb[0].mxu0
      %v1169 = vpop.f32.mrb[0].mxu0
      %v1170 = vadd.f32 %v1129, %v1169
      %v1171 = vpop.f32.mrb[0].mxu0
      %1172 = vdwg.mxu0
      %1173 = vmatprep.subr.bf16.mxu0 0
      %1174 = vmatpush1.bf16.msra.mxu0 %v995
      %1175 = vmatprep.subr.bf16.mxu0 0
      %1176 = vmatpush1.bf16.msra.mxu0 %v996
      %1177 = vmatprep.subr.bf16.mxu0 0
      %1178 = vmatpush1.bf16.msra.mxu0 %v997
      %1179 = vmatprep.subr.bf16.mxu0 0
      %1180 = vmatpush1.bf16.msra.mxu0 %v998
      %1181 = vmatprep.subr.bf16.mxu0 0
      %1182 = vmatpush1.bf16.msra.mxu0 %v999
      %1183 = vmatprep.subr.bf16.mxu0 0
      %1184 = vmatpush1.bf16.msra.mxu0 %v1000
      %1185 = vmatprep.subr.bf16.mxu0 0
      %1186 = vmatpush1.bf16.msra.mxu0 %v1001
      %1187 = vmatprep.subr.bf16.mxu0 0
      %1188 = vmatpush1.bf16.msra.mxu0 %v1002
      %1189 = vmatprep.subr.bf16.mxu0 0
      %1190 = vmatpush1.bf16.msra.mxu0 %v1003
      %1191 = vmatprep.subr.bf16.mxu0 0
      %1192 = vmatpush1.bf16.msra.mxu0 %v1004
      %1193 = vmatprep.subr.bf16.mxu0 0
      %1194 = vmatpush1.bf16.msra.mxu0 %v1005
      %1195 = vmatprep.subr.bf16.mxu0 0
      %1196 = vmatpush1.bf16.msra.mxu0 %v1006
      %1197 = vmatprep.subr.bf16.mxu0 0
      %1198 = vmatpush1.bf16.msra.mxu0 %v1007
      %1199 = vmatprep.subr.bf16.mxu0 0
      %1200 = vmatpush1.bf16.msra.mxu0 %v1008
      %1201 = vmatprep.subr.bf16.mxu0 0
      %1202 = vmatpush1.bf16.msra.mxu0 %v1009
      %1203 = vmatprep.subr.bf16.mxu0 0
      %1204 = vmatpush1.bf16.msra.mxu0 %v1010
      %1205 = vmatprep.mubr.bf16.mxu0 %v696
      %1206 = vmatmul.mubr.bf16.gmra.mrb[0].mxu0 %v695
      %v1207 = vpop.f32.mrb[0].mxu0
      %v1208 = vadd.f32 %v1167, %v1207
      %v1209 = vpop.f32.mrb[0].mxu0
      %v1210 = vpop.f32.mrb[0].mxu0
      %v1211 = vadd.f32 %v1170, %v1210
      %v1212 = vpop.f32.mrb[0].mxu0
      %1213 = vdwg.mxu0
      %1214 = vmatprep.subr.bf16.mxu0 0
      %1215 = vmatpush1.bf16.msra.mxu0 %v1011
      %1216 = vmatprep.subr.bf16.mxu0 0
      %1217 = vmatpush1.bf16.msra.mxu0 %v1012
      %1218 = vmatprep.subr.bf16.mxu0 0
      %1219 = vmatpush1.bf16.msra.mxu0 %v1013
      %1220 = vmatprep.subr.bf16.mxu0 0
      %1221 = vmatpush1.bf16.msra.mxu0 %v1014
      %1222 = vmatprep.subr.bf16.mxu0 0
      %1223 = vmatpush1.bf16.msra.mxu0 %v1015
      %1224 = vmatprep.subr.bf16.mxu0 0
      %1225 = vmatpush1.bf16.msra.mxu0 %v1016
      %1226 = vmatprep.subr.bf16.mxu0 0
      %1227 = vmatpush1.bf16.msra.mxu0 %v1017
      %1228 = vmatprep.subr.bf16.mxu0 0
      %1229 = vmatpush1.bf16.msra.mxu0 %v1018
      %1230 = vmatprep.subr.bf16.mxu0 0
      %1231 = vmatpush1.bf16.msra.mxu0 %v1019
      %1232 = vmatprep.subr.bf16.mxu0 0
      %1233 = vmatpush1.bf16.msra.mxu0 %v1020
      %1234 = vmatprep.subr.bf16.mxu0 0
      %1235 = vmatpush1.bf16.msra.mxu0 %v1021
      %1236 = vmatprep.subr.bf16.mxu0 0
      %1237 = vmatpush1.bf16.msra.mxu0 %v1022
      %1238 = vmatprep.subr.bf16.mxu0 0
      %1239 = vmatpush1.bf16.msra.mxu0 %v1023
      %1240 = vmatprep.subr.bf16.mxu0 0
      %1241 = vmatpush1.bf16.msra.mxu0 %v1024
      %1242 = vmatprep.subr.bf16.mxu0 0
      %1243 = vmatpush1.bf16.msra.mxu0 %v1025
      %1244 = vmatprep.subr.bf16.mxu0 0
      %1245 = vmatpush1.bf16.msra.mxu0 %v1026
      %1246 = vmatprep.mubr.bf16.mxu0 %v698
      %1247 = vmatmul.mubr.bf16.gmra.mrb[0].mxu0 %v697
      %v1248 = vpop.f32.mrb[0].mxu0
      %v1249 = vadd.f32 %v1208, %v1248
      %v1250 = vpop.f32.mrb[0].mxu0
      %v1251 = vpop.f32.mrb[0].mxu0
      %v1252 = vadd.f32 %v1211, %v1251
      %v1253 = vpop.f32.mrb[0].mxu0
      %1254 = vdwg.mxu0
      %v1255 = vmax.f32 %v1249, 0.0
      %v1256 = vmax.f32 %v1252, 0.0
      %v1257 = vpack.c.bf16 %v1256, %v1255
      %v1259 = vunpack.c.l.b16 %v1257
      %v1260 = vunpack.c.h.b16 %v1257
      %v1261 = vpack.c.b16 %v1259, %v1259
      %v1262 = vpack.c.b16 %v1260, %v1260
      %1265 = vst [vmem:[%s170] sm:$0xf] %v1261
      %1266 = vst [vmem:[%s170 + $0x4] sm:$0xf] %v1262
      %p1267 = scmp.lt.s32.totalorder %s14, 1
      %s1268 = scalar_select %p1267, %s14, 1
      %s1269 = smul.addr %s1268, 2
      %s1270 = smul.addr %s1269, 4
      %s1271 = scalar_lea.vmem %s3, %s1270
      // Predicated region
      $region33: #{encoder_forward.4} parent=31 // pred_check
        %p1272 = pneg %p100
      $region34: #{encoder_forward.4} parent=31 // pred_check_branch
        %1274 = sbr.rel (%p1272) target = $region36
      $region35: #{encoder_forward.4} parent=31 // pred_region
        _
      $region36: #{encoder_forward.4} parent=31 // pred_fallthru
        _
    $region32: #{encoder_forward.4} parent=5 // pred_fallthru
      _
    %p1275 = scmp.le.s32.totalorder 2, %s9
    // Predicated region
    $region37: #{encoder_forward.4} parent=5 // pred_check
      %p1276 = pneg %p1275
    $region38: #{encoder_forward.4} parent=5 // pred_check_branch
      %1278 = sbr.rel (%p1276) target = $region40
    $region39: #{encoder_forward.4} parent=5 // pred_region
      %s1279 = ssub.s32 %s9, 2
      // Predicated region
      $region41: #{encoder_forward.4} parent=39 // pred_check
        %p1280 = pneg %p106
      $region42: #{encoder_forward.4} parent=39 // pred_check_branch
        %1282 = sbr.rel (%p1280) target = $region44
      $region43: #{encoder_forward.4} parent=39 // pred_region
        %p1283 = scmp.lt.s32.totalorder %s15, 1
        %s1284 = scalar_select %p1283, %s15, 1
        %s1285 = smul.addr %s1284, 2
        %s1286 = smul.addr %s1285, 4
        %s1287 = scalar_lea.vmem %s3, %s1286
      $region44: #{encoder_forward.4} parent=39 // pred_fallthru
        _
    $region40: #{encoder_forward.4} parent=5 // pred_fallthru
      _
  $region6: #{encoder_forward.4} parent=0 // loop_footer
    %s13 = sadd.s32 1, %s9
  $region7: #{encoder_forward.4} parent=0 // loop_footer_branch
    %8 = sbr.rel target = $region3
  $region8: #{encoder_forward.4} parent=0 // loop_exit
    _

// kernel: encoder_forward.5
$region0: #{encoder_forward.5}
  #allocation0 [shape = 'u32[]', space=smem, size = 0x4, offset = 0x4, fixed_abs, tag = 'smem constant byte address 0x4 - core index']
  #allocation1 [shape = 'u32[144,128]{1,0:T(1,128)}', space=vmem, size = 0x12000, scoped, tag = 'internal scratch']
  #allocation2 [shape = 'bf16[1,4,4,1152]{3,2,1,0:T(4,128)(2,1)}', space=vmem, size = 0x9000, scoped, tag = 'scratch operand']
  %s0 = inlined_call_operand.vmem [shape: bf16[2,6,6,128], index: 0, kind: input, shape index: {}]
  %s1 = inlined_call_operand.vmem [shape: bf16[1152,128], index: 1, kind: input, shape index: {}]
  %s2 = inlined_call_operand.vmem [shape: f32[1,128], index: 2, kind: input, shape index: {}]
  %s3 = inlined_call_operand.hbm [shape: f32[2,16,128], index: 3, kind: output, shape index: {}]
  %s4 = sld [smem:[#allocation0]]
  $region45: #{encoder_forward.5} parent=0
    _
  %s6 = ssub.s32 1, %s4
  %s7 = scalar_select 0, %s6, %s4
  $region1: #{encoder_forward.5} parent=0
    #allocation3 [shape = 'u8[16384]{0}', space=vmem, size = 0x4000, scoped, tag = 'output window, operand 0']
    #allocation4 [shape = 's32[2]{0}', space=sflag, size = 0x8, scoped, tag = 'scoped memory for encoder_forward.5']
    %8 = vsyncpa [#allocation4], 0
    %s9 = scalar_lea.sflag [#allocation4], 1
    %10 = vsyncpa %s9, 0
    loop: start=0, step=1, limit=4
    $region2: #{encoder_forward.5} parent=1 // loop_pre_header
      _
    $region3: #{encoder_forward.5} parent=1 // loop_header
      %s12 = sphi 0, %s16
      %p13 = scmp.ge.s32.totalorder %s12, 4
      %s22 = sphi 0, %s24
      %s25 = sphi 0, %s22
      %s26 = sphi 0, %s25
      %s42 = sphi 0, %s26
      %s46 = sphi 0, %s46
      %s48 = sphi 0, %s46
      %s49 = sphi 0, %s48
      %s63 = sphi 0, %s49
      %s67 = sphi 0, %s67
      %s69 = sphi 0, %s67
      %s70 = sphi 0, %s69
      %s84 = sphi 0, %s70
      %s90 = sphi 0, %s92
      %s93 = sphi 0, %s90
      %s94 = sphi 0, %s93
      %s110 = sphi 0, %s94
    $region4: #{encoder_forward.5} parent=1 // loop_header_branch
      %15 = sbr.rel (%p13) target = $region8
    $region5: #{encoder_forward.5} parent=1 // loop_body
      %s17 = ssub.s32 %s12, 1
      %s18 = ssub.s32 %s12, 2
      %s19 = sadd.s32 %s12, 1
      %s20 = ssub.s32 %s12, %s19
      %p21 = scmp.eq.s32.totalorder %s20, 0
      %s23 = sadd.s32 %s22, 1
      %s24 = scalar_select %p21, %s22, %s23
      %p27 = pneg %p21
      %p28 = scmp.eq.s32.totalorder %s12, 1
      %p29 = por %p27, %p28
      %p30 = scmp.ne.s32.totalorder %s22, %s25
      %p31 = scmp.eq.s32.totalorder %s12, 0
      %p32 = por %p30, %p31
      %p33 = scmp.ne.s32.totalorder %s22, %s25
      %p34 = scmp.eq.s32.totalorder %s17, 1
      %p35 = por %p33, %p34
      %p36 = scmp.ne.s32.totalorder %s25, %s26
      %p37 = scmp.eq.s32.totalorder %s17, 0
      %p38 = por %p36, %p37
      %p39 = scmp.ne.s32.totalorder %s25, %s26
      %p40 = scmp.eq.s32.totalorder %s18, 1
      %p41 = por %p39, %p40
      %p43 = scmp.ne.s32.totalorder %s26, %s42
      %p44 = scmp.eq.s32.totalorder %s18, 0
      %p45 = por %p43, %p44
      %s47 = sadd.s32 %s46, 1
      %p50 = scmp.eq.s32.totalorder %s12, 1
      %p51 = scmp.ne.s32.totalorder %s46, %s48
      %p52 = scmp.eq.s32.totalorder %s12, 0
      %p53 = por %p51, %p52
      %p54 = scmp.ne.s32.totalorder %s46, %s48
      %p55 = scmp.eq.s32.totalorder %s17, 1
      %p56 = por %p54, %p55
      %p57 = scmp.ne.s32.totalorder %s48, %s49
      %p58 = scmp.eq.s32.totalorder %s17, 0
      %p59 = por %p57, %p58
      %p60 = scmp.ne.s32.totalorder %s48, %s49
      %p61 = scmp.eq.s32.totalorder %s18, 1
      %p62 = por %p60, %p61
      %p64 = scmp.ne.s32.totalorder %s49, %s63
      %p65 = scmp.eq.s32.totalorder %s18, 0
      %p66 = por %p64, %p65
      %s68 = sadd.s32 %s67, 1
      %p71 = scmp.eq.s32.totalorder %s12, 1
      %p72 = scmp.ne.s32.totalorder %s67, %s69
      %p73 = scmp.eq.s32.totalorder %s12, 0
      %p74 = por %p72, %p73
      %p75 = scmp.ne.s32.totalorder %s67, %s69
      %p76 = scmp.eq.s32.totalorder %s17, 1
      %p77 = por %p75, %p76
      %p78 = scmp.ne.s32.totalorder %s69, %s70
      %p79 = scmp.eq.s32.totalorder %s17, 0
      %p80 = por %p78, %p79
      %p81 = scmp.ne.s32.totalorder %s69, %s70
      %p82 = scmp.eq.s32.totalorder %s18, 1
      %p83 = por %p81, %p82
      %p85 = scmp.ne.s32.totalorder %s70, %s84
      %p86 = scmp.eq.s32.totalorder %s18, 0
      %p87 = por %p85, %p86
      %s88 = ssub.s32 %s12, %s19
      %p89 = scmp.eq.s32.totalorder %s88, 0
      %s91 = sadd.s32 %s90, 1
      %s92 = scalar_select %p89, %s90, %s91
      %p95 = pneg %p89
      %p96 = scmp.eq.s32.totalorder %s12, 1
      %p97 = por %p95, %p96
      %p98 = scmp.ne.s32.totalorder %s90, %s93
      %p99 = scmp.eq.s32.totalorder %s12, 0
      %p100 = por %p98, %p99
      %p101 = scmp.ne.s32.totalorder %s90, %s93
      %p102 = scmp.eq.s32.totalorder %s17, 1
      %p103 = por %p101, %p102
      %p104 = scmp.ne.s32.totalorder %s93, %s94
      %p105 = scmp.eq.s32.totalorder %s17, 0
      %p106 = por %p104, %p105
      %p107 = scmp.ne.s32.totalorder %s93, %s94
      %p108 = scmp.eq.s32.totalorder %s18, 1
      %p109 = por %p107, %p108
      %p111 = scmp.ne.s32.totalorder %s94, %s110
      %p112 = scmp.eq.s32.totalorder %s18, 0
      %p113 = por %p111, %p112
      %p114 = scmp.le.s32.totalorder 1, %s12
      %p115 = scmp.lt.s32.totalorder %s12, 3
      %p116 = pnand %p114, %p115
      %p117 = pneg %p116
      // Predicated region
      $region9: #{encoder_forward.5} parent=5 // pred_check
        _
      $region10: #{encoder_forward.5} parent=5 // pred_check_branch
        %119 = sbr.rel (%p116) target = $region12
      $region11: #{encoder_forward.5} parent=5 // pred_region
        %s120 = ssub.s32 %s12, 1
        // Predicated region
        $region13: #{encoder_forward.5} parent=11 // pred_check
          %p121 = pneg %p59
        $region14: #{encoder_forward.5} parent=11 // pred_check_branch
          %123 = sbr.rel (%p121) target = $region16
        $region15: #{encoder_forward.5} parent=11 // pred_region
          _
        $region16: #{encoder_forward.5} parent=11 // pred_fallthru
          _
        // Predicated region
        $region17: #{encoder_forward.5} parent=11 // pred_check
          %p124 = pneg %p80
        $region18: #{encoder_forward.5} parent=11 // pred_check_branch
          %126 = sbr.rel (%p124) target = $region20
        $region19: #{encoder_forward.5} parent=11 // pred_region
          _
        $region20: #{encoder_forward.5} parent=11 // pred_fallthru
          _
      $region12: #{encoder_forward.5} parent=5 // pred_fallthru
        _
      %p127 = scmp.lt.s32.totalorder %s12, 2
      // Predicated region
      $region21: #{encoder_forward.5} parent=5 // pred_check
        %p128 = pneg %p127
      $region22: #{encoder_forward.5} parent=5 // pred_check_branch
        %130 = sbr.rel (%p128) target = $region24
      $region23: #{encoder_forward.5} parent=5 // pred_region
        // Predicated region
        $region25: #{encoder_forward.5} parent=23 // pred_check
          %p131 = pneg %p32
        $region26: #{encoder_forward.5} parent=23 // pred_check_branch
          %133 = sbr.rel (%p131) target = $region28
        $region27: #{encoder_forward.5} parent=23 // pred_region
          %p134 = scmp.lt.s32.totalorder %s12, 1
          %s135 = scalar_select %p134, %s12, 1
          %s136 = smul.addr %s135, 6
          %s137 = smul.addr %s136, 4
          %s138 = scalar_lea.vmem %s0, %s137
        $region28: #{encoder_forward.5} parent=23 // pred_fallthru
          _
      $region24: #{encoder_forward.5} parent=5 // pred_fallthru
        _
      %p139 = scmp.le.s32.totalorder 1, %s12
      %p140 = scmp.lt.s32.totalorder %s12, 3
      %p141 = pnand %p139, %p140
      %p142 = pneg %p141
      // Predicated region
      $region29: #{encoder_forward.5} parent=5 // pred_check
        _
      $region30: #{encoder_forward.5} parent=5 // pred_check_branch
        %144 = sbr.rel (%p141) target = $region32
      $region31: #{encoder_forward.5} parent=5 // pred_region
        %s145 = ssub.s32 %s12, 1
        %p146 = scmp.lt.s32.totalorder %s17, 1
        %s147 = scalar_select %p146, %s17, 1
        %s148 = smul.addr %s147, 6
        %s149 = smul.addr %s148, 4
        %s150 = scalar_lea.vmem %s0, %s149
        %p151 = pneg %p38
        %p152 = pneg %p35
        %p153 = pneg %p59
        %p154 = pneg %p56
        %p155 = pneg %p80
        %p156 = pneg %p77
        %p157 = pneg %p106
        %p158 = pneg %p103
        %s159 = sand.u32 %s93, 1
        %s160 = scalar_lea.sflag [#allocation4], %s159
        %s161 = sand.u32 %s93, 1
        %s162 = smul.addr %s161, 16
        %s163 = scalar_lea.vmem [#allocation3], %s162
        %p164 = scmp.lt.s32.totalorder %s17, 1
        %s165 = scalar_select %p164, %s17, 1
        %s166 = smul.addr %s165, 6
        %s167 = smul.addr %s166, 4
        %s168 = scalar_lea.vmem %s0, %s167
        %v170 = vld [vmem:[%s168] sm:$0x3]
        %v171 = vld [vmem:[%s168 + $0x4] sm:$0x3]
        %v172 = vld [vmem:[%s168 + $0x8] sm:$0x3]
        %v173 = vld [vmem:[%s168 + $0xc] sm:$0x3]
        %174 = vst [vmem:[#allocation2] sm:$0x3] %v170
        %175 = vst [vmem:[#allocation2 + $0x12] sm:$0x3] %v171
        %176 = vst [vmem:[#allocation2 + $0x24] sm:$0x3] %v172
        %177 = vst [vmem:[#allocation2 + $0x36] sm:$0x3] %v173
        %v178 = vld [vmem:[%s168] sm:$0x7]
        %v179 = vld [vmem:[%s168 + $0x4] sm:$0x7]
        %v180 = vld [vmem:[%s168 + $0x8] sm:$0x7]
        %v181 = vld [vmem:[%s168 + $0xc] sm:$0x7]
        %v187 = vunpack.c.l.s4 1983009808
        %v188 = vunpack.c.0.s8 %v187
        %v189 = vlaneseq
        %v190 = vshrl.u32 %v189, 7
        %v191 = vsub.s32 %v188, %v190
        %v192 = vrot.slane %v178, %v191
        %v193 = vcombine.high %v192, %v192
        %v195 = vunpack.c.l.s4 1983009808
        %v196 = vunpack.c.0.s8 %v195
        %v197 = vlaneseq
        %v198 = vshrl.u32 %v197, 7
        %v199 = vsub.s32 %v196, %v198
        %v200 = vrot.slane %v179, %v199
        %v201 = vcombine.high %v200, %v200
        %v203 = vunpack.c.l.s4 1983009808
        %v204 = vunpack.c.0.s8 %v203
        %v205 = vlaneseq
        %v206 = vshrl.u32 %v205, 7
        %v207 = vsub.s32 %v204, %v206
        %v208 = vrot.slane %v180, %v207
        %v209 = vcombine.high %v208, %v208
        %v211 = vunpack.c.l.s4 1983009808
        %v212 = vunpack.c.0.s8 %v211
        %v213 = vlaneseq
        %v214 = vshrl.u32 %v213, 7
        %v215 = vsub.s32 %v212, %v214
        %v216 = vrot.slane %v181, %v215
        %v217 = vcombine.high %v216, %v216
        %vm218 = vsmask.f32 1280
        %vm219 = vsmask.f32 3336
        %vm220 = vmor %vm218, %vm219
        %vm221 = vsmask.f32 5392
        %vm222 = vmor %vm220, %vm221
        %vm223 = vsmask.f32 7448
        %vm224 = vmor %vm222, %vm223
        %v226 = vshrl.u32 %v192, 16
        %v228 = vrot.slane %v226, 6
        %v229 = vshll.u32 %v192, 16
        %v231 = vrot.slane %v229, 7
        %v232 = vor.u32 %v228, %v231
        %v233 = vrot.slane %v232, 2
        %v235 = vshll.u32 %v193, 16
        %v237 = vrot.slane %v235, 7
        %v238 = vsel %vm224, %v233, %v237
        %v240 = vshrl.u32 %v200, 16
        %v242 = vrot.slane %v240, 6
        %v243 = vshll.u32 %v200, 16
        %v245 = vrot.slane %v243, 7
        %v246 = vor.u32 %v242, %v245
        %v247 = vrot.slane %v246, 2
        %v249 = vshll.u32 %v201, 16
        %v251 = vrot.slane %v249, 7
        %v252 = vsel %vm224, %v247, %v251
        %v254 = vshrl.u32 %v208, 16
        %v256 = vrot.slane %v254, 6
        %v257 = vshll.u32 %v208, 16
        %v259 = vrot.slane %v257, 7
        %v260 = vor.u32 %v256, %v259
        %v261 = vrot.slane %v260, 2
        %v263 = vshll.u32 %v209, 16
        %v265 = vrot.slane %v263, 7
        %v266 = vsel %vm224, %v261, %v265
        %v268 = vshrl.u32 %v216, 16
        %v270 = vrot.slane %v268, 6
        %v271 = vshll.u32 %v216, 16
        %v273 = vrot.slane %v271, 7
        %v274 = vor.u32 %v270, %v273
        %v275 = vrot.slane %v274, 2
        %v277 = vshll.u32 %v217, 16
        %v279 = vrot.slane %v277, 7
        %v280 = vsel %vm224, %v275, %v279
        %285 = vst [vmem:[#allocation2 + $0x2] sm:$0x3] %v238
        %286 = vst [vmem:[#allocation2 + $0x14] sm:$0x3] %v252
        %287 = vst [vmem:[#allocation2 + $0x26] sm:$0x3] %v266
        %288 = vst [vmem:[#allocation2 + $0x38] sm:$0x3] %v280
        %v289 = vld [vmem:[%s168] sm:$0x6]
        %v290 = vld [vmem:[%s168 + $0x4] sm:$0x6]
        %v291 = vld [vmem:[%s168 + $0x8] sm:$0x6]
        %v292 = vld [vmem:[%s168 + $0xc] sm:$0x6]
        %v298 = vunpack.c.l.s4 1983009808
        %v299 = vunpack.c.0.s8 %v298
        %v300 = vlaneseq
        %v301 = vshrl.u32 %v300, 7
        %v302 = vsub.s32 %v299, %v301
        %v303 = vrot.slane %v289, %v302
        %v304 = vcombine.high %v303, %v303
        %v306 = vunpack.c.l.s4 1983009808
        %v307 = vunpack.c.0.s8 %v306
        %v308 = vlaneseq
        %v309 = vshrl.u32 %v308, 7
        %v310 = vsub.s32 %v307, %v309
        %v311 = vrot.slane %v290, %v310
        %v312 = vcombine.high %v311, %v311
        %v314 = vunpack.c.l.s4 1983009808
        %v315 = vunpack.c.0.s8 %v314
        %v316 = vlaneseq
        %v317 = vshrl.u32 %v316, 7
        %v318 = vsub.s32 %v315, %v317
        %v319 = vrot.slane %v291, %v318
        %v320 = vcombine.high %v319, %v319
        %v322 = vunpack.c.l.s4 1983009808
        %v323 = vunpack.c.0.s8 %v322
        %v324 = vlaneseq
        %v325 = vshrl.u32 %v324, 7
        %v326 = vsub.s32 %v323, %v325
        %v327 = vrot.slane %v292, %v326
        %v328 = vcombine.high %v327, %v327
        %vm329 = vcmask 1040384
        %vm330 = vcmask 1042434
        %vm331 = vmor %vm329, %vm330
        %vm332 = vcmask 1044484
        %vm333 = vmor %vm331, %vm332
        %vm334 = vcmask 1046534
        %vm335 = vmor %vm333, %vm334
        %v336 = vrot.slane %v303, 7
        %v337 = vrot.slane %v336, 2
        %v338 = vrot.slane %v304, 7
        %v339 = vsel %vm335, %v337, %v338
        %v340 = vrot.slane %v311, 7
        %v341 = vrot.slane %v340, 2
        %v342 = vrot.slane %v312, 7
        %v343 = vsel %vm335, %v341, %v342
        %v344 = vrot.slane %v319, 7
        %v345 = vrot.slane %v344, 2
        %v346 = vrot.slane %v320, 7
        %v347 = vsel %vm335, %v345, %v346
        %v348 = vrot.slane %v327, 7
        %v349 = vrot.slane %v348, 2
        %v350 = vrot.slane %v328, 7
        %v351 = vsel %vm335, %v349, %v350
        %356 = vst [vmem:[#allocation2 + $0x4] sm:$0x3] %v339
        %357 = vst [vmem:[#allocation2 + $0x16] sm:$0x3] %v343
        %358 = vst [vmem:[#allocation2 + $0x28] sm:$0x3] %v347
        %359 = vst [vmem:[#allocation2 + $0x3a] sm:$0x3] %v351
        %s360 = scalar_lea.vmem %s168, 4
        %v361 = vld [vmem:[%s360] sm:$0x3]
        %v362 = vld [vmem:[%s360 + $0x4] sm:$0x3]
        %v363 = vld [vmem:[%s360 + $0x8] sm:$0x3]
        %v364 = vld [vmem:[%s360 + $0xc] sm:$0x3]
        %365 = vst [vmem:[#allocation2 + $0x6] sm:$0x3] %v361
        %366 = vst [vmem:[#allocation2 + $0x18] sm:$0x3] %v362
        %367 = vst [vmem:[#allocation2 + $0x2a] sm:$0x3] %v363
        %368 = vst [vmem:[#allocation2 + $0x3c] sm:$0x3] %v364
        %v369 = vld [vmem:[%s360] sm:$0x7]
        %v370 = vld [vmem:[%s360 + $0x4] sm:$0x7]
        %v371 = vld [vmem:[%s360 + $0x8] sm:$0x7]
        %v372 = vld [vmem:[%s360 + $0xc] sm:$0x7]
        %v378 = vunpack.c.l.s4 1983009808
        %v379 = vunpack.c.0.s8 %v378
        %v380 = vlaneseq
        %v381 = vshrl.u32 %v380, 7
        %v382 = vsub.s32 %v379, %v381
        %v383 = vrot.slane %v369, %v382
        %v384 = vcombine.high %v383, %v383
        %v386 = vunpack.c.l.s4 1983009808
        %v387 = vunpack.c.0.s8 %v386
        %v388 = vlaneseq
        %v389 = vshrl.u32 %v388, 7
        %v390 = vsub.s32 %v387, %v389
        %v391 = vrot.slane %v370, %v390
        %v392 = vcombine.high %v391, %v391
        %v394 = vunpack.c.l.s4 1983009808
        %v395 = vunpack.c.0.s8 %v394
        %v396 = vlaneseq
        %v397 = vshrl.u32 %v396, 7
        %v398 = vsub.s32 %v395, %v397
        %v399 = vrot.slane %v371, %v398
        %v400 = vcombine.high %v399, %v399
        %v402 = vunpack.c.l.s4 1983009808
        %v403 = vunpack.c.0.s8 %v402
        %v404 = vlaneseq
        %v405 = vshrl.u32 %v404, 7
        %v406 = vsub.s32 %v403, %v405
        %v407 = vrot.slane %v372, %v406
        %v408 = vcombine.high %v407, %v407
        %v410 = vshrl.u32 %v383, 16
        %v412 = vrot.slane %v410, 6
        %v413 = vshll.u32 %v383, 16
        %v415 = vrot.slane %v413, 7
        %v416 = vor.u32 %v412, %v415
        %v417 = vrot.slane %v416, 2
        %v419 = vshll.u32 %v384, 16
        %v421 = vrot.slane %v419, 7
        %v422 = vsel %vm224, %v417, %v421
        %v424 = vshrl.u32 %v391, 16
        %v426 = vrot.slane %v424, 6
        %v427 = vshll.u32 %v391, 16
        %v429 = vrot.slane %v427, 7
        %v430 = vor.u32 %v426, %v429
        %v431 = vrot.slane %v430, 2
        %v433 = vshll.u32 %v392, 16
        %v435 = vrot.slane %v433, 7
        %v436 = vsel %vm224, %v431, %v435
        %v438 = vshrl.u32 %v399, 16
        %v440 = vrot.slane %v438, 6
        %v441 = vshll.u32 %v399, 16
        %v443 = vrot.slane %v441, 7
        %v444 = vor.u32 %v440, %v443
        %v445 = vrot.slane %v444, 2
        %v447 = vshll.u32 %v400, 16
        %v449 = vrot.slane %v447, 7
        %v450 = vsel %vm224, %v445, %v449
        %v452 = vshrl.u32 %v407, 16
        %v454 = vrot.slane %v452, 6
        %v455 = vshll.u32 %v407, 16
        %v457 = vrot.slane %v455, 7
        %v458 = vor.u32 %v454, %v457
        %v459 = vrot.slane %v458, 2
        %v461 = vshll.u32 %v408, 16
        %v463 = vrot.slane %v461, 7
        %v464 = vsel %vm224, %v459, %v463
        %469 = vst [vmem:[#allocation2 + $0x8] sm:$0x3] %v422
        %470 = vst [vmem:[#allocation2 + $0x1a] sm:$0x3] %v436
        %471 = vst [vmem:[#allocation2 + $0x2c] sm:$0x3] %v450
        %472 = vst [vmem:[#allocation2 + $0x3e] sm:$0x3] %v464
        %v473 = vld [vmem:[%s360] sm:$0x6]
        %v474 = vld [vmem:[%s360 + $0x4] sm:$0x6]
        %v475 = vld [vmem:[%s360 + $0x8] sm:$0x6]
        %v476 = vld [vmem:[%s360 + $0xc] sm:$0x6]
        %v482 = vunpack.c.l.s4 1983009808
        %v483 = vunpack.c.0.s8 %v482
        %v484 = vlaneseq
        %v485 = vshrl.u32 %v484, 7
        %v486 = vsub.s32 %v483, %v485
        %v487 = vrot.slane %v473, %v486
        %v488 = vcombine.high %v487, %v487
        %v490 = vunpack.c.l.s4 1983009808
        %v491 = vunpack.c.0.s8 %v490
        %v492 = vlaneseq
        %v493 = vshrl.u32 %v492, 7
        %v494 = vsub.s32 %v491, %v493
        %v495 = vrot.slane %v474, %v494
        %v496 = vcombine.high %v495, %v495
        %v498 = vunpack.c.l.s4 1983009808
        %v499 = vunpack.c.0.s8 %v498
        %v500 = vlaneseq
        %v501 = vshrl.u32 %v500, 7
        %v502 = vsub.s32 %v499, %v501
        %v503 = vrot.slane %v475, %v502
        %v504 = vcombine.high %v503, %v503
        %v506 = vunpack.c.l.s4 1983009808
        %v507 = vunpack.c.0.s8 %v506
        %v508 = vlaneseq
        %v509 = vshrl.u32 %v508, 7
        %v510 = vsub.s32 %v507, %v509
        %v511 = vrot.slane %v476, %v510
        %v512 = vcombine.high %v511, %v511
        %v513 = vrot.slane %v487, 7
        %v514 = vrot.slane %v513, 2
        %v515 = vrot.slane %v488, 7
        %v516 = vsel %vm335, %v514, %v515
        %v517 = vrot.slane %v495, 7
        %v518 = vrot.slane %v517, 2
        %v519 = vrot.slane %v496, 7
        %v520 = vsel %vm335, %v518, %v519
        %v521 = vrot.slane %v503, 7
        %v522 = vrot.slane %v521, 2
        %v523 = vrot.slane %v504, 7
        %v524 = vsel %vm335, %v522, %v523
        %v525 = vrot.slane %v511, 7
        %v526 = vrot.slane %v525, 2
        %v527 = vrot.slane %v512, 7
        %v528 = vsel %vm335, %v526, %v527
        %533 = vst [vmem:[#allocation2 + $0xa] sm:$0x3] %v516
        %534 = vst [vmem:[#allocation2 + $0x1c] sm:$0x3] %v520
        %535 = vst [vmem:[#allocation2 + $0x2e] sm:$0x3] %v524
        %536 = vst [vmem:[#allocation2 + $0x40] sm:$0x3] %v528
        %s537 = scalar_lea.vmem %s168, 8
        %v538 = vld [vmem:[%s537] sm:$0x3]
        %v539 = vld [vmem:[%s537 + $0x4] sm:$0x3]
        %v540 = vld [vmem:[%s537 + $0x8] sm:$0x3]
        %v541 = vld [vmem:[%s537 + $0xc] sm:$0x3]
        %542 = vst [vmem:[#allocation2 + $0xc] sm:$0x3] %v538
        %543 = vst [vmem:[#allocation2 + $0x1e] sm:$0x3] %v539
        %544 = vst [vmem:[#allocation2 + $0x30] sm:$0x3] %v540
        %545 = vst [vmem:[#allocation2 + $0x42] sm:$0x3] %v541
        %v546 = vld [vmem:[%s537] sm:$0x7]
        %v547 = vld [vmem:[%s537 + $0x4] sm:$0x7]
        %v548 = vld [vmem:[%s537 + $0x8] sm:$0x7]
        %v549 = vld [vmem:[%s537 + $0xc] sm:$0x7]
        %v555 = vunpack.c.l.s4 1983009808
        %v556 = vunpack.c.0.s8 %v555
        %v557 = vlaneseq
        %v558 = vshrl.u32 %v557, 7
        %v559 = vsub.s32 %v556, %v558
        %v560 = vrot.slane %v546, %v559
        %v561 = vcombine.high %v560, %v560
        %v563 = vunpack.c.l.s4 1983009808
        %v564 = vunpack.c.0.s8 %v563
        %v565 = vlaneseq
        %v566 = vshrl.u32 %v565, 7
        %v567 = vsub.s32 %v564, %v566
        %v568 = vrot.slane %v547, %v567
        %v569 = vcombine.high %v568, %v568
        %v571 = vunpack.c.l.s4 1983009808
        %v572 = vunpack.c.0.s8 %v571
        %v573 = vlaneseq
        %v574 = vshrl.u32 %v573, 7
        %v575 = vsub.s32 %v572, %v574
        %v576 = vrot.slane %v548, %v575
        %v577 = vcombine.high %v576, %v576
        %v579 = vunpack.c.l.s4 1983009808
        %v580 = vunpack.c.0.s8 %v579
        %v581 = vlaneseq
        %v582 = vshrl.u32 %v581, 7
        %v583 = vsub.s32 %v580, %v582
        %v584 = vrot.slane %v549, %v583
        %v585 = vcombine.high %v584, %v584
        %v587 = vshrl.u32 %v560, 16
        %v589 = vrot.slane %v587, 6
        %v590 = vshll.u32 %v560, 16
        %v592 = vrot.slane %v590, 7
        %v593 = vor.u32 %v589, %v592
        %v594 = vrot.slane %v593, 2
        %v596 = vshll.u32 %v561, 16
        %v598 = vrot.slane %v596, 7
        %v599 = vsel %vm224, %v594, %v598
        %v601 = vshrl.u32 %v568, 16
        %v603 = vrot.slane %v601, 6
        %v604 = vshll.u32 %v568, 16
        %v606 = vrot.slane %v604, 7
        %v607 = vor.u32 %v603, %v606
        %v608 = vrot.slane %v607, 2
        %v610 = vshll.u32 %v569, 16
        %v612 = vrot.slane %v610, 7
        %v613 = vsel %vm224, %v608, %v612
        %v615 = vshrl.u32 %v576, 16
        %v617 = vrot.slane %v615, 6
        %v618 = vshll.u32 %v576, 16
        %v620 = vrot.slane %v618, 7
        %v621 = vor.u32 %v617, %v620
        %v622 = vrot.slane %v621, 2
        %v624 = vshll.u32 %v577, 16
        %v626 = vrot.slane %v624, 7
        %v627 = vsel %vm224, %v622, %v626
        %v629 = vshrl.u32 %v584, 16
        %v631 = vrot.slane %v629, 6
        %v632 = vshll.u32 %v584, 16
        %v634 = vrot.slane %v632, 7
        %v635 = vor.u32 %v631, %v634
        %v636 = vrot.slane %v635, 2
        %v638 = vshll.u32 %v585, 16
        %v640 = vrot.slane %v638, 7
        %v641 = vsel %vm224, %v636, %v640
        %646 = vst [vmem:[#allocation2 + $0xe] sm:$0x3] %v599
        %647 = vst [vmem:[#allocation2 + $0x20] sm:$0x3] %v613
        %648 = vst [vmem:[#allocation2 + $0x32] sm:$0x3] %v627
        %649 = vst [vmem:[#allocation2 + $0x44] sm:$0x3] %v641
        %v650 = vld [vmem:[%s537] sm:$0x6]
        %v651 = vld [vmem:[%s537 + $0x4] sm:$0x6]
        %v652 = vld [vmem:[%s537 + $0x8] sm:$0x6]
        %v653 = vld [vmem:[%s537 + $0xc] sm:$0x6]
        %v659 = vunpack.c.l.s4 1983009808
        %v660 = vunpack.c.0.s8 %v659
        %v661 = vlaneseq
        %v662 = vshrl.u32 %v661, 7
        %v663 = vsub.s32 %v660, %v662
        %v664 = vrot.slane %v650, %v663
        %v665 = vcombine.high %v664, %v664
        %v667 = vunpack.c.l.s4 1983009808
        %v668 = vunpack.c.0.s8 %v667
        %v669 = vlaneseq
        %v670 = vshrl.u32 %v669, 7
        %v671 = vsub.s32 %v668, %v670
        %v672 = vrot.slane %v651, %v671
        %v673 = vcombine.high %v672, %v672
        %v675 = vunpack.c.l.s4 1983009808
        %v676 = vunpack.c.0.s8 %v675
        %v677 = vlaneseq
        %v678 = vshrl.u32 %v677, 7
        %v679 = vsub.s32 %v676, %v678
        %v680 = vrot.slane %v652, %v679
        %v681 = vcombine.high %v680, %v680
        %v683 = vunpack.c.l.s4 1983009808
        %v684 = vunpack.c.0.s8 %v683
        %v685 = vlaneseq
        %v686 = vshrl.u32 %v685, 7
        %v687 = vsub.s32 %v684, %v686
        %v688 = vrot.slane %v653, %v687
        %v689 = vcombine.high %v688, %v688
        %v690 = vrot.slane %v664, 7
        %v691 = vrot.slane %v690, 2
        %v692 = vrot.slane %v665, 7
        %v693 = vsel %vm335, %v691, %v692
        %v694 = vrot.slane %v672, 7
        %v695 = vrot.slane %v694, 2
        %v696 = vrot.slane %v673, 7
        %v697 = vsel %vm335, %v695, %v696
        %v698 = vrot.slane %v680, 7
        %v699 = vrot.slane %v698, 2
        %v700 = vrot.slane %v681, 7
        %v701 = vsel %vm335, %v699, %v700
        %v702 = vrot.slane %v688, 7
        %v703 = vrot.slane %v702, 2
        %v704 = vrot.slane %v689, 7
        %v705 = vsel %vm335, %v703, %v704
        %710 = vst [vmem:[#allocation2 + $0x10] sm:$0x3] %v693
        %711 = vst [vmem:[#allocation2 + $0x22] sm:$0x3] %v697
        %712 = vst [vmem:[#allocation2 + $0x34] sm:$0x3] %v701
        %713 = vst [vmem:[#allocation2 + $0x46] sm:$0x3] %v705
        %v714 = vld [vmem:[#allocation2] sm:$0xff]
        %v715 = vld [vmem:[#allocation2 + $0x8] sm:$0xff]
        %v716 = vld [vmem:[#allocation2 + $0x10] sm:$0x3]
        %v717 = vld [vmem:[#allocation2 + $0x12] sm:$0xff]
        %v718 = vld [vmem:[#allocation2 + $0x1a] sm:$0xff]
        %v719 = vld [vmem:[#allocation2 + $0x22] sm:$0x3]
        %v720 = vld [vmem:[#allocation2 + $0x24] sm:$0xff]
        %v721 = vld [vmem:[#allocation2 + $0x2c] sm:$0xff]
        %v722 = vld [vmem:[#allocation2 + $0x34] sm:$0x3]
        %v723 = vld [vmem:[#allocation2 + $0x36] sm:$0xff]
        %v724 = vld [vmem:[#allocation2 + $0x3e] sm:$0xff]
        %v725 = vld [vmem:[#allocation2 + $0x46] sm:$0x3]
        %v726 = vld [vmem:[%s1] sm:$0xf]
        %v727 = vld [vmem:[%s1 + $0x4] sm:$0xf]
        %v728 = vld [vmem:[%s1 + $0x8] sm:$0xf]
        %v729 = vld [vmem:[%s1 + $0xc] sm:$0xf]
        %v730 = vld [vmem:[%s1 + $0x10] sm:$0xf]
        %v731 = vld [vmem:[%s1 + $0x14] sm:$0xf]
        %v732 = vld [vmem:[%s1 + $0x18] sm:$0xf]
        %v733 = vld [vmem:[%s1 + $0x1c] sm:$0xf]
        %v734 = vld [vmem:[%s1 + $0x20] sm:$0xf]
        %v735 = vld [vmem:[%s1 + $0x24] sm:$0xf]
        %v736 = vld [vmem:[%s1 + $0x28] sm:$0xf]
        %v737 = vld [vmem:[%s1 + $0x2c] sm:$0xf]
        %v738 = vld [vmem:[%s1 + $0x30] sm:$0xf]
        %v739 = vld [vmem:[%s1 + $0x34] sm:$0xf]
        %v740 = vld [vmem:[%s1 + $0x38] sm:$0xf]
        %v741 = vld [vmem:[%s1 + $0x3c] sm:$0xf]
        %v742 = vld [vmem:[%s1 + $0x40] sm:$0xf]
        %v743 = vld [vmem:[%s1 + $0x44] sm:$0xf]
        %v744 = vld [vmem:[%s1 + $0x48] sm:$0xf]
        %v745 = vld [vmem:[%s1 + $0x4c] sm:$0xf]
        %v746 = vld [vmem:[%s1 + $0x50] sm:$0xf]
        %v747 = vld [vmem:[%s1 + $0x54] sm:$0xf]
        %v748 = vld [vmem:[%s1 + $0x58] sm:$0xf]
        %v749 = vld [vmem:[%s1 + $0x5c] sm:$0xf]
        %v750 = vld [vmem:[%s1 + $0x60] sm:$0xf]
        %v751 = vld [vmem:[%s1 + $0x64] sm:$0xf]
        %v752 = vld [vmem:[%s1 + $0x68] sm:$0xf]
        %v753 = vld [vmem:[%s1 + $0x6c] sm:$0xf]
        %v754 = vld [vmem:[%s1 + $0x70] sm:$0xf]
        %v755 = vld [vmem:[%s1 + $0x74] sm:$0xf]
        %v756 = vld [vmem:[%s1 + $0x78] sm:$0xf]
        %v757 = vld [vmem:[%s1 + $0x7c] sm:$0xf]
        %v758 = vld [vmem:[%s1 + $0x80] sm:$0xf]
        %v759 = vld [vmem:[%s1 + $0x84] sm:$0xf]
        %v760 = vld [vmem:[%s1 + $0x88] sm:$0xf]
        %v761 = vld [vmem:[%s1 + $0x8c] sm:$0xf]
        %v762 = vld [vmem:[%s1 + $0x90] sm:$0xf]
        %v763 = vld [vmem:[%s1 + $0x94] sm:$0xf]
        %v764 = vld [vmem:[%s1 + $0x98] sm:$0xf]
        %v765 = vld [vmem:[%s1 + $0x9c] sm:$0xf]
        %v766 = vld [vmem:[%s1 + $0xa0] sm:$0xf]
        %v767 = vld [vmem:[%s1 + $0xa4] sm:$0xf]
        %v768 = vld [vmem:[%s1 + $0xa8] sm:$0xf]
        %v769 = vld [vmem:[%s1 + $0xac] sm:$0xf]
        %v770 = vld [vmem:[%s1 + $0xb0] sm:$0xf]
        %v771 = vld [vmem:[%s1 + $0xb4] sm:$0xf]
        %v772 = vld [vmem:[%s1 + $0xb8] sm:$0xf]
        %v773 = vld [vmem:[%s1 + $0xbc] sm:$0xf]
        %v774 = vld [vmem:[%s1 + $0xc0] sm:$0xf]
        %v775 = vld [vmem:[%s1 + $0xc4] sm:$0xf]
        %v776 = vld [vmem:[%s1 + $0xc8] sm:$0xf]
        %v777 = vld [vmem:[%s1 + $0xcc] sm:$0xf]
        %v778 = vld [vmem:[%s1 + $0xd0] sm:$0xf]
        %v779 = vld [vmem:[%s1 + $0xd4] sm:$0xf]
        %v780 = vld [vmem:[%s1 + $0xd8] sm:$0xf]
        %v781 = vld [vmem:[%s1 + $0xdc] sm:$0xf]
        %v782 = vld [vmem:[%s1 + $0xe0] sm:$0xf]
        %v783 = vld [vmem:[%s1 + $0xe4] sm:$0xf]
        %v784 = vld [vmem:[%s1 + $0xe8] sm:$0xf]
        %v785 = vld [vmem:[%s1 + $0xec] sm:$0xf]
        %v786 = vld [vmem:[%s1 + $0xf0] sm:$0xf]
        %v787 = vld [vmem:[%s1 + $0xf4] sm:$0xf]
        %v788 = vld [vmem:[%s1 + $0xf8] sm:$0xf]
        %v789 = vld [vmem:[%s1 + $0xfc] sm:$0xf]
        %v790 = vld [vmem:[%s1 + $0x100] sm:$0xf]
        %v791 = vld [vmem:[%s1 + $0x104] sm:$0xf]
        %v792 = vld [vmem:[%s1 + $0x108] sm:$0xf]
        %v793 = vld [vmem:[%s1 + $0x10c] sm:$0xf]
        %v794 = vld [vmem:[%s1 + $0x110] sm:$0xf]
        %v795 = vld [vmem:[%s1 + $0x114] sm:$0xf]
        %v796 = vld [vmem:[%s1 + $0x118] sm:$0xf]
        %v797 = vld [vmem:[%s1 + $0x11c] sm:$0xf]
        %v798 = vld [vmem:[%s1 + $0x120] sm:$0xf]
        %v799 = vld [vmem:[%s1 + $0x124] sm:$0xf]
        %v800 = vld [vmem:[%s1 + $0x128] sm:$0xf]
        %v801 = vld [vmem:[%s1 + $0x12c] sm:$0xf]
        %v802 = vld [vmem:[%s1 + $0x130] sm:$0xf]
        %v803 = vld [vmem:[%s1 + $0x134] sm:$0xf]
        %v804 = vld [vmem:[%s1 + $0x138] sm:$0xf]
        %v805 = vld [vmem:[%s1 + $0x13c] sm:$0xf]
        %v806 = vld [vmem:[%s1 + $0x140] sm:$0xf]
        %v807 = vld [vmem:[%s1 + $0x144] sm:$0xf]
        %v808 = vld [vmem:[%s1 + $0x148] sm:$0xf]
        %v809 = vld [vmem:[%s1 + $0x14c] sm:$0xf]
        %v810 = vld [vmem:[%s1 + $0x150] sm:$0xf]
        %v811 = vld [vmem:[%s1 + $0x154] sm:$0xf]
        %v812 = vld [vmem:[%s1 + $0x158] sm:$0xf]
        %v813 = vld [vmem:[%s1 + $0x15c] sm:$0xf]
        %v814 = vld [vmem:[%s1 + $0x160] sm:$0xf]
        %v815 = vld [vmem:[%s1 + $0x164] sm:$0xf]
        %v816 = vld [vmem:[%s1 + $0x168] sm:$0xf]
        %v817 = vld [vmem:[%s1 + $0x16c] sm:$0xf]
        %v818 = vld [vmem:[%s1 + $0x170] sm:$0xf]
        %v819 = vld [vmem:[%s1 + $0x174] sm:$0xf]
        %v820 = vld [vmem:[%s1 + $0x178] sm:$0xf]
        %v821 = vld [vmem:[%s1 + $0x17c] sm:$0xf]
        %v822 = vld [vmem:[%s1 + $0x180] sm:$0xf]
        %v823 = vld [vmem:[%s1 + $0x184] sm:$0xf]
        %v824 = vld [vmem:[%s1 + $0x188] sm:$0xf]
        %v825 = vld [vmem:[%s1 + $0x18c] sm:$0xf]
        %v826 = vld [vmem:[%s1 + $0x190] sm:$0xf]
        %v827 = vld [vmem:[%s1 + $0x194] sm:$0xf]
        %v828 = vld [vmem:[%s1 + $0x198] sm:$0xf]
        %v829 = vld [vmem:[%s1 + $0x19c] sm:$0xf]
        %v830 = vld [vmem:[%s1 + $0x1a0] sm:$0xf]
        %v831 = vld [vmem:[%s1 + $0x1a4] sm:$0xf]
        %v832 = vld [vmem:[%s1 + $0x1a8] sm:$0xf]
        %v833 = vld [vmem:[%s1 + $0x1ac] sm:$0xf]
        %v834 = vld [vmem:[%s1 + $0x1b0] sm:$0xf]
        %v835 = vld [vmem:[%s1 + $0x1b4] sm:$0xf]
        %v836 = vld [vmem:[%s1 + $0x1b8] sm:$0xf]
        %v837 = vld [vmem:[%s1 + $0x1bc] sm:$0xf]
        %v838 = vld [vmem:[%s1 + $0x1c0] sm:$0xf]
        %v839 = vld [vmem:[%s1 + $0x1c4] sm:$0xf]
        %v840 = vld [vmem:[%s1 + $0x1c8] sm:$0xf]
        %v841 = vld [vmem:[%s1 + $0x1cc] sm:$0xf]
        %v842 = vld [vmem:[%s1 + $0x1d0] sm:$0xf]
        %v843 = vld [vmem:[%s1 + $0x1d4] sm:$0xf]
        %v844 = vld [vmem:[%s1 + $0x1d8] sm:$0xf]
        %v845 = vld [vmem:[%s1 + $0x1dc] sm:$0xf]
        %v846 = vld [vmem:[%s1 + $0x1e0] sm:$0xf]
        %v847 = vld [vmem:[%s1 + $0x1e4] sm:$0xf]
        %v848 = vld [vmem:[%s1 + $0x1e8] sm:$0xf]
        %v849 = vld [vmem:[%s1 + $0x1ec] sm:$0xf]
        %v850 = vld [vmem:[%s1 + $0x1f0] sm:$0xf]
        %v851 = vld [vmem:[%s1 + $0x1f4] sm:$0xf]
        %v852 = vld [vmem:[%s1 + $0x1f8] sm:$0xf]
        %v853 = vld [vmem:[%s1 + $0x1fc] sm:$0xf]
        %v854 = vld [vmem:[%s1 + $0x200] sm:$0xf]
        %v855 = vld [vmem:[%s1 + $0x204] sm:$0xf]
        %v856 = vld [vmem:[%s1 + $0x208] sm:$0xf]
        %v857 = vld [vmem:[%s1 + $0x20c] sm:$0xf]
        %v858 = vld [vmem:[%s1 + $0x210] sm:$0xf]
        %v859 = vld [vmem:[%s1 + $0x214] sm:$0xf]
        %v860 = vld [vmem:[%s1 + $0x218] sm:$0xf]
        %v861 = vld [vmem:[%s1 + $0x21c] sm:$0xf]
        %v862 = vld [vmem:[%s1 + $0x220] sm:$0xf]
        %v863 = vld [vmem:[%s1 + $0x224] sm:$0xf]
        %v864 = vld [vmem:[%s1 + $0x228] sm:$0xf]
        %v865 = vld [vmem:[%s1 + $0x22c] sm:$0xf]
        %v866 = vld [vmem:[%s1 + $0x230] sm:$0xf]
        %v867 = vld [vmem:[%s1 + $0x234] sm:$0xf]
        %v868 = vld [vmem:[%s1 + $0x238] sm:$0xf]
        %v869 = vld [vmem:[%s1 + $0x23c] sm:$0xf]
        %v870 = vld [vmem:[%s2] sm:$0x1]
        %v872 = vlaneseq
        %v873 = vshrl.u32 %v872, 7
        %v874 = vsub.s32 0, %v873
        %v875 = vrot.slane %v870, %v874
        %v889 = vcombine.low %v714, %v717
        %v890 = vcombine.high %v714, %v717
        %v891 = vcombine.low %v720, %v723
        %v892 = vcombine.high %v720, %v723
        %v894 = vunpack.c.l.s4 1983009808
        %v895 = vunpack.c.0.s8 %v894
        %v896 = vlaneseq
        %v897 = vshrl.u32 %v896, 7
        %v898 = vsub.s32 %v895, %v897
        %v899 = vrot.slane %v889, %v898
        %v901 = vunpack.c.l.s4 1983009808
        %v902 = vunpack.c.0.s8 %v901
        %v903 = vlaneseq
        %v904 = vshrl.u32 %v903, 7
        %v905 = vsub.s32 %v902, %v904
        %v906 = vrot.slane %v890, %v905
        %v908 = vunpack.c.l.s4 1983009808
        %v909 = vunpack.c.0.s8 %v908
        %v910 = vlaneseq
        %v911 = vshrl.u32 %v910, 7
        %v912 = vsub.s32 %v909, %v911
        %v913 = vrot.slane %v891, %v912
        %v915 = vunpack.c.l.s4 1983009808
        %v916 = vunpack.c.0.s8 %v915
        %v917 = vlaneseq
        %v918 = vshrl.u32 %v917, 7
        %v919 = vsub.s32 %v916, %v918
        %v920 = vrot.slane %v892, %v919
        %v921 = vcombine.low %v899, %v913
        %v922 = vcombine.high %v899, %v913
        %v923 = vcombine.low %v906, %v920
        %v924 = vcombine.high %v906, %v920
        %v925 = vcombine.low %v715, %v718
        %v926 = vcombine.high %v715, %v718
        %v927 = vcombine.low %v721, %v724
        %v928 = vcombine.high %v721, %v724
        %v930 = vunpack.c.l.s4 1983009808
        %v931 = vunpack.c.0.s8 %v930
        %v932 = vlaneseq
        %v933 = vshrl.u32 %v932, 7
        %v934 = vsub.s32 %v931, %v933
        %v935 = vrot.slane %v925, %v934
        %v937 = vunpack.c.l.s4 1983009808
        %v938 = vunpack.c.0.s8 %v937
        %v939 = vlaneseq
        %v940 = vshrl.u32 %v939, 7
        %v941 = vsub.s32 %v938, %v940
        %v942 = vrot.slane %v926, %v941
        %v944 = vunpack.c.l.s4 1983009808
        %v945 = vunpack.c.0.s8 %v944
        %v946 = vlaneseq
        %v947 = vshrl.u32 %v946, 7
        %v948 = vsub.s32 %v945, %v947
        %v949 = vrot.slane %v927, %v948
        %v951 = vunpack.c.l.s4 1983009808
        %v952 = vunpack.c.0.s8 %v951
        %v953 = vlaneseq
        %v954 = vshrl.u32 %v953, 7
        %v955 = vsub.s32 %v952, %v954
        %v956 = vrot.slane %v928, %v955
        %v957 = vcombine.low %v935, %v949
        %v958 = vcombine.high %v935, %v949
        %v959 = vcombine.low %v942, %v956
        %v960 = vcombine.high %v942, %v956
        %v961 = vcombine.low %v716, %v719
        %v962 = vcombine.low %v722, %v725
        %v964 = vunpack.c.l.s4 1983009808
        %v965 = vunpack.c.0.s8 %v964
        %v966 = vlaneseq
        %v967 = vshrl.u32 %v966, 7
        %v968 = vsub.s32 %v965, %v967
        %v969 = vrot.slane %v961, %v968
        %v971 = vunpack.c.l.s4 1983009808
        %v972 = vunpack.c.0.s8 %v971
        %v973 = vlaneseq
        %v974 = vshrl.u32 %v973, 7
        %v975 = vsub.s32 %v972, %v974
        %v976 = vrot.slane %v962, %v975
        %v977 = vcombine.low %v969, %v976
        %v1131 = vunpack.c.l.b16 %v726
        %v1132 = vunpack.c.l.b16 %v727
        %v1133 = vunpack.c.l.b16 %v728
        %v1134 = vunpack.c.l.b16 %v729
        %v1135 = vunpack.c.l.b16 %v730
        %v1136 = vunpack.c.l.b16 %v731
        %v1137 = vunpack.c.l.b16 %v732
        %v1138 = vunpack.c.l.b16 %v733
        %v1139 = vunpack.c.l.b16 %v734
        %v1140 = vunpack.c.l.b16 %v735
        %v1141 = vunpack.c.l.b16 %v736
        %v1142 = vunpack.c.l.b16 %v737
        %v1143 = vunpack.c.l.b16 %v738
        %v1144 = vunpack.c.l.b16 %v739
        %v1145 = vunpack.c.l.b16 %v740
        %v1146 = vunpack.c.l.b16 %v741
        %v1147 = vunpack.c.l.b16 %v742
        %v1148 = vunpack.c.l.b16 %v743
        %v1149 = vunpack.c.l.b16 %v744
        %v1150 = vunpack.c.l.b16 %v745
        %v1151 = vunpack.c.l.b16 %v746
        %v1152 = vunpack.c.l.b16 %v747
        %v1153 = vunpack.c.l.b16 %v748
        %v1154 = vunpack.c.l.b16 %v749
        %v1155 = vunpack.c.l.b16 %v750
        %v1156 = vunpack.c.l.b16 %v751
        %v1157 = vunpack.c.l.b16 %v752
        %v1158 = vunpack.c.l.b16 %v753
        %v1159 = vunpack.c.l.b16 %v754
        %v1160 = vunpack.c.l.b16 %v755
        %v1161 = vunpack.c.l.b16 %v756
        %v1162 = vunpack.c.l.b16 %v757
        %v1163 = vunpack.c.l.b16 %v758
        %v1164 = vunpack.c.l.b16 %v759
        %v1165 = vunpack.c.l.b16 %v760
        %v1166 = vunpack.c.l.b16 %v761
        %v1167 = vunpack.c.l.b16 %v762
        %v1168 = vunpack.c.l.b16 %v763
        %v1169 = vunpack.c.l.b16 %v764
        %v1170 = vunpack.c.l.b16 %v765
        %v1171 = vunpack.c.l.b16 %v766
        %v1172 = vunpack.c.l.b16 %v767
        %v1173 = vunpack.c.l.b16 %v768
        %v1174 = vunpack.c.l.b16 %v769
        %v1175 = vunpack.c.l.b16 %v770
        %v1176 = vunpack.c.l.b16 %v771
        %v1177 = vunpack.c.l.b16 %v772
        %v1178 = vunpack.c.l.b16 %v773
        %v1179 = vunpack.c.l.b16 %v774
        %v1180 = vunpack.c.l.b16 %v775
        %v1181 = vunpack.c.l.b16 %v776
        %v1182 = vunpack.c.l.b16 %v777
        %v1183 = vunpack.c.l.b16 %v778
        %v1184 = vunpack.c.l.b16 %v779
        %v1185 = vunpack.c.l.b16 %v780
        %v1186 = vunpack.c.l.b16 %v781
        %v1187 = vunpack.c.l.b16 %v782
        %v1188 = vunpack.c.l.b16 %v783
        %v1189 = vunpack.c.l.b16 %v784
        %v1190 = vunpack.c.l.b16 %v785
        %v1191 = vunpack.c.l.b16 %v786
        %v1192 = vunpack.c.l.b16 %v787
        %v1193 = vunpack.c.l.b16 %v788
        %v1194 = vunpack.c.l.b16 %v789
        %v1195 = vunpack.c.l.b16 %v790
        %v1196 = vunpack.c.l.b16 %v791
        %v1197 = vunpack.c.l.b16 %v792
        %v1198 = vunpack.c.l.b16 %v793
        %v1199 = vunpack.c.l.b16 %v794
        %v1200 = vunpack.c.l.b16 %v795
        %v1201 = vunpack.c.l.b16 %v796
        %v1202 = vunpack.c.l.b16 %v797
        %v1203 = vunpack.c.l.b16 %v798
        %v1204 = vunpack.c.l.b16 %v799
        %v1205 = vunpack.c.l.b16 %v800
        %v1206 = vunpack.c.l.b16 %v801
        %v1207 = vunpack.c.l.b16 %v802
        %v1208 = vunpack.c.l.b16 %v803
        %v1209 = vunpack.c.l.b16 %v804
        %v1210 = vunpack.c.l.b16 %v805
        %v1211 = vunpack.c.l.b16 %v806
        %v1212 = vunpack.c.l.b16 %v807
        %v1213 = vunpack.c.l.b16 %v808
        %v1214 = vunpack.c.l.b16 %v809
        %v1215 = vunpack.c.l.b16 %v810
        %v1216 = vunpack.c.l.b16 %v811
        %v1217 = vunpack.c.l.b16 %v812
        %v1218 = vunpack.c.l.b16 %v813
        %v1219 = vunpack.c.l.b16 %v814
        %v1220 = vunpack.c.l.b16 %v815
        %v1221 = vunpack.c.l.b16 %v816
        %v1222 = vunpack.c.l.b16 %v817
        %v1223 = vunpack.c.l.b16 %v818
        %v1224 = vunpack.c.l.b16 %v819
        %v1225 = vunpack.c.l.b16 %v820
        %v1226 = vunpack.c.l.b16 %v821
        %v1227 = vunpack.c.l.b16 %v822
        %v1228 = vunpack.c.l.b16 %v823
        %v1229 = vunpack.c.l.b16 %v824
        %v1230 = vunpack.c.l.b16 %v825
        %v1231 = vunpack.c.l.b16 %v826
        %v1232 = vunpack.c.l.b16 %v827
        %v1233 = vunpack.c.l.b16 %v828
        %v1234 = vunpack.c.l.b16 %v829
        %v1235 = vunpack.c.l.b16 %v830
        %v1236 = vunpack.c.l.b16 %v831
        %v1237 = vunpack.c.l.b16 %v832
        %v1238 = vunpack.c.l.b16 %v833
        %v1239 = vunpack.c.l.b16 %v834
        %v1240 = vunpack.c.l.b16 %v835
        %v1241 = vunpack.c.l.b16 %v836
        %v1242 = vunpack.c.l.b16 %v837
        %v1243 = vunpack.c.l.b16 %v838
        %v1244 = vunpack.c.l.b16 %v839
        %v1245 = vunpack.c.l.b16 %v840
        %v1246 = vunpack.c.l.b16 %v841
        %v1247 = vunpack.c.l.b16 %v842
        %v1248 = vunpack.c.l.b16 %v843
        %v1249 = vunpack.c.l.b16 %v844
        %v1250 = vunpack.c.l.b16 %v845
        %v1251 = vunpack.c.l.b16 %v846
        %v1252 = vunpack.c.l.b16 %v847
        %v1253 = vunpack.c.l.b16 %v848
        %v1254 = vunpack.c.l.b16 %v849
        %v1255 = vunpack.c.l.b16 %v850
        %v1256 = vunpack.c.l.b16 %v851
        %v1257 = vunpack.c.l.b16 %v852
        %v1258 = vunpack.c.l.b16 %v853
        %v1259 = vunpack.c.l.b16 %v854
        %v1260 = vunpack.c.l.b16 %v855
        %v1261 = vunpack.c.l.b16 %v856
        %v1262 = vunpack.c.l.b16 %v857
        %v1263 = vunpack.c.l.b16 %v858
        %v1264 = vunpack.c.l.b16 %v859
        %v1265 = vunpack.c.l.b16 %v860
        %v1266 = vunpack.c.l.b16 %v861
        %v1267 = vunpack.c.l.b16 %v862
        %v1268 = vunpack.c.l.b16 %v863
        %v1269 = vunpack.c.l.b16 %v864
        %v1270 = vunpack.c.l.b16 %v865
        %v1271 = vunpack.c.l.b16 %v866
        %v1272 = vunpack.c.l.b16 %v867
        %v1273 = vunpack.c.l.b16 %v868
        %v1274 = vunpack.c.l.b16 %v869
        %v1275 = vpack.c.b16 %v1132, %v1131
        %v1276 = vpack.c.b16 %v1134, %v1133
        %v1277 = vpack.c.b16 %v1136, %v1135
        %v1278 = vpack.c.b16 %v1138, %v1137
        %v1279 = vpack.c.b16 %v1140, %v1139
        %v1280 = vpack.c.b16 %v1142, %v1141
        %v1281 = vpack.c.b16 %v1144, %v1143
        %v1282 = vpack.c.b16 %v1146, %v1145
        %v1283 = vpack.c.b16 %v1148, %v1147
        %v1284 = vpack.c.b16 %v1150, %v1149
        %v1285 = vpack.c.b16 %v1152, %v1151
        %v1286 = vpack.c.b16 %v1154, %v1153
        %v1287 = vpack.c.b16 %v1156, %v1155
        %v1288 = vpack.c.b16 %v1158, %v1157
        %v1289 = vpack.c.b16 %v1160, %v1159
        %v1290 = vpack.c.b16 %v1162, %v1161
        %v1291 = vpack.c.b16 %v1164, %v1163
        %v1292 = vpack.c.b16 %v1166, %v1165
        %v1293 = vpack.c.b16 %v1168, %v1167
        %v1294 = vpack.c.b16 %v1170, %v1169
        %v1295 = vpack.c.b16 %v1172, %v1171
        %v1296 = vpack.c.b16 %v1174, %v1173
        %v1297 = vpack.c.b16 %v1176, %v1175
        %v1298 = vpack.c.b16 %v1178, %v1177
        %v1299 = vpack.c.b16 %v1180, %v1179
        %v1300 = vpack.c.b16 %v1182, %v1181
        %v1301 = vpack.c.b16 %v1184, %v1183
        %v1302 = vpack.c.b16 %v1186, %v1185
        %v1303 = vpack.c.b16 %v1188, %v1187
        %v1304 = vpack.c.b16 %v1190, %v1189
        %v1305 = vpack.c.b16 %v1192, %v1191
        %v1306 = vpack.c.b16 %v1194, %v1193
        %v1307 = vpack.c.b16 %v1196, %v1195
        %v1308 = vpack.c.b16 %v1198, %v1197
        %v1309 = vpack.c.b16 %v1200, %v1199
        %v1310 = vpack.c.b16 %v1202, %v1201
        %v1311 = vpack.c.b16 %v1204, %v1203
        %v1312 = vpack.c.b16 %v1206, %v1205
        %v1313 = vpack.c.b16 %v1208, %v1207
        %v1314 = vpack.c.b16 %v1210, %v1209
        %v1315 = vpack.c.b16 %v1212, %v1211
        %v1316 = vpack.c.b16 %v1214, %v1213
        %v1317 = vpack.c.b16 %v1216, %v1215
        %v1318 = vpack.c.b16 %v1218, %v1217
        %v1319 = vpack.c.b16 %v1220, %v1219
        %v1320 = vpack.c.b16 %v1222, %v1221
        %v1321 = vpack.c.b16 %v1224, %v1223
        %v1322 = vpack.c.b16 %v1226, %v1225
        %v1323 = vpack.c.b16 %v1228, %v1227
        %v1324 = vpack.c.b16 %v1230, %v1229
        %v1325 = vpack.c.b16 %v1232, %v1231
        %v1326 = vpack.c.b16 %v1234, %v1233
        %v1327 = vpack.c.b16 %v1236, %v1235
        %v1328 = vpack.c.b16 %v1238, %v1237
        %v1329 = vpack.c.b16 %v1240, %v1239
        %v1330 = vpack.c.b16 %v1242, %v1241
        %v1331 = vpack.c.b16 %v1244, %v1243
        %v1332 = vpack.c.b16 %v1246, %v1245
        %v1333 = vpack.c.b16 %v1248, %v1247
        %v1334 = vpack.c.b16 %v1250, %v1249
        %v1335 = vpack.c.b16 %v1252, %v1251
        %v1336 = vpack.c.b16 %v1254, %v1253
        %v1337 = vpack.c.b16 %v1256, %v1255
        %v1338 = vpack.c.b16 %v1258, %v1257
        %v1339 = vpack.c.b16 %v1260, %v1259
        %v1340 = vpack.c.b16 %v1262, %v1261
        %v1341 = vpack.c.b16 %v1264, %v1263
        %v1342 = vpack.c.b16 %v1266, %v1265
        %v1343 = vpack.c.b16 %v1268, %v1267
        %v1344 = vpack.c.b16 %v1270, %v1269
        %v1345 = vpack.c.b16 %v1272, %v1271
        %v1346 = vpack.c.b16 %v1274, %v1273
        %1419 = vmatprep.subr.bf16.mxu0 0
        %1420 = vmatpush1.bf16.msra.mxu0 %v1275
        %1421 = vmatprep.subr.bf16.mxu0 0
        %1422 = vmatpush1.bf16.msra.mxu0 %v1276
        %1423 = vmatprep.subr.bf16.mxu0 0
        %1424 = vmatpush1.bf16.msra.mxu0 %v1277
        %1425 = vmatprep.subr.bf16.mxu0 0
        %1426 = vmatpush1.bf16.msra.mxu0 %v1278
        %1427 = vmatprep.subr.bf16.mxu0 0
        %1428 = vmatpush1.bf16.msra.mxu0 %v1279
        %1429 = vmatprep.subr.bf16.mxu0 0
        %1430 = vmatpush1.bf16.msra.mxu0 %v1280
        %1431 = vmatprep.subr.bf16.mxu0 0
        %1432 = vmatpush1.bf16.msra.mxu0 %v1281
        %1433 = vmatprep.subr.bf16.mxu0 0
        %1434 = vmatpush1.bf16.msra.mxu0 %v1282
        %1435 = vmatprep.subr.bf16.mxu0 0
        %1436 = vmatpush1.bf16.msra.mxu0 %v1283
        %1437 = vmatprep.subr.bf16.mxu0 0
        %1438 = vmatpush1.bf16.msra.mxu0 %v1284
        %1439 = vmatprep.subr.bf16.mxu0 0
        %1440 = vmatpush1.bf16.msra.mxu0 %v1285
        %1441 = vmatprep.subr.bf16.mxu0 0
        %1442 = vmatpush1.bf16.msra.mxu0 %v1286
        %1443 = vmatprep.subr.bf16.mxu0 0
        %1444 = vmatpush1.bf16.msra.mxu0 %v1287
        %1445 = vmatprep.subr.bf16.mxu0 0
        %1446 = vmatpush1.bf16.msra.mxu0 %v1288
        %1447 = vmatprep.subr.bf16.mxu0 0
        %1448 = vmatpush1.bf16.msra.mxu0 %v1289
        %1449 = vmatprep.subr.bf16.mxu0 0
        %1450 = vmatpush1.bf16.msra.mxu0 %v1290
        %1451 = vmatprep.mubr.bf16.mxu0 %v922
        %1452 = vmatmul.mubr.bf16.gmra.mrb[0].mxu0 %v921
        %v1453 = vpop.f32.mrb[0].mxu0
        %v1454 = vadd.f32 %v875, %v1453
        %v1455 = vpop.f32.mrb[0].mxu0
        %v1456 = vpop.f32.mrb[0].mxu0
        %v1457 = vadd.f32 %v875, %v1456
        %v1458 = vpop.f32.mrb[0].mxu0
        %1459 = vdwg.mxu0
        %1460 = vmatprep.subr.bf16.mxu0 0
        %1461 = vmatpush1.bf16.msra.mxu0 %v1291
        %1462 = vmatprep.subr.bf16.mxu0 0
        %1463 = vmatpush1.bf16.msra.mxu0 %v1292
        %1464 = vmatprep.subr.bf16.mxu0 0
        %1465 = vmatpush1.bf16.msra.mxu0 %v1293
        %1466 = vmatprep.subr.bf16.mxu0 0
        %1467 = vmatpush1.bf16.msra.mxu0 %v1294
        %1468 = vmatprep.subr.bf16.mxu0 0
        %1469 = vmatpush1.bf16.msra.mxu0 %v1295
        %1470 = vmatprep.subr.bf16.mxu0 0
        %1471 = vmatpush1.bf16.msra.mxu0 %v1296
        %1472 = vmatprep.subr.bf16.mxu0 0
        %1473 = vmatpush1.bf16.msra.mxu0 %v1297
        %1474 = vmatprep.subr.bf16.mxu0 0
        %1475 = vmatpush1.bf16.msra.mxu0 %v1298
        %1476 = vmatprep.subr.bf16.mxu0 0
        %1477 = vmatpush1.bf16.msra.mxu0 %v1299
        %1478 = vmatprep.subr.bf16.mxu0 0
        %1479 = vmatpush1.bf16.msra.mxu0 %v1300
        %1480 = vmatprep.subr.bf16.mxu0 0
        %1481 = vmatpush1.bf16.msra.mxu0 %v1301
        %1482 = vmatprep.subr.bf16.mxu0 0
        %1483 = vmatpush1.bf16.msra.mxu0 %v1302
        %1484 = vmatprep.subr.bf16.mxu0 0
        %1485 = vmatpush1.bf16.msra.mxu0 %v1303
        %1486 = vmatprep.subr.bf16.mxu0 0
        %1487 = vmatpush1.bf16.msra.mxu0 %v1304
        %1488 = vmatprep.subr.bf16.mxu0 0
        %1489 = vmatpush1.bf16.msra.mxu0 %v1305
        %1490 = vmatprep.subr.bf16.mxu0 0
        %1491 = vmatpush1.bf16.msra.mxu0 %v1306
        %1492 = vmatprep.mubr.bf16.mxu0 %v924
        %1493 = vmatmul.mubr.bf16.gmra.mrb[0].mxu0 %v923
        %v1494 = vpop.f32.mrb[0].mxu0
        %v1495 = vadd.f32 %v1454, %v1494
        %v1496 = vpop.f32.mrb[0].mxu0
        %v1497 = vpop.f32.mrb[0].mxu0
        %v1498 = vadd.f32 %v1457, %v1497
        %v1499 = vpop.f32.mrb[0].mxu0
        %1500 = vdwg.mxu0
        %1501 = vmatprep.subr.bf16.mxu0 0
        %1502 = vmatpush1.bf16.msra.mxu0 %v1307
        %1503 = vmatprep.subr.bf16.mxu0 0
        %1504 = vmatpush1.bf16.msra.mxu0 %v1308
        %1505 = vmatprep.subr.bf16.mxu0 0
        %1506 = vmatpush1.bf16.msra.mxu0 %v1309
        %1507 = vmatprep.subr.bf16.mxu0 0
        %1508 = vmatpush1.bf16.msra.mxu0 %v1310
        %1509 = vmatprep.subr.bf16.mxu0 0
        %1510 = vmatpush1.bf16.msra.mxu0 %v1311
        %1511 = vmatprep.subr.bf16.mxu0 0
        %1512 = vmatpush1.bf16.msra.mxu0 %v1312
        %1513 = vmatprep.subr.bf16.mxu0 0
        %1514 = vmatpush1.bf16.msra.mxu0 %v1313
        %1515 = vmatprep.subr.bf16.mxu0 0
        %1516 = vmatpush1.bf16.msra.mxu0 %v1314
        %1517 = vmatprep.subr.bf16.mxu0 0
        %1518 = vmatpush1.bf16.msra.mxu0 %v1315
        %1519 = vmatprep.subr.bf16.mxu0 0
        %1520 = vmatpush1.bf16.msra.mxu0 %v1316
        %1521 = vmatprep.subr.bf16.mxu0 0
        %1522 = vmatpush1.bf16.msra.mxu0 %v1317
        %1523 = vmatprep.subr.bf16.mxu0 0
        %1524 = vmatpush1.bf16.msra.mxu0 %v1318
        %1525 = vmatprep.subr.bf16.mxu0 0
        %1526 = vmatpush1.bf16.msra.mxu0 %v1319
        %1527 = vmatprep.subr.bf16.mxu0 0
        %1528 = vmatpush1.bf16.msra.mxu0 %v1320
        %1529 = vmatprep.subr.bf16.mxu0 0
        %1530 = vmatpush1.bf16.msra.mxu0 %v1321
        %1531 = vmatprep.subr.bf16.mxu0 0
        %1532 = vmatpush1.bf16.msra.mxu0 %v1322
        %1533 = vmatprep.mubr.bf16.mxu0 %v958
        %1534 = vmatmul.mubr.bf16.gmra.mrb[0].mxu0 %v957
        %v1535 = vpop.f32.mrb[0].mxu0
        %v1536 = vadd.f32 %v1495, %v1535
        %v1537 = vpop.f32.mrb[0].mxu0
        %v1538 = vpop.f32.mrb[0].mxu0
        %v1539 = vadd.f32 %v1498, %v1538
        %v1540 = vpop.f32.mrb[0].mxu0
        %1541 = vdwg.mxu0
        %1542 = vmatprep.subr.bf16.mxu0 0
        %1543 = vmatpush1.bf16.msra.mxu0 %v1323
        %1544 = vmatprep.subr.bf16.mxu0 0
        %1545 = vmatpush1.bf16.msra.mxu0 %v1324
        %1546 = vmatprep.subr.bf16.mxu0 0
        %1547 = vmatpush1.bf16.msra.mxu0 %v1325
        %1548 = vmatprep.subr.bf16.mxu0 0
        %1549 = vmatpush1.bf16.msra.mxu0 %v1326
        %1550 = vmatprep.subr.bf16.mxu0 0
        %1551 = vmatpush1.bf16.msra.mxu0 %v1327
        %1552 = vmatprep.subr.bf16.mxu0 0
        %1553 = vmatpush1.bf16.msra.mxu0 %v1328
        %1554 = vmatprep.subr.bf16.mxu0 0
        %1555 = vmatpush1.bf16.msra.mxu0 %v1329
        %1556 = vmatprep.subr.bf16.mxu0 0
        %1557 = vmatpush1.bf16.msra.mxu0 %v1330
        %1558 = vmatprep.subr.bf16.mxu0 0
        %1559 = vmatpush1.bf16.msra.mxu0 %v1331
        %1560 = vmatprep.subr.bf16.mxu0 0
        %1561 = vmatpush1.bf16.msra.mxu0 %v1332
        %1562 = vmatprep.subr.bf16.mxu0 0
        %1563 = vmatpush1.bf16.msra.mxu0 %v1333
        %1564 = vmatprep.subr.bf16.mxu0 0
        %1565 = vmatpush1.bf16.msra.mxu0 %v1334
        %1566 = vmatprep.subr.bf16.mxu0 0
        %1567 = vmatpush1.bf16.msra.mxu0 %v1335
        %1568 = vmatprep.subr.bf16.mxu0 0
        %1569 = vmatpush1.bf16.msra.mxu0 %v1336
        %1570 = vmatprep.subr.bf16.mxu0 0
        %1571 = vmatpush1.bf16.msra.mxu0 %v1337
        %1572 = vmatprep.subr.bf16.mxu0 0
        %1573 = vmatpush1.bf16.msra.mxu0 %v1338
        %1574 = vmatprep.mubr.bf16.mxu0 %v960
        %1575 = vmatmul.mubr.bf16.gmra.mrb[0].mxu0 %v959
        %v1576 = vpop.f32.mrb[0].mxu0
        %v1577 = vadd.f32 %v1536, %v1576
        %v1578 = vpop.f32.mrb[0].mxu0
        %v1579 = vpop.f32.mrb[0].mxu0
        %v1580 = vadd.f32 %v1539, %v1579
        %v1581 = vpop.f32.mrb[0].mxu0
        %1582 = vdwg.mxu0
        %1583 = vmatprep.subr.bf16.mxu0 0
        %1584 = vmatpush1.bf16.msra.mxu0 %v1339
        %1585 = vmatprep.subr.bf16.mxu0 0
        %1586 = vmatpush1.bf16.msra.mxu0 %v1340
        %1587 = vmatprep.subr.bf16.mxu0 0
        %1588 = vmatpush1.bf16.msra.mxu0 %v1341
        %1589 = vmatprep.subr.bf16.mxu0 0
        %1590 = vmatpush1.bf16.msra.mxu0 %v1342
        %1591 = vmatprep.subr.bf16.mxu0 0
        %1592 = vmatpush1.bf16.msra.mxu0 %v1343
        %1593 = vmatprep.subr.bf16.mxu0 0
        %1594 = vmatpush1.bf16.msra.mxu0 %v1344
        %1595 = vmatprep.subr.bf16.mxu0 0
        %1596 = vmatpush1.bf16.msra.mxu0 %v1345
        %1597 = vmatprep.subr.bf16.mxu0 0
        %1598 = vmatpush1.bf16.msra.mxu0 %v1346
        %1599 = vmatprep.subr.bf16.mxu0 0
        %1600 = vmatpush1.bf16.msra.mxu0 0
        %1601 = vmatprep.subr.bf16.mxu0 0
        %1602 = vmatpush1.bf16.msra.mxu0 0
        %1603 = vmatprep.subr.bf16.mxu0 0
        %1604 = vmatpush1.bf16.msra.mxu0 0
        %1605 = vmatprep.subr.bf16.mxu0 0
        %1606 = vmatpush1.bf16.msra.mxu0 0
        %1607 = vmatprep.subr.bf16.mxu0 0
        %1608 = vmatpush1.bf16.msra.mxu0 0
        %1609 = vmatprep.subr.bf16.mxu0 0
        %1610 = vmatpush1.bf16.msra.mxu0 0
        %1611 = vmatprep.subr.bf16.mxu0 0
        %1612 = vmatpush1.bf16.msra.mxu0 0
        %1613 = vmatprep.subr.bf16.mxu0 0
        %1614 = vmatpush1.bf16.msra.mxu0 0
        %1615 = vmatprep.mubr.bf16.mxu0 0
        %1616 = vmatmul.mubr.bf16.gmra.mrb[0].mxu0 %v977
        %v1617 = vpop.f32.mrb[0].mxu0
        %v1618 = vadd.f32 %v1577, %v1617
        %v1619 = vpop.f32.mrb[0].mxu0
        %v1620 = vpop.f32.mrb[0].mxu0
        %v1621 = vadd.f32 %v1580, %v1620
        %v1622 = vpop.f32.mrb[0].mxu0
        %1623 = vdwg.mxu0
        %1624 = vst [vmem:[%s163] sm:$0xff] %v1618
        %1625 = vst [vmem:[%s163 + $0x8] sm:$0xff] %v1621
        %s1626 = sand.u32 %s93, 1
        %s1627 = scalar_lea.sflag [#allocation4], %s1626
        %s1628 = sand.u32 %s93, 1
        %s1629 = smul.addr %s1628, 16
        %s1630 = scalar_lea.vmem [#allocation3], %s1629
        // Predicated region
        $region33: #{encoder_forward.5} parent=31 // pred_check
          %p1631 = pneg %p103
        $region34: #{encoder_forward.5} parent=31 // pred_check_branch
          %1633 = sbr.rel (%p1631) target = $region36
        $region35: #{encoder_forward.5} parent=31 // pred_region
          %s1635 = ssub.s32 256, 256
          %1636 = vsyncadd %s1627, %s1635
          %s1637 = smul.addr %s17, 2
          %s1638 = smul.addr %s1637, 128
          %s1639 = scalar_lea.hbm %s3, %s1638
          %s1640 = sshll.u32 %s1630, 4
          %s1641 = int_to_ptr.vmem [resolvable:$true] %s1640
          %1646 = dma.vmem_to_hbm [thread:$0]  %s1641, 256, %s1639, %s1627, 128, 128, 8
        $region36: #{encoder_forward.5} parent=31 // pred_fallthru
          _
      $region32: #{encoder_forward.5} parent=5 // pred_fallthru
        _
      %p1647 = scmp.le.s32.totalorder 2, %s12
      // Predicated region
      $region37: #{encoder_forward.5} parent=5 // pred_check
        %p1648 = pneg %p1647
      $region38: #{encoder_forward.5} parent=5 // pred_check_branch
        %1650 = sbr.rel (%p1648) target = $region40
      $region39: #{encoder_forward.5} parent=5 // pred_region
        %s1651 = ssub.s32 %s12, 2
        // Predicated region
        $region41: #{encoder_forward.5} parent=39 // pred_check
          %p1652 = pneg %p109
        $region42: #{encoder_forward.5} parent=39 // pred_check_branch
          %1654 = sbr.rel (%p1652) target = $region44
        $region43: #{encoder_forward.5} parent=39 // pred_region
          %s1655 = sand.u32 %s94, 1
          %s1656 = scalar_lea.sflag [#allocation4], %s1655
          %s1657 = sand.u32 %s94, 1
          %s1658 = smul.addr %s1657, 16
          %s1659 = scalar_lea.vmem [#allocation3], %s1658
          %1660 = dma.done %s1656, 256
        $region44: #{encoder_forward.5} parent=39 // pred_fallthru
          _
      $region40: #{encoder_forward.5} parent=5 // pred_fallthru
        _
    $region6: #{encoder_forward.5} parent=1 // loop_footer
      %s16 = sadd.s32 1, %s12
    $region7: #{encoder_forward.5} parent=1 // loop_footer_branch
      %11 = sbr.rel target = $region3
    $region8: #{encoder_forward.5} parent=1 // loop_exit
      _
    %1661 = vsyncpa [#allocation4], 1
    %s1662 = scalar_lea.sflag [#allocation4], 1
    %1663 = vsyncpa %s1662, 1

</llo_original>
